<compile_context>
chip_gen: v6e
topology: v6e:2x2x1
jax: 0.10.0
libtpu: 0.0.40
codegen_flags: <defaults>
</compile_context>

<pallas_src>
import math
import functools

import jax
import jax.numpy as jnp
from jax import lax
from jax.experimental import pallas as pl
from jax.experimental.pallas import tpu as pltpu

Z_SIZE = 128       # self.z_size
N_HEADS = 8        # self.n_heads
HEAD_DIM = Z_SIZE // N_HEADS
DIM_FF = 512       # self.dim_ff
LN_EPS = 1e-5      # nn.LayerNorm default eps


# ----------------------------- helpers (in-kernel) -----------------------------
def _layernorm(x, g, b, eps=LN_EPS):
    mu = jnp.mean(x, axis=-1, keepdims=True)
    var = jnp.mean((x - mu) ** 2, axis=-1, keepdims=True)
    return (x - mu) * lax.rsqrt(var + eps) * g + b


# --------------------------- fused forward kernel ------------------------------
def fused_forward_kernel(
        # VMEM inputs
        x_ref, pe_ref,
        we1_ref, be1_ref, we2_ref, be2_ref,
        bqkv_ref, bo_ref,
        g1_ref, bn1_ref, bf1_ref, bf2_ref, g2_ref, bn2_ref, gf_ref, bnf_ref,
        boh_ref, by_ref,
        # HBM (pl.ANY) weights — manually DMA'd so they overlap with compute
        wqkv_hbm, wo_hbm, w1_hbm, w2_hbm, woh_hbm, wyt_hbm,
        # output
        y_ref,
        # scratch
        wqkv_v, wo_v, w1_v, w2_v, woh_v, wyt_v, dma_sem,
        *, batch, seq_len):
    f32, bf16 = jnp.float32, jnp.bfloat16
    B, T, D, H, hd = batch, seq_len, Z_SIZE, N_HEADS, HEAD_DIM

    # ---- kick off DMA of all post-encoder weights (hidden behind encoder matmuls) ----
    cp_wqkv = pltpu.make_async_copy(wqkv_hbm, wqkv_v, dma_sem.at[0]); cp_wqkv.start()
    cp_wo   = pltpu.make_async_copy(wo_hbm,   wo_v,   dma_sem.at[1]); cp_wo.start()
    cp_w1   = pltpu.make_async_copy(w1_hbm,   w1_v,   dma_sem.at[2]); cp_w1.start()
    cp_w2   = pltpu.make_async_copy(w2_hbm,   w2_v,   dma_sem.at[3]); cp_w2.start()
    cp_woh  = pltpu.make_async_copy(woh_hbm,  woh_v,  dma_sem.at[4]); cp_woh.start()
    cp_wyt  = pltpu.make_async_copy(wyt_hbm,  wyt_v,  dma_sem.at[5]); cp_wyt.start()

    def mdot(a, b):  # bf16 x bf16 MXU matmul, f32 accumulate
        return jnp.dot(a.astype(bf16), b.astype(bf16), preferred_element_type=f32)

    # ---- encoder MLP on the whole (B*T, HW) slab ----
    # TODO(synk): exact Encoder_conv/Encoder_mlp/Encoder_rand internals were not provided
    #             in the reference; a 2-layer ReLU MLP to z_size is used as a stand-in.
    h = jnp.maximum(mdot(x_ref[...], we1_ref[...]) + be1_ref[...], 0.0)
    z = jnp.maximum(mdot(h, we2_ref[...]) + be2_ref[...], 0.0)            # (B*T, D)

    # ---- positional encoding (row b*T + t gets pe[t]) ----
    x = z + jnp.concatenate([pe_ref[...]] * B, axis=0)                    # (B*T, D)

    # ---- multi-head self-attention ----
    cp_wqkv.wait()
    qkv = mdot(x, wqkv_v[...]) + bqkv_ref[...]                            # (B*T, 3D)

    def split_heads(base):
        # gather per-(batch, head) blocks -> (B*H, T, hd); lane slices + leading-axis stack
        return jnp.stack(
            [qkv[b * T:(b + 1) * T, base + h_ * hd: base + (h_ + 1) * hd]
             for b in range(B) for h_ in range(H)], axis=0)

    qh = split_heads(0)        # scale 1/sqrt(hd) already folded into wqkv's Q block
    kh = split_heads(D)
    vh = split_heads(2 * D)

    dn_qkT = (((2,), (2,)), ((0,), (0,)))   # (BH,T,hd) x (BH,S,hd) -> (BH,T,S)
    dn_pv  = (((2,), (1,)), ((0,), (0,)))   # (BH,T,S)  x (BH,S,hd) -> (BH,T,hd)
    s = lax.dot_general(qh.astype(bf16), kh.astype(bf16), dn_qkT,
                        preferred_element_type=f32)                       # (B*H, T, T)
    s = s - jnp.max(s, axis=-1, keepdims=True)
    p = jnp.exp(s)
    p = p * pl.reciprocal(jnp.sum(p, axis=-1, keepdims=True), approx=True)
    o = lax.dot_general(p.astype(bf16), vh.astype(bf16), dn_pv,
                        preferred_element_type=f32)                       # (B*H, T, hd)

    # repack heads along lanes per batch, then one full-slab output projection
    attn_cat = jnp.concatenate(
        [jnp.concatenate([o[b * H + h_] for h_ in range(H)], axis=1) for b in range(B)],
        axis=0)                                                            # (B*T, D)
    cp_wo.wait()
    attn = mdot(attn_cat, wo_v[...]) + bo_ref[...]                         # (B*T, D)

    # ---- post-norm residual + FFN on the full (B*T, D) slab ----
    h1 = _layernorm(x + attn, g1_ref[...], bn1_ref[...])                   # norm1
    cp_w1.wait()
    ff = jnp.maximum(mdot(h1, w1_v[...]) + bf1_ref[...], 0.0)
    cp_w2.wait()
    ff = mdot(ff, w2_v[...]) + bf2_ref[...]
    h2 = _layernorm(h1 + ff, g2_ref[...], bn2_ref[...])                    # norm2
    h3 = _layernorm(h2, gf_ref[...], bnf_ref[...])                         # encoder_norm

    # ---- mean over T (per-batch sublane reduce) + output head ----
    z_avg = jnp.concatenate(
        [jnp.mean(h3[b * T:(b + 1) * T, :], axis=0, keepdims=True) for b in range(B)],
        axis=0)                                                            # (B, D)
    cp_woh.wait()
    hid = jnp.maximum(mdot(z_avg, woh_v[...]) + boh_ref[...], 0.0)         # (B, 256)
    cp_wyt.wait()
    y = lax.dot_general(hid.astype(bf16), wyt_v[...], (((1,), (1,)), ((), ())),
                        preferred_element_type=f32) + by_ref[...]          # (B, y_dim)
    y_ref[...] = y


# ------------------------------- model glue -------------------------------------
def positional_encoding(T, d):
    position = jnp.arange(T, dtype=jnp.float32)[:, None]
    div_term = jnp.exp(jnp.arange(0, d, 2, dtype=jnp.float32) * (-math.log(10000.0) / d))
    pe = jnp.zeros((T, d), jnp.float32)
    pe = pe.at[:, 0::2].set(jnp.sin(position * div_term))
    pe = pe.at[:, 1::2].set(jnp.cos(position * div_term))
    return pe   # == torch buffer pe[:T, 0, :]


def init_params(key, hw, y_dim, seq_len):
    """Parameters already in the fused / transposed / bf16 layout the kernel consumes."""
    ks = jax.random.split(key, 10)
    D, hd = Z_SIZE, HEAD_DIM
    bf16 = jnp.bfloat16

    def w(k, shape, scale):
        return scale * jax.random.normal(k, shape, jnp.float32)

    p = {}
    p['pe'] = positional_encoding(seq_len, D)          # precomputed once

    # encoder (stand-in 2-layer MLP producing z_size features)
    # TODO(synk): exact Encoder_* internals unknown; see kernel comment.
    p['we1'] = w(ks[0], (hw, 256), math.sqrt(2.0 / hw)).astype(bf16)
    p['be1'] = jnp.zeros((1, 256), jnp.float32)
    p['we2'] = w(ks[1], (256, D), math.sqrt(2.0 / 256)).astype(bf16)
    p['be2'] = jnp.zeros((1, D), jnp.float32)

    # self-attention: fused QKV (xavier_normal-style), 1/sqrt(hd) folded into Q block
    xav = math.sqrt(2.0 / (D + D))
    wq = w(ks[2], (D, D), xav) * (1.0 / math.sqrt(hd))
    wk = w(ks[3], (D, D), xav)
    wv = w(ks[4], (D, D), xav)
    p['wqkv'] = jnp.concatenate([wq, wk, wv], axis=1).astype(bf16)   # (D, 3D)
    p['bqkv'] = jnp.zeros((1, 3 * D), jnp.float32)
    p['wo'] = w(ks[5], (D, D), xav).astype(bf16)
    p['bo'] = jnp.zeros((1, D), jnp.float32)

    # feed-forward (kaiming_normal-style), biases zero
    p['w1'] = w(ks[6], (D, DIM_FF), math.sqrt(2.0 / D)).astype(bf16)
    p['bf1'] = jnp.zeros((1, DIM_FF), jnp.float32)
    p['w2'] = w(ks[7], (DIM_FF, D), math.sqrt(2.0 / DIM_FF)).astype(bf16)
    p['bf2'] = jnp.zeros((1, D), jnp.float32)

    # layer norms (weight=1, bias=0 — torch defaults)
    ones = jnp.ones((1, D), jnp.float32)
    zeros = jnp.zeros((1, D), jnp.float32)
    p['g1'], p['bn1'] = ones, zeros
    p['g2'], p['bn2'] = ones, zeros
    p['gf'], p['bnf'] = ones, zeros

    # output head (wy stored transposed to avoid (256, 8) lane padding)
    p['woh'] = w(ks[8], (D, 256), math.sqrt(2.0 / D)).astype(bf16)
    p['boh'] = jnp.zeros((1, 256), jnp.float32)
    p['wyt'] = w(ks[9], (y_dim, 256), math.sqrt(2.0 / (256 + y_dim))).astype(bf16)
    p['by'] = jnp.zeros((1, y_dim), jnp.float32)
    return p


def model_forward(x_seq, params):
    B, T, Hi, Wi = x_seq.shape
    y_dim = params['wyt'].shape[0]
    D = Z_SIZE

    x_flat = x_seq.reshape(B * T, Hi * Wi)              # encoder input slab

    vmem_inputs = [x_flat, params['pe'],
                   params['we1'], params['be1'], params['we2'], params['be2'],
                   params['bqkv'], params['bo'],
                   params['g1'], params['bn1'], params['bf1'], params['bf2'],
                   params['g2'], params['bn2'], params['gf'], params['bnf'],
                   params['boh'], params['by']]
    hbm_inputs = [params['wqkv'], params['wo'], params['w1'], params['w2'],
                  params['woh'], params['wyt']]

    in_specs = ([pl.BlockSpec(memory_space=pltpu.MemorySpace.VMEM)] * len(vmem_inputs)
                + [pl.BlockSpec(memory_space=pl.ANY)] * len(hbm_inputs))

    y_pred_linear = pl.pallas_call(
        functools.partial(fused_forward_kernel, batch=B, seq_len=T),
        out_shape=jax.ShapeDtypeStruct((B, y_dim), jnp.float32),
        in_specs=in_specs,
        out_specs=pl.BlockSpec(memory_space=pltpu.MemorySpace.VMEM),
        scratch_shapes=[
            pltpu.VMEM((D, 3 * D), jnp.bfloat16),       # wqkv
            pltpu.VMEM((D, D), jnp.bfloat16),           # wo
            pltpu.VMEM((D, DIM_FF), jnp.bfloat16),      # w1
            pltpu.VMEM((DIM_FF, D), jnp.bfloat16),      # w2
            pltpu.VMEM((D, 256), jnp.bfloat16),         # woh
            pltpu.VMEM((y_dim, 256), jnp.bfloat16),     # wy^T
            pltpu.SemaphoreType.DMA((6,)),
        ],
    )(*vmem_inputs, *hbm_inputs)

    y_pred = jnp.argmax(y_pred_linear, axis=1)
    return y_pred_linear, y_pred


if __name__ == "__main__":
    key = jax.random.PRNGKey(0)
    kx, kp = jax.random.split(key)

    B, T, Hi, Wi = 2, 8, 16, 16     # batch=2, seq_len=8, 16x16 single-channel images
    y_dim = 8                       # task_gen.y_dim

    x_seq = jax.random.normal(kx, (B, T, Hi, Wi), jnp.float32)
    params = init_params(kp, Hi * Wi, y_dim, T)

    y_lin, y_pred = jax.jit(model_forward)(x_seq, params)
    jax.block_until_ready((y_lin, y_pred))

    assert y_lin.shape == (B, y_dim) and y_pred.shape == (B,)
    print("KERNEL_OK")
</pallas_src>

<mosaic_0001>
module attributes {stable_mosaic.version = 11 : i64} {
  func.func @fused_forward_kernel(%arg0: memref<16x256xf32, #tpu.memory_space<vmem>>, %arg1: memref<8x128xf32, #tpu.memory_space<vmem>>, %arg2: memref<256x256xbf16, #tpu.memory_space<vmem>>, %arg3: memref<1x256xf32, #tpu.memory_space<vmem>>, %arg4: memref<256x128xbf16, #tpu.memory_space<vmem>>, %arg5: memref<1x128xf32, #tpu.memory_space<vmem>>, %arg6: memref<1x384xf32, #tpu.memory_space<vmem>>, %arg7: memref<1x128xf32, #tpu.memory_space<vmem>>, %arg8: memref<1x128xf32, #tpu.memory_space<vmem>>, %arg9: memref<1x128xf32, #tpu.memory_space<vmem>>, %arg10: memref<1x512xf32, #tpu.memory_space<vmem>>, %arg11: memref<1x128xf32, #tpu.memory_space<vmem>>, %arg12: memref<1x128xf32, #tpu.memory_space<vmem>>, %arg13: memref<1x128xf32, #tpu.memory_space<vmem>>, %arg14: memref<1x128xf32, #tpu.memory_space<vmem>>, %arg15: memref<1x128xf32, #tpu.memory_space<vmem>>, %arg16: memref<1x256xf32, #tpu.memory_space<vmem>>, %arg17: memref<1x8xf32, #tpu.memory_space<vmem>>, %arg18: memref<128x384xbf16, #tpu.memory_space<any>>, %arg19: memref<128x128xbf16, #tpu.memory_space<any>>, %arg20: memref<128x512xbf16, #tpu.memory_space<any>>, %arg21: memref<512x128xbf16, #tpu.memory_space<any>>, %arg22: memref<128x256xbf16, #tpu.memory_space<any>>, %arg23: memref<8x256xbf16, #tpu.memory_space<any>>, %arg24: memref<2x8xf32, #tpu.memory_space<vmem>>, %arg25: memref<128x384xbf16, #tpu.memory_space<vmem>>, %arg26: memref<128x128xbf16, #tpu.memory_space<vmem>>, %arg27: memref<128x512xbf16, #tpu.memory_space<vmem>>, %arg28: memref<512x128xbf16, #tpu.memory_space<vmem>>, %arg29: memref<128x256xbf16, #tpu.memory_space<vmem>>, %arg30: memref<8x256xbf16, #tpu.memory_space<vmem>>, %arg31: memref<6x!tpu.dma_semaphore, #tpu.memory_space<semaphore_mem>>) attributes {dimension_semantics = [], scalar_prefetch = 0 : i64, scratch_operands = 7 : i64, tpu.core_type = #tpu.core_type<tc>} {
    %c0_i32 = arith.constant 0 : i32
    %0 = tpu.memref_slice %arg31[%c0_i32] : memref<6x!tpu.dma_semaphore, #tpu.memory_space<semaphore_mem>> -> memref<1x!tpu.dma_semaphore, #tpu.memory_space<semaphore_mem>>
    %1 = tpu.memref_squeeze %0 : memref<1x!tpu.dma_semaphore, #tpu.memory_space<semaphore_mem>> -> memref<!tpu.dma_semaphore, #tpu.memory_space<semaphore_mem>>
    tpu.enqueue_dma source(%arg18 : memref<128x384xbf16, #tpu.memory_space<any>>) target(%arg25 : memref<128x384xbf16, #tpu.memory_space<vmem>>) target_semaphore(%1 : memref<!tpu.dma_semaphore, #tpu.memory_space<semaphore_mem>>)
    %c1_i32 = arith.constant 1 : i32
    %2 = tpu.memref_slice %arg31[%c1_i32] : memref<6x!tpu.dma_semaphore, #tpu.memory_space<semaphore_mem>> -> memref<1x!tpu.dma_semaphore, #tpu.memory_space<semaphore_mem>>
    %3 = tpu.memref_squeeze %2 : memref<1x!tpu.dma_semaphore, #tpu.memory_space<semaphore_mem>> -> memref<!tpu.dma_semaphore, #tpu.memory_space<semaphore_mem>>
    tpu.enqueue_dma source(%arg19 : memref<128x128xbf16, #tpu.memory_space<any>>) target(%arg26 : memref<128x128xbf16, #tpu.memory_space<vmem>>) target_semaphore(%3 : memref<!tpu.dma_semaphore, #tpu.memory_space<semaphore_mem>>)
    %c2_i32 = arith.constant 2 : i32
    %4 = tpu.memref_slice %arg31[%c2_i32] : memref<6x!tpu.dma_semaphore, #tpu.memory_space<semaphore_mem>> -> memref<1x!tpu.dma_semaphore, #tpu.memory_space<semaphore_mem>>
    %5 = tpu.memref_squeeze %4 : memref<1x!tpu.dma_semaphore, #tpu.memory_space<semaphore_mem>> -> memref<!tpu.dma_semaphore, #tpu.memory_space<semaphore_mem>>
    tpu.enqueue_dma source(%arg20 : memref<128x512xbf16, #tpu.memory_space<any>>) target(%arg27 : memref<128x512xbf16, #tpu.memory_space<vmem>>) target_semaphore(%5 : memref<!tpu.dma_semaphore, #tpu.memory_space<semaphore_mem>>)
    %c3_i32 = arith.constant 3 : i32
    %6 = tpu.memref_slice %arg31[%c3_i32] : memref<6x!tpu.dma_semaphore, #tpu.memory_space<semaphore_mem>> -> memref<1x!tpu.dma_semaphore, #tpu.memory_space<semaphore_mem>>
    %7 = tpu.memref_squeeze %6 : memref<1x!tpu.dma_semaphore, #tpu.memory_space<semaphore_mem>> -> memref<!tpu.dma_semaphore, #tpu.memory_space<semaphore_mem>>
    tpu.enqueue_dma source(%arg21 : memref<512x128xbf16, #tpu.memory_space<any>>) target(%arg28 : memref<512x128xbf16, #tpu.memory_space<vmem>>) target_semaphore(%7 : memref<!tpu.dma_semaphore, #tpu.memory_space<semaphore_mem>>)
    %c4_i32 = arith.constant 4 : i32
    %8 = tpu.memref_slice %arg31[%c4_i32] : memref<6x!tpu.dma_semaphore, #tpu.memory_space<semaphore_mem>> -> memref<1x!tpu.dma_semaphore, #tpu.memory_space<semaphore_mem>>
    %9 = tpu.memref_squeeze %8 : memref<1x!tpu.dma_semaphore, #tpu.memory_space<semaphore_mem>> -> memref<!tpu.dma_semaphore, #tpu.memory_space<semaphore_mem>>
    tpu.enqueue_dma source(%arg22 : memref<128x256xbf16, #tpu.memory_space<any>>) target(%arg29 : memref<128x256xbf16, #tpu.memory_space<vmem>>) target_semaphore(%9 : memref<!tpu.dma_semaphore, #tpu.memory_space<semaphore_mem>>)
    %c5_i32 = arith.constant 5 : i32
    %10 = tpu.memref_slice %arg31[%c5_i32] : memref<6x!tpu.dma_semaphore, #tpu.memory_space<semaphore_mem>> -> memref<1x!tpu.dma_semaphore, #tpu.memory_space<semaphore_mem>>
    %11 = tpu.memref_squeeze %10 : memref<1x!tpu.dma_semaphore, #tpu.memory_space<semaphore_mem>> -> memref<!tpu.dma_semaphore, #tpu.memory_space<semaphore_mem>>
    tpu.enqueue_dma source(%arg23 : memref<8x256xbf16, #tpu.memory_space<any>>) target(%arg30 : memref<8x256xbf16, #tpu.memory_space<vmem>>) target_semaphore(%11 : memref<!tpu.dma_semaphore, #tpu.memory_space<semaphore_mem>>)
    %c0 = arith.constant 0 : index
    %c0_0 = arith.constant 0 : index
    %12 = vector.load %arg0[%c0, %c0_0] : memref<16x256xf32, #tpu.memory_space<vmem>>, vector<16x256xf32>
    %c0_1 = arith.constant 0 : index
    %c0_2 = arith.constant 0 : index
    %13 = vector.load %arg2[%c0_1, %c0_2] : memref<256x256xbf16, #tpu.memory_space<vmem>>, vector<256x256xbf16>
    %14 = arith.truncf %12 : vector<16x256xf32> to vector<16x256xbf16>
    %cst = arith.constant dense<0.000000e+00> : vector<16x256xf32>
    %15 = tpu.matmul %14, %13, %cst {dimension_numbers = #tpu.dot_dimension_numbers<[1], [0], [0], [1], [0, 0, 1, 1], [], []>} : vector<16x256xbf16>, vector<256x256xbf16>, vector<16x256xf32> -> vector<16x256xf32>
    %c0_3 = arith.constant 0 : index
    %c0_4 = arith.constant 0 : index
    %16 = vector.load %arg3[%c0_3, %c0_4] : memref<1x256xf32, #tpu.memory_space<vmem>>, vector<1x256xf32>
    %17 = vector.broadcast %16 : vector<1x256xf32> to vector<16x256xf32>
    %18 = arith.addf %15, %17 : vector<16x256xf32>
    %cst_5 = arith.constant 0.000000e+00 : f32
    %19 = vector.broadcast %cst_5 : f32 to vector<16x256xf32>
    %20 = arith.maximumf %18, %19 : vector<16x256xf32>
    %c0_6 = arith.constant 0 : index
    %c0_7 = arith.constant 0 : index
    %21 = vector.load %arg4[%c0_6, %c0_7] : memref<256x128xbf16, #tpu.memory_space<vmem>>, vector<256x128xbf16>
    %22 = arith.truncf %20 : vector<16x256xf32> to vector<16x256xbf16>
    %cst_8 = arith.constant dense<0.000000e+00> : vector<16x128xf32>
    %23 = tpu.matmul %22, %21, %cst_8 {dimension_numbers = #tpu.dot_dimension_numbers<[1], [0], [0], [1], [0, 0, 1, 1], [], []>} : vector<16x256xbf16>, vector<256x128xbf16>, vector<16x128xf32> -> vector<16x128xf32>
    %c0_9 = arith.constant 0 : index
    %c0_10 = arith.constant 0 : index
    %24 = vector.load %arg5[%c0_9, %c0_10] : memref<1x128xf32, #tpu.memory_space<vmem>>, vector<1x128xf32>
    %25 = vector.broadcast %24 : vector<1x128xf32> to vector<16x128xf32>
    %26 = arith.addf %23, %25 : vector<16x128xf32>
    %cst_11 = arith.constant 0.000000e+00 : f32
    %27 = vector.broadcast %cst_11 : f32 to vector<16x128xf32>
    %28 = arith.maximumf %26, %27 : vector<16x128xf32>
    %c0_12 = arith.constant 0 : index
    %c0_13 = arith.constant 0 : index
    %29 = vector.load %arg1[%c0_12, %c0_13] : memref<8x128xf32, #tpu.memory_space<vmem>>, vector<8x128xf32>
    %30 = tpu.concatenate %29, %29 in 0 : vector<8x128xf32>, vector<8x128xf32> -> vector<16x128xf32>
    %31 = arith.addf %28, %30 : vector<16x128xf32>
    %c0_i32_14 = arith.constant 0 : i32
    %32 = tpu.memref_slice %arg31[%c0_i32_14] : memref<6x!tpu.dma_semaphore, #tpu.memory_space<semaphore_mem>> -> memref<1x!tpu.dma_semaphore, #tpu.memory_space<semaphore_mem>>
    %33 = tpu.memref_squeeze %32 : memref<1x!tpu.dma_semaphore, #tpu.memory_space<semaphore_mem>> -> memref<!tpu.dma_semaphore, #tpu.memory_space<semaphore_mem>>
    tpu.wait_dma2 semaphore(%33 : memref<!tpu.dma_semaphore, #tpu.memory_space<semaphore_mem>>) src(%arg18 : memref<128x384xbf16, #tpu.memory_space<any>>) dst(%arg25 : memref<128x384xbf16, #tpu.memory_space<vmem>>)
    %c0_15 = arith.constant 0 : index
    %c0_16 = arith.constant 0 : index
    %34 = vector.load %arg25[%c0_15, %c0_16] : memref<128x384xbf16, #tpu.memory_space<vmem>>, vector<128x384xbf16>
    %35 = arith.truncf %31 : vector<16x128xf32> to vector<16x128xbf16>
    %cst_17 = arith.constant dense<0.000000e+00> : vector<16x384xf32>
    %36 = tpu.matmul %35, %34, %cst_17 {dimension_numbers = #tpu.dot_dimension_numbers<[1], [0], [0], [1], [0, 0, 1, 1], [], []>} : vector<16x128xbf16>, vector<128x384xbf16>, vector<16x384xf32> -> vector<16x384xf32>
    %c0_18 = arith.constant 0 : index
    %c0_19 = arith.constant 0 : index
    %37 = vector.load %arg6[%c0_18, %c0_19] : memref<1x384xf32, #tpu.memory_space<vmem>>, vector<1x384xf32>
    %38 = vector.broadcast %37 : vector<1x384xf32> to vector<16x384xf32>
    %39 = arith.addf %36, %38 : vector<16x384xf32>
    %40 = vector.extract_strided_slice %39 {offsets = [0, 0], sizes = [8, 16], strides = [1, 1]} : vector<16x384xf32> to vector<8x16xf32>
    %41 = vector.extract_strided_slice %39 {offsets = [0, 16], sizes = [8, 16], strides = [1, 1]} : vector<16x384xf32> to vector<8x16xf32>
    %42 = vector.extract_strided_slice %39 {offsets = [0, 32], sizes = [8, 16], strides = [1, 1]} : vector<16x384xf32> to vector<8x16xf32>
    %43 = vector.extract_strided_slice %39 {offsets = [0, 48], sizes = [8, 16], strides = [1, 1]} : vector<16x384xf32> to vector<8x16xf32>
    %44 = vector.extract_strided_slice %39 {offsets = [0, 64], sizes = [8, 16], strides = [1, 1]} : vector<16x384xf32> to vector<8x16xf32>
    %45 = vector.extract_strided_slice %39 {offsets = [0, 80], sizes = [8, 16], strides = [1, 1]} : vector<16x384xf32> to vector<8x16xf32>
    %46 = vector.extract_strided_slice %39 {offsets = [0, 96], sizes = [8, 16], strides = [1, 1]} : vector<16x384xf32> to vector<8x16xf32>
    %47 = vector.extract_strided_slice %39 {offsets = [0, 112], sizes = [8, 16], strides = [1, 1]} : vector<16x384xf32> to vector<8x16xf32>
    %48 = vector.extract_strided_slice %39 {offsets = [8, 0], sizes = [8, 16], strides = [1, 1]} : vector<16x384xf32> to vector<8x16xf32>
    %49 = vector.extract_strided_slice %39 {offsets = [8, 16], sizes = [8, 16], strides = [1, 1]} : vector<16x384xf32> to vector<8x16xf32>
    %50 = vector.extract_strided_slice %39 {offsets = [8, 32], sizes = [8, 16], strides = [1, 1]} : vector<16x384xf32> to vector<8x16xf32>
    %51 = vector.extract_strided_slice %39 {offsets = [8, 48], sizes = [8, 16], strides = [1, 1]} : vector<16x384xf32> to vector<8x16xf32>
    %52 = vector.extract_strided_slice %39 {offsets = [8, 64], sizes = [8, 16], strides = [1, 1]} : vector<16x384xf32> to vector<8x16xf32>
    %53 = vector.extract_strided_slice %39 {offsets = [8, 80], sizes = [8, 16], strides = [1, 1]} : vector<16x384xf32> to vector<8x16xf32>
    %54 = vector.extract_strided_slice %39 {offsets = [8, 96], sizes = [8, 16], strides = [1, 1]} : vector<16x384xf32> to vector<8x16xf32>
    %55 = vector.extract_strided_slice %39 {offsets = [8, 112], sizes = [8, 16], strides = [1, 1]} : vector<16x384xf32> to vector<8x16xf32>
    %56 = vector.shape_cast %40 : vector<8x16xf32> to vector<1x8x16xf32>
    %57 = vector.shape_cast %41 : vector<8x16xf32> to vector<1x8x16xf32>
    %58 = vector.shape_cast %42 : vector<8x16xf32> to vector<1x8x16xf32>
    %59 = vector.shape_cast %43 : vector<8x16xf32> to vector<1x8x16xf32>
    %60 = vector.shape_cast %44 : vector<8x16xf32> to vector<1x8x16xf32>
    %61 = vector.shape_cast %45 : vector<8x16xf32> to vector<1x8x16xf32>
    %62 = vector.shape_cast %46 : vector<8x16xf32> to vector<1x8x16xf32>
    %63 = vector.shape_cast %47 : vector<8x16xf32> to vector<1x8x16xf32>
    %64 = vector.shape_cast %48 : vector<8x16xf32> to vector<1x8x16xf32>
    %65 = vector.shape_cast %49 : vector<8x16xf32> to vector<1x8x16xf32>
    %66 = vector.shape_cast %50 : vector<8x16xf32> to vector<1x8x16xf32>
    %67 = vector.shape_cast %51 : vector<8x16xf32> to vector<1x8x16xf32>
    %68 = vector.shape_cast %52 : vector<8x16xf32> to vector<1x8x16xf32>
    %69 = vector.shape_cast %53 : vector<8x16xf32> to vector<1x8x16xf32>
    %70 = vector.shape_cast %54 : vector<8x16xf32> to vector<1x8x16xf32>
    %71 = vector.shape_cast %55 : vector<8x16xf32> to vector<1x8x16xf32>
    %72 = tpu.concatenate %56, %57, %58, %59, %60, %61, %62, %63, %64, %65, %66, %67, %68, %69, %70, %71 in 0 : vector<1x8x16xf32>, vector<1x8x16xf32>, vector<1x8x16xf32>, vector<1x8x16xf32>, vector<1x8x16xf32>, vector<1x8x16xf32>, vector<1x8x16xf32>, vector<1x8x16xf32>, vector<1x8x16xf32>, vector<1x8x16xf32>, vector<1x8x16xf32>, vector<1x8x16xf32>, vector<1x8x16xf32>, vector<1x8x16xf32>, vector<1x8x16xf32>, vector<1x8x16xf32> -> vector<16x8x16xf32>
    %73 = vector.extract_strided_slice %39 {offsets = [0, 128], sizes = [8, 16], strides = [1, 1]} : vector<16x384xf32> to vector<8x16xf32>
    %74 = vector.extract_strided_slice %39 {offsets = [0, 144], sizes = [8, 16], strides = [1, 1]} : vector<16x384xf32> to vector<8x16xf32>
    %75 = vector.extract_strided_slice %39 {offsets = [0, 160], sizes = [8, 16], strides = [1, 1]} : vector<16x384xf32> to vector<8x16xf32>
    %76 = vector.extract_strided_slice %39 {offsets = [0, 176], sizes = [8, 16], strides = [1, 1]} : vector<16x384xf32> to vector<8x16xf32>
    %77 = vector.extract_strided_slice %39 {offsets = [0, 192], sizes = [8, 16], strides = [1, 1]} : vector<16x384xf32> to vector<8x16xf32>
    %78 = vector.extract_strided_slice %39 {offsets = [0, 208], sizes = [8, 16], strides = [1, 1]} : vector<16x384xf32> to vector<8x16xf32>
    %79 = vector.extract_strided_slice %39 {offsets = [0, 224], sizes = [8, 16], strides = [1, 1]} : vector<16x384xf32> to vector<8x16xf32>
    %80 = vector.extract_strided_slice %39 {offsets = [0, 240], sizes = [8, 16], strides = [1, 1]} : vector<16x384xf32> to vector<8x16xf32>
    %81 = vector.extract_strided_slice %39 {offsets = [8, 128], sizes = [8, 16], strides = [1, 1]} : vector<16x384xf32> to vector<8x16xf32>
    %82 = vector.extract_strided_slice %39 {offsets = [8, 144], sizes = [8, 16], strides = [1, 1]} : vector<16x384xf32> to vector<8x16xf32>
    %83 = vector.extract_strided_slice %39 {offsets = [8, 160], sizes = [8, 16], strides = [1, 1]} : vector<16x384xf32> to vector<8x16xf32>
    %84 = vector.extract_strided_slice %39 {offsets = [8, 176], sizes = [8, 16], strides = [1, 1]} : vector<16x384xf32> to vector<8x16xf32>
    %85 = vector.extract_strided_slice %39 {offsets = [8, 192], sizes = [8, 16], strides = [1, 1]} : vector<16x384xf32> to vector<8x16xf32>
    %86 = vector.extract_strided_slice %39 {offsets = [8, 208], sizes = [8, 16], strides = [1, 1]} : vector<16x384xf32> to vector<8x16xf32>
    %87 = vector.extract_strided_slice %39 {offsets = [8, 224], sizes = [8, 16], strides = [1, 1]} : vector<16x384xf32> to vector<8x16xf32>
    %88 = vector.extract_strided_slice %39 {offsets = [8, 240], sizes = [8, 16], strides = [1, 1]} : vector<16x384xf32> to vector<8x16xf32>
    %89 = vector.shape_cast %73 : vector<8x16xf32> to vector<1x8x16xf32>
    %90 = vector.shape_cast %74 : vector<8x16xf32> to vector<1x8x16xf32>
    %91 = vector.shape_cast %75 : vector<8x16xf32> to vector<1x8x16xf32>
    %92 = vector.shape_cast %76 : vector<8x16xf32> to vector<1x8x16xf32>
    %93 = vector.shape_cast %77 : vector<8x16xf32> to vector<1x8x16xf32>
    %94 = vector.shape_cast %78 : vector<8x16xf32> to vector<1x8x16xf32>
    %95 = vector.shape_cast %79 : vector<8x16xf32> to vector<1x8x16xf32>
    %96 = vector.shape_cast %80 : vector<8x16xf32> to vector<1x8x16xf32>
    %97 = vector.shape_cast %81 : vector<8x16xf32> to vector<1x8x16xf32>
    %98 = vector.shape_cast %82 : vector<8x16xf32> to vector<1x8x16xf32>
    %99 = vector.shape_cast %83 : vector<8x16xf32> to vector<1x8x16xf32>
    %100 = vector.shape_cast %84 : vector<8x16xf32> to vector<1x8x16xf32>
    %101 = vector.shape_cast %85 : vector<8x16xf32> to vector<1x8x16xf32>
    %102 = vector.shape_cast %86 : vector<8x16xf32> to vector<1x8x16xf32>
    %103 = vector.shape_cast %87 : vector<8x16xf32> to vector<1x8x16xf32>
    %104 = vector.shape_cast %88 : vector<8x16xf32> to vector<1x8x16xf32>
    %105 = tpu.concatenate %89, %90, %91, %92, %93, %94, %95, %96, %97, %98, %99, %100, %101, %102, %103, %104 in 0 : vector<1x8x16xf32>, vector<1x8x16xf32>, vector<1x8x16xf32>, vector<1x8x16xf32>, vector<1x8x16xf32>, vector<1x8x16xf32>, vector<1x8x16xf32>, vector<1x8x16xf32>, vector<1x8x16xf32>, vector<1x8x16xf32>, vector<1x8x16xf32>, vector<1x8x16xf32>, vector<1x8x16xf32>, vector<1x8x16xf32>, vector<1x8x16xf32>, vector<1x8x16xf32> -> vector<16x8x16xf32>
    %106 = vector.extract_strided_slice %39 {offsets = [0, 256], sizes = [8, 16], strides = [1, 1]} : vector<16x384xf32> to vector<8x16xf32>
    %107 = vector.extract_strided_slice %39 {offsets = [0, 272], sizes = [8, 16], strides = [1, 1]} : vector<16x384xf32> to vector<8x16xf32>
    %108 = vector.extract_strided_slice %39 {offsets = [0, 288], sizes = [8, 16], strides = [1, 1]} : vector<16x384xf32> to vector<8x16xf32>
    %109 = vector.extract_strided_slice %39 {offsets = [0, 304], sizes = [8, 16], strides = [1, 1]} : vector<16x384xf32> to vector<8x16xf32>
    %110 = vector.extract_strided_slice %39 {offsets = [0, 320], sizes = [8, 16], strides = [1, 1]} : vector<16x384xf32> to vector<8x16xf32>
    %111 = vector.extract_strided_slice %39 {offsets = [0, 336], sizes = [8, 16], strides = [1, 1]} : vector<16x384xf32> to vector<8x16xf32>
    %112 = vector.extract_strided_slice %39 {offsets = [0, 352], sizes = [8, 16], strides = [1, 1]} : vector<16x384xf32> to vector<8x16xf32>
    %113 = vector.extract_strided_slice %39 {offsets = [0, 368], sizes = [8, 16], strides = [1, 1]} : vector<16x384xf32> to vector<8x16xf32>
    %114 = vector.extract_strided_slice %39 {offsets = [8, 256], sizes = [8, 16], strides = [1, 1]} : vector<16x384xf32> to vector<8x16xf32>
    %115 = vector.extract_strided_slice %39 {offsets = [8, 272], sizes = [8, 16], strides = [1, 1]} : vector<16x384xf32> to vector<8x16xf32>
    %116 = vector.extract_strided_slice %39 {offsets = [8, 288], sizes = [8, 16], strides = [1, 1]} : vector<16x384xf32> to vector<8x16xf32>
    %117 = vector.extract_strided_slice %39 {offsets = [8, 304], sizes = [8, 16], strides = [1, 1]} : vector<16x384xf32> to vector<8x16xf32>
    %118 = vector.extract_strided_slice %39 {offsets = [8, 320], sizes = [8, 16], strides = [1, 1]} : vector<16x384xf32> to vector<8x16xf32>
    %119 = vector.extract_strided_slice %39 {offsets = [8, 336], sizes = [8, 16], strides = [1, 1]} : vector<16x384xf32> to vector<8x16xf32>
    %120 = vector.extract_strided_slice %39 {offsets = [8, 352], sizes = [8, 16], strides = [1, 1]} : vector<16x384xf32> to vector<8x16xf32>
    %121 = vector.extract_strided_slice %39 {offsets = [8, 368], sizes = [8, 16], strides = [1, 1]} : vector<16x384xf32> to vector<8x16xf32>
    %122 = vector.shape_cast %106 : vector<8x16xf32> to vector<1x8x16xf32>
    %123 = vector.shape_cast %107 : vector<8x16xf32> to vector<1x8x16xf32>
    %124 = vector.shape_cast %108 : vector<8x16xf32> to vector<1x8x16xf32>
    %125 = vector.shape_cast %109 : vector<8x16xf32> to vector<1x8x16xf32>
    %126 = vector.shape_cast %110 : vector<8x16xf32> to vector<1x8x16xf32>
    %127 = vector.shape_cast %111 : vector<8x16xf32> to vector<1x8x16xf32>
    %128 = vector.shape_cast %112 : vector<8x16xf32> to vector<1x8x16xf32>
    %129 = vector.shape_cast %113 : vector<8x16xf32> to vector<1x8x16xf32>
    %130 = vector.shape_cast %114 : vector<8x16xf32> to vector<1x8x16xf32>
    %131 = vector.shape_cast %115 : vector<8x16xf32> to vector<1x8x16xf32>
    %132 = vector.shape_cast %116 : vector<8x16xf32> to vector<1x8x16xf32>
    %133 = vector.shape_cast %117 : vector<8x16xf32> to vector<1x8x16xf32>
    %134 = vector.shape_cast %118 : vector<8x16xf32> to vector<1x8x16xf32>
    %135 = vector.shape_cast %119 : vector<8x16xf32> to vector<1x8x16xf32>
    %136 = vector.shape_cast %120 : vector<8x16xf32> to vector<1x8x16xf32>
    %137 = vector.shape_cast %121 : vector<8x16xf32> to vector<1x8x16xf32>
    %138 = tpu.concatenate %122, %123, %124, %125, %126, %127, %128, %129, %130, %131, %132, %133, %134, %135, %136, %137 in 0 : vector<1x8x16xf32>, vector<1x8x16xf32>, vector<1x8x16xf32>, vector<1x8x16xf32>, vector<1x8x16xf32>, vector<1x8x16xf32>, vector<1x8x16xf32>, vector<1x8x16xf32>, vector<1x8x16xf32>, vector<1x8x16xf32>, vector<1x8x16xf32>, vector<1x8x16xf32>, vector<1x8x16xf32>, vector<1x8x16xf32>, vector<1x8x16xf32>, vector<1x8x16xf32> -> vector<16x8x16xf32>
    %139 = arith.truncf %72 : vector<16x8x16xf32> to vector<16x8x16xbf16>
    %140 = arith.truncf %105 : vector<16x8x16xf32> to vector<16x8x16xbf16>
    %cst_20 = arith.constant dense<0.000000e+00> : vector<16x8x8xf32>
    %141 = tpu.matmul %139, %140, %cst_20 {dimension_numbers = #tpu.dot_dimension_numbers<[2], [2], [1], [1], [0, 0, 0, 1, 1, 1], [0], [0]>} : vector<16x8x16xbf16>, vector<16x8x16xbf16>, vector<16x8x8xf32> -> vector<16x8x8xf32>
    %cst_21 = arith.constant dense<0xFF800000> : vector<16x8xf32>
    %142 = vector.multi_reduction <maximumf>, %141, %cst_21 [2] : vector<16x8x8xf32> to vector<16x8xf32>
    %143 = vector.shape_cast %142 : vector<16x8xf32> to vector<16x8x1xf32>
    %144 = vector.broadcast %143 : vector<16x8x1xf32> to vector<16x8x8xf32>
    %145 = arith.subf %141, %144 : vector<16x8x8xf32>
    %146 = math.exp %145 : vector<16x8x8xf32>
    %cst_22 = arith.constant dense<0.000000e+00> : vector<16x8xf32>
    %147 = vector.multi_reduction <add>, %146, %cst_22 [2] : vector<16x8x8xf32> to vector<16x8xf32>
    %148 = vector.shape_cast %147 : vector<16x8xf32> to vector<16x8x1xf32>
    %149 = tpu.reciprocal %148 {approx = true} : vector<16x8x1xf32> -> vector<16x8x1xf32>
    %150 = vector.broadcast %149 : vector<16x8x1xf32> to vector<16x8x8xf32>
    %151 = arith.mulf %146, %150 : vector<16x8x8xf32>
    %152 = arith.truncf %151 : vector<16x8x8xf32> to vector<16x8x8xbf16>
    %153 = arith.truncf %138 : vector<16x8x16xf32> to vector<16x8x16xbf16>
    %cst_23 = arith.constant dense<0.000000e+00> : vector<16x8x16xf32>
    %154 = tpu.matmul %152, %153, %cst_23 {dimension_numbers = #tpu.dot_dimension_numbers<[2], [1], [1], [2], [0, 0, 0, 1, 1, 2], [0], [0]>} : vector<16x8x8xbf16>, vector<16x8x16xbf16>, vector<16x8x16xf32> -> vector<16x8x16xf32>
    %155 = vector.extract_strided_slice %154 {offsets = [0, 0, 0], sizes = [1, 8, 16], strides = [1, 1, 1]} : vector<16x8x16xf32> to vector<1x8x16xf32>
    %156 = vector.shape_cast %155 : vector<1x8x16xf32> to vector<8x16xf32>
    %157 = vector.extract_strided_slice %154 {offsets = [1, 0, 0], sizes = [1, 8, 16], strides = [1, 1, 1]} : vector<16x8x16xf32> to vector<1x8x16xf32>
    %158 = vector.shape_cast %157 : vector<1x8x16xf32> to vector<8x16xf32>
    %159 = vector.extract_strided_slice %154 {offsets = [2, 0, 0], sizes = [1, 8, 16], strides = [1, 1, 1]} : vector<16x8x16xf32> to vector<1x8x16xf32>
    %160 = vector.shape_cast %159 : vector<1x8x16xf32> to vector<8x16xf32>
    %161 = vector.extract_strided_slice %154 {offsets = [3, 0, 0], sizes = [1, 8, 16], strides = [1, 1, 1]} : vector<16x8x16xf32> to vector<1x8x16xf32>
    %162 = vector.shape_cast %161 : vector<1x8x16xf32> to vector<8x16xf32>
    %163 = vector.extract_strided_slice %154 {offsets = [4, 0, 0], sizes = [1, 8, 16], strides = [1, 1, 1]} : vector<16x8x16xf32> to vector<1x8x16xf32>
    %164 = vector.shape_cast %163 : vector<1x8x16xf32> to vector<8x16xf32>
    %165 = vector.extract_strided_slice %154 {offsets = [5, 0, 0], sizes = [1, 8, 16], strides = [1, 1, 1]} : vector<16x8x16xf32> to vector<1x8x16xf32>
    %166 = vector.shape_cast %165 : vector<1x8x16xf32> to vector<8x16xf32>
    %167 = vector.extract_strided_slice %154 {offsets = [6, 0, 0], sizes = [1, 8, 16], strides = [1, 1, 1]} : vector<16x8x16xf32> to vector<1x8x16xf32>
    %168 = vector.shape_cast %167 : vector<1x8x16xf32> to vector<8x16xf32>
    %169 = vector.extract_strided_slice %154 {offsets = [7, 0, 0], sizes = [1, 8, 16], strides = [1, 1, 1]} : vector<16x8x16xf32> to vector<1x8x16xf32>
    %170 = vector.shape_cast %169 : vector<1x8x16xf32> to vector<8x16xf32>
    %171 = tpu.concatenate %156, %158, %160, %162, %164, %166, %168, %170 in 1 : vector<8x16xf32>, vector<8x16xf32>, vector<8x16xf32>, vector<8x16xf32>, vector<8x16xf32>, vector<8x16xf32>, vector<8x16xf32>, vector<8x16xf32> -> vector<8x128xf32>
    %172 = vector.extract_strided_slice %154 {offsets = [8, 0, 0], sizes = [1, 8, 16], strides = [1, 1, 1]} : vector<16x8x16xf32> to vector<1x8x16xf32>
    %173 = vector.shape_cast %172 : vector<1x8x16xf32> to vector<8x16xf32>
    %174 = vector.extract_strided_slice %154 {offsets = [9, 0, 0], sizes = [1, 8, 16], strides = [1, 1, 1]} : vector<16x8x16xf32> to vector<1x8x16xf32>
    %175 = vector.shape_cast %174 : vector<1x8x16xf32> to vector<8x16xf32>
    %176 = vector.extract_strided_slice %154 {offsets = [10, 0, 0], sizes = [1, 8, 16], strides = [1, 1, 1]} : vector<16x8x16xf32> to vector<1x8x16xf32>
    %177 = vector.shape_cast %176 : vector<1x8x16xf32> to vector<8x16xf32>
    %178 = vector.extract_strided_slice %154 {offsets = [11, 0, 0], sizes = [1, 8, 16], strides = [1, 1, 1]} : vector<16x8x16xf32> to vector<1x8x16xf32>
    %179 = vector.shape_cast %178 : vector<1x8x16xf32> to vector<8x16xf32>
    %180 = vector.extract_strided_slice %154 {offsets = [12, 0, 0], sizes = [1, 8, 16], strides = [1, 1, 1]} : vector<16x8x16xf32> to vector<1x8x16xf32>
    %181 = vector.shape_cast %180 : vector<1x8x16xf32> to vector<8x16xf32>
    %182 = vector.extract_strided_slice %154 {offsets = [13, 0, 0], sizes = [1, 8, 16], strides = [1, 1, 1]} : vector<16x8x16xf32> to vector<1x8x16xf32>
    %183 = vector.shape_cast %182 : vector<1x8x16xf32> to vector<8x16xf32>
    %184 = vector.extract_strided_slice %154 {offsets = [14, 0, 0], sizes = [1, 8, 16], strides = [1, 1, 1]} : vector<16x8x16xf32> to vector<1x8x16xf32>
    %185 = vector.shape_cast %184 : vector<1x8x16xf32> to vector<8x16xf32>
    %186 = vector.extract_strided_slice %154 {offsets = [15, 0, 0], sizes = [1, 8, 16], strides = [1, 1, 1]} : vector<16x8x16xf32> to vector<1x8x16xf32>
    %187 = vector.shape_cast %186 : vector<1x8x16xf32> to vector<8x16xf32>
    %188 = tpu.concatenate %173, %175, %177, %179, %181, %183, %185, %187 in 1 : vector<8x16xf32>, vector<8x16xf32>, vector<8x16xf32>, vector<8x16xf32>, vector<8x16xf32>, vector<8x16xf32>, vector<8x16xf32>, vector<8x16xf32> -> vector<8x128xf32>
    %189 = tpu.concatenate %171, %188 in 0 : vector<8x128xf32>, vector<8x128xf32> -> vector<16x128xf32>
    %c1_i32_24 = arith.constant 1 : i32
    %190 = tpu.memref_slice %arg31[%c1_i32_24] : memref<6x!tpu.dma_semaphore, #tpu.memory_space<semaphore_mem>> -> memref<1x!tpu.dma_semaphore, #tpu.memory_space<semaphore_mem>>
    %191 = tpu.memref_squeeze %190 : memref<1x!tpu.dma_semaphore, #tpu.memory_space<semaphore_mem>> -> memref<!tpu.dma_semaphore, #tpu.memory_space<semaphore_mem>>
    tpu.wait_dma2 semaphore(%191 : memref<!tpu.dma_semaphore, #tpu.memory_space<semaphore_mem>>) src(%arg19 : memref<128x128xbf16, #tpu.memory_space<any>>) dst(%arg26 : memref<128x128xbf16, #tpu.memory_space<vmem>>)
    %c0_25 = arith.constant 0 : index
    %c0_26 = arith.constant 0 : index
    %192 = vector.load %arg26[%c0_25, %c0_26] : memref<128x128xbf16, #tpu.memory_space<vmem>>, vector<128x128xbf16>
    %193 = arith.truncf %189 : vector<16x128xf32> to vector<16x128xbf16>
    %cst_27 = arith.constant dense<0.000000e+00> : vector<16x128xf32>
    %194 = tpu.matmul %193, %192, %cst_27 {dimension_numbers = #tpu.dot_dimension_numbers<[1], [0], [0], [1], [0, 0, 1, 1], [], []>} : vector<16x128xbf16>, vector<128x128xbf16>, vector<16x128xf32> -> vector<16x128xf32>
    %c0_28 = arith.constant 0 : index
    %c0_29 = arith.constant 0 : index
    %195 = vector.load %arg7[%c0_28, %c0_29] : memref<1x128xf32, #tpu.memory_space<vmem>>, vector<1x128xf32>
    %196 = vector.broadcast %195 : vector<1x128xf32> to vector<16x128xf32>
    %197 = arith.addf %194, %196 : vector<16x128xf32>
    %198 = arith.addf %31, %197 : vector<16x128xf32>
    %c0_30 = arith.constant 0 : index
    %c0_31 = arith.constant 0 : index
    %199 = vector.load %arg8[%c0_30, %c0_31] : memref<1x128xf32, #tpu.memory_space<vmem>>, vector<1x128xf32>
    %c0_32 = arith.constant 0 : index
    %c0_33 = arith.constant 0 : index
    %200 = vector.load %arg9[%c0_32, %c0_33] : memref<1x128xf32, #tpu.memory_space<vmem>>, vector<1x128xf32>
    %cst_34 = arith.constant dense<0.000000e+00> : vector<16xf32>
    %201 = vector.multi_reduction <add>, %198, %cst_34 [1] : vector<16x128xf32> to vector<16xf32>
    %202 = vector.shape_cast %201 : vector<16xf32> to vector<16x1xf32>
    %cst_35 = arith.constant 1.280000e+02 : f32
    %203 = vector.broadcast %cst_35 : f32 to vector<16x1xf32>
    %204 = arith.divf %202, %203 : vector<16x1xf32>
    %205 = vector.broadcast %204 : vector<16x1xf32> to vector<16x128xf32>
    %206 = arith.subf %198, %205 : vector<16x128xf32>
    %207 = arith.mulf %206, %206 : vector<16x128xf32>
    %cst_36 = arith.constant dense<0.000000e+00> : vector<16xf32>
    %208 = vector.multi_reduction <add>, %207, %cst_36 [1] : vector<16x128xf32> to vector<16xf32>
    %209 = vector.shape_cast %208 : vector<16xf32> to vector<16x1xf32>
    %cst_37 = arith.constant 1.280000e+02 : f32
    %210 = vector.broadcast %cst_37 : f32 to vector<16x1xf32>
    %211 = arith.divf %209, %210 : vector<16x1xf32>
    %212 = vector.broadcast %204 : vector<16x1xf32> to vector<16x128xf32>
    %213 = arith.subf %198, %212 : vector<16x128xf32>
    %cst_38 = arith.constant 9.99999974E-6 : f32
    %214 = vector.broadcast %cst_38 : f32 to vector<16x1xf32>
    %215 = arith.addf %211, %214 : vector<16x1xf32>
    %216 = math.rsqrt %215 : vector<16x1xf32>
    %217 = vector.broadcast %216 : vector<16x1xf32> to vector<16x128xf32>
    %218 = arith.mulf %213, %217 : vector<16x128xf32>
    %219 = vector.broadcast %199 : vector<1x128xf32> to vector<16x128xf32>
    %220 = arith.mulf %218, %219 : vector<16x128xf32>
    %221 = vector.broadcast %200 : vector<1x128xf32> to vector<16x128xf32>
    %222 = arith.addf %220, %221 : vector<16x128xf32>
    %c2_i32_39 = arith.constant 2 : i32
    %223 = tpu.memref_slice %arg31[%c2_i32_39] : memref<6x!tpu.dma_semaphore, #tpu.memory_space<semaphore_mem>> -> memref<1x!tpu.dma_semaphore, #tpu.memory_space<semaphore_mem>>
    %224 = tpu.memref_squeeze %223 : memref<1x!tpu.dma_semaphore, #tpu.memory_space<semaphore_mem>> -> memref<!tpu.dma_semaphore, #tpu.memory_space<semaphore_mem>>
    tpu.wait_dma2 semaphore(%224 : memref<!tpu.dma_semaphore, #tpu.memory_space<semaphore_mem>>) src(%arg20 : memref<128x512xbf16, #tpu.memory_space<any>>) dst(%arg27 : memref<128x512xbf16, #tpu.memory_space<vmem>>)
    %c0_40 = arith.constant 0 : index
    %c0_41 = arith.constant 0 : index
    %225 = vector.load %arg27[%c0_40, %c0_41] : memref<128x512xbf16, #tpu.memory_space<vmem>>, vector<128x512xbf16>
    %226 = arith.truncf %222 : vector<16x128xf32> to vector<16x128xbf16>
    %cst_42 = arith.constant dense<0.000000e+00> : vector<16x512xf32>
    %227 = tpu.matmul %226, %225, %cst_42 {dimension_numbers = #tpu.dot_dimension_numbers<[1], [0], [0], [1], [0, 0, 1, 1], [], []>} : vector<16x128xbf16>, vector<128x512xbf16>, vector<16x512xf32> -> vector<16x512xf32>
    %c0_43 = arith.constant 0 : index
    %c0_44 = arith.constant 0 : index
    %228 = vector.load %arg10[%c0_43, %c0_44] : memref<1x512xf32, #tpu.memory_space<vmem>>, vector<1x512xf32>
    %229 = vector.broadcast %228 : vector<1x512xf32> to vector<16x512xf32>
    %230 = arith.addf %227, %229 : vector<16x512xf32>
    %cst_45 = arith.constant 0.000000e+00 : f32
    %231 = vector.broadcast %cst_45 : f32 to vector<16x512xf32>
    %232 = arith.maximumf %230, %231 : vector<16x512xf32>
    %c3_i32_46 = arith.constant 3 : i32
    %233 = tpu.memref_slice %arg31[%c3_i32_46] : memref<6x!tpu.dma_semaphore, #tpu.memory_space<semaphore_mem>> -> memref<1x!tpu.dma_semaphore, #tpu.memory_space<semaphore_mem>>
    %234 = tpu.memref_squeeze %233 : memref<1x!tpu.dma_semaphore, #tpu.memory_space<semaphore_mem>> -> memref<!tpu.dma_semaphore, #tpu.memory_space<semaphore_mem>>
    tpu.wait_dma2 semaphore(%234 : memref<!tpu.dma_semaphore, #tpu.memory_space<semaphore_mem>>) src(%arg21 : memref<512x128xbf16, #tpu.memory_space<any>>) dst(%arg28 : memref<512x128xbf16, #tpu.memory_space<vmem>>)
    %c0_47 = arith.constant 0 : index
    %c0_48 = arith.constant 0 : index
    %235 = vector.load %arg28[%c0_47, %c0_48] : memref<512x128xbf16, #tpu.memory_space<vmem>>, vector<512x128xbf16>
    %236 = arith.truncf %232 : vector<16x512xf32> to vector<16x512xbf16>
    %cst_49 = arith.constant dense<0.000000e+00> : vector<16x128xf32>
    %237 = tpu.matmul %236, %235, %cst_49 {dimension_numbers = #tpu.dot_dimension_numbers<[1], [0], [0], [1], [0, 0, 1, 1], [], []>} : vector<16x512xbf16>, vector<512x128xbf16>, vector<16x128xf32> -> vector<16x128xf32>
    %c0_50 = arith.constant 0 : index
    %c0_51 = arith.constant 0 : index
    %238 = vector.load %arg11[%c0_50, %c0_51] : memref<1x128xf32, #tpu.memory_space<vmem>>, vector<1x128xf32>
    %239 = vector.broadcast %238 : vector<1x128xf32> to vector<16x128xf32>
    %240 = arith.addf %237, %239 : vector<16x128xf32>
    %241 = arith.addf %222, %240 : vector<16x128xf32>
    %c0_52 = arith.constant 0 : index
    %c0_53 = arith.constant 0 : index
    %242 = vector.load %arg12[%c0_52, %c0_53] : memref<1x128xf32, #tpu.memory_space<vmem>>, vector<1x128xf32>
    %c0_54 = arith.constant 0 : index
    %c0_55 = arith.constant 0 : index
    %243 = vector.load %arg13[%c0_54, %c0_55] : memref<1x128xf32, #tpu.memory_space<vmem>>, vector<1x128xf32>
    %cst_56 = arith.constant dense<0.000000e+00> : vector<16xf32>
    %244 = vector.multi_reduction <add>, %241, %cst_56 [1] : vector<16x128xf32> to vector<16xf32>
    %245 = vector.shape_cast %244 : vector<16xf32> to vector<16x1xf32>
    %cst_57 = arith.constant 1.280000e+02 : f32
    %246 = vector.broadcast %cst_57 : f32 to vector<16x1xf32>
    %247 = arith.divf %245, %246 : vector<16x1xf32>
    %248 = vector.broadcast %247 : vector<16x1xf32> to vector<16x128xf32>
    %249 = arith.subf %241, %248 : vector<16x128xf32>
    %250 = arith.mulf %249, %249 : vector<16x128xf32>
    %cst_58 = arith.constant dense<0.000000e+00> : vector<16xf32>
    %251 = vector.multi_reduction <add>, %250, %cst_58 [1] : vector<16x128xf32> to vector<16xf32>
    %252 = vector.shape_cast %251 : vector<16xf32> to vector<16x1xf32>
    %cst_59 = arith.constant 1.280000e+02 : f32
    %253 = vector.broadcast %cst_59 : f32 to vector<16x1xf32>
    %254 = arith.divf %252, %253 : vector<16x1xf32>
    %255 = vector.broadcast %247 : vector<16x1xf32> to vector<16x128xf32>
    %256 = arith.subf %241, %255 : vector<16x128xf32>
    %cst_60 = arith.constant 9.99999974E-6 : f32
    %257 = vector.broadcast %cst_60 : f32 to vector<16x1xf32>
    %258 = arith.addf %254, %257 : vector<16x1xf32>
    %259 = math.rsqrt %258 : vector<16x1xf32>
    %260 = vector.broadcast %259 : vector<16x1xf32> to vector<16x128xf32>
    %261 = arith.mulf %256, %260 : vector<16x128xf32>
    %262 = vector.broadcast %242 : vector<1x128xf32> to vector<16x128xf32>
    %263 = arith.mulf %261, %262 : vector<16x128xf32>
    %264 = vector.broadcast %243 : vector<1x128xf32> to vector<16x128xf32>
    %265 = arith.addf %263, %264 : vector<16x128xf32>
    %c0_61 = arith.constant 0 : index
    %c0_62 = arith.constant 0 : index
    %266 = vector.load %arg14[%c0_61, %c0_62] : memref<1x128xf32, #tpu.memory_space<vmem>>, vector<1x128xf32>
    %c0_63 = arith.constant 0 : index
    %c0_64 = arith.constant 0 : index
    %267 = vector.load %arg15[%c0_63, %c0_64] : memref<1x128xf32, #tpu.memory_space<vmem>>, vector<1x128xf32>
    %cst_65 = arith.constant dense<0.000000e+00> : vector<16xf32>
    %268 = vector.multi_reduction <add>, %265, %cst_65 [1] : vector<16x128xf32> to vector<16xf32>
    %269 = vector.shape_cast %268 : vector<16xf32> to vector<16x1xf32>
    %cst_66 = arith.constant 1.280000e+02 : f32
    %270 = vector.broadcast %cst_66 : f32 to vector<16x1xf32>
    %271 = arith.divf %269, %270 : vector<16x1xf32>
    %272 = vector.broadcast %271 : vector<16x1xf32> to vector<16x128xf32>
    %273 = arith.subf %265, %272 : vector<16x128xf32>
    %274 = arith.mulf %273, %273 : vector<16x128xf32>
    %cst_67 = arith.constant dense<0.000000e+00> : vector<16xf32>
    %275 = vector.multi_reduction <add>, %274, %cst_67 [1] : vector<16x128xf32> to vector<16xf32>
    %276 = vector.shape_cast %275 : vector<16xf32> to vector<16x1xf32>
    %cst_68 = arith.constant 1.280000e+02 : f32
    %277 = vector.broadcast %cst_68 : f32 to vector<16x1xf32>
    %278 = arith.divf %276, %277 : vector<16x1xf32>
    %279 = vector.broadcast %271 : vector<16x1xf32> to vector<16x128xf32>
    %280 = arith.subf %265, %279 : vector<16x128xf32>
    %cst_69 = arith.constant 9.99999974E-6 : f32
    %281 = vector.broadcast %cst_69 : f32 to vector<16x1xf32>
    %282 = arith.addf %278, %281 : vector<16x1xf32>
    %283 = math.rsqrt %282 : vector<16x1xf32>
    %284 = vector.broadcast %283 : vector<16x1xf32> to vector<16x128xf32>
    %285 = arith.mulf %280, %284 : vector<16x128xf32>
    %286 = vector.broadcast %266 : vector<1x128xf32> to vector<16x128xf32>
    %287 = arith.mulf %285, %286 : vector<16x128xf32>
    %288 = vector.broadcast %267 : vector<1x128xf32> to vector<16x128xf32>
    %289 = arith.addf %287, %288 : vector<16x128xf32>
    %290 = vector.extract_strided_slice %289 {offsets = [0, 0], sizes = [8, 128], strides = [1, 1]} : vector<16x128xf32> to vector<8x128xf32>
    %cst_70 = arith.constant dense<0.000000e+00> : vector<128xf32>
    %291 = vector.multi_reduction <add>, %290, %cst_70 [0] : vector<8x128xf32> to vector<128xf32>
    %292 = vector.shape_cast %291 : vector<128xf32> to vector<1x128xf32>
    %cst_71 = arith.constant 8.000000e+00 : f32
    %293 = vector.broadcast %cst_71 : f32 to vector<1x128xf32>
    %294 = arith.divf %292, %293 : vector<1x128xf32>
    %295 = vector.extract_strided_slice %289 {offsets = [8, 0], sizes = [8, 128], strides = [1, 1]} : vector<16x128xf32> to vector<8x128xf32>
    %cst_72 = arith.constant dense<0.000000e+00> : vector<128xf32>
    %296 = vector.multi_reduction <add>, %295, %cst_72 [0] : vector<8x128xf32> to vector<128xf32>
    %297 = vector.shape_cast %296 : vector<128xf32> to vector<1x128xf32>
    %cst_73 = arith.constant 8.000000e+00 : f32
    %298 = vector.broadcast %cst_73 : f32 to vector<1x128xf32>
    %299 = arith.divf %297, %298 : vector<1x128xf32>
    %300 = tpu.concatenate %294, %299 in 0 : vector<1x128xf32>, vector<1x128xf32> -> vector<2x128xf32>
    %c4_i32_74 = arith.constant 4 : i32
    %301 = tpu.memref_slice %arg31[%c4_i32_74] : memref<6x!tpu.dma_semaphore, #tpu.memory_space<semaphore_mem>> -> memref<1x!tpu.dma_semaphore, #tpu.memory_space<semaphore_mem>>
    %302 = tpu.memref_squeeze %301 : memref<1x!tpu.dma_semaphore, #tpu.memory_space<semaphore_mem>> -> memref<!tpu.dma_semaphore, #tpu.memory_space<semaphore_mem>>
    tpu.wait_dma2 semaphore(%302 : memref<!tpu.dma_semaphore, #tpu.memory_space<semaphore_mem>>) src(%arg22 : memref<128x256xbf16, #tpu.memory_space<any>>) dst(%arg29 : memref<128x256xbf16, #tpu.memory_space<vmem>>)
    %c0_75 = arith.constant 0 : index
    %c0_76 = arith.constant 0 : index
    %303 = vector.load %arg29[%c0_75, %c0_76] : memref<128x256xbf16, #tpu.memory_space<vmem>>, vector<128x256xbf16>
    %304 = arith.truncf %300 : vector<2x128xf32> to vector<2x128xbf16>
    %cst_77 = arith.constant dense<0.000000e+00> : vector<2x256xf32>
    %305 = tpu.matmul %304, %303, %cst_77 {dimension_numbers = #tpu.dot_dimension_numbers<[1], [0], [0], [1], [0, 0, 1, 1], [], []>} : vector<2x128xbf16>, vector<128x256xbf16>, vector<2x256xf32> -> vector<2x256xf32>
    %c0_78 = arith.constant 0 : index
    %c0_79 = arith.constant 0 : index
    %306 = vector.load %arg16[%c0_78, %c0_79] : memref<1x256xf32, #tpu.memory_space<vmem>>, vector<1x256xf32>
    %307 = vector.broadcast %306 : vector<1x256xf32> to vector<2x256xf32>
    %308 = arith.addf %305, %307 : vector<2x256xf32>
    %cst_80 = arith.constant 0.000000e+00 : f32
    %309 = vector.broadcast %cst_80 : f32 to vector<2x256xf32>
    %310 = arith.maximumf %308, %309 : vector<2x256xf32>
    %c5_i32_81 = arith.constant 5 : i32
    %311 = tpu.memref_slice %arg31[%c5_i32_81] : memref<6x!tpu.dma_semaphore, #tpu.memory_space<semaphore_mem>> -> memref<1x!tpu.dma_semaphore, #tpu.memory_space<semaphore_mem>>
    %312 = tpu.memref_squeeze %311 : memref<1x!tpu.dma_semaphore, #tpu.memory_space<semaphore_mem>> -> memref<!tpu.dma_semaphore, #tpu.memory_space<semaphore_mem>>
    tpu.wait_dma2 semaphore(%312 : memref<!tpu.dma_semaphore, #tpu.memory_space<semaphore_mem>>) src(%arg23 : memref<8x256xbf16, #tpu.memory_space<any>>) dst(%arg30 : memref<8x256xbf16, #tpu.memory_space<vmem>>)
    %313 = arith.truncf %310 : vector<2x256xf32> to vector<2x256xbf16>
    %c0_82 = arith.constant 0 : index
    %c0_83 = arith.constant 0 : index
    %314 = vector.load %arg30[%c0_82, %c0_83] : memref<8x256xbf16, #tpu.memory_space<vmem>>, vector<8x256xbf16>
    %cst_84 = arith.constant dense<0.000000e+00> : vector<2x8xf32>
    %315 = tpu.matmul %313, %314, %cst_84 {dimension_numbers = #tpu.dot_dimension_numbers<[1], [1], [0], [0], [0, 0, 1, 0], [], []>} : vector<2x256xbf16>, vector<8x256xbf16>, vector<2x8xf32> -> vector<2x8xf32>
    %c0_85 = arith.constant 0 : index
    %c0_86 = arith.constant 0 : index
    %316 = vector.load %arg17[%c0_85, %c0_86] : memref<1x8xf32, #tpu.memory_space<vmem>>, vector<1x8xf32>
    %317 = vector.broadcast %316 : vector<1x8xf32> to vector<2x8xf32>
    %318 = arith.addf %315, %317 : vector<2x8xf32>
    %c0_87 = arith.constant 0 : index
    %c0_88 = arith.constant 0 : index
    %319 = vector.load %arg24[%c0_87, %c0_88] : memref<2x8xf32, #tpu.memory_space<vmem>>, vector<2x8xf32>
    tpu.vector_store %arg24[%c0_87, %c0_88], %318 {strides = array<i32>} : memref<2x8xf32, #tpu.memory_space<vmem>>, vector<2x8xf32>,
    return
  }
}

</mosaic_0001>

<llo_original>
// kernel: model_forward.1
$region0: #{model_forward.1}
  #allocation0 [shape = 'u32[]', space=smem, size = 0x4, offset = 0x4, fixed_abs, tag = 'smem constant byte address 0x4 - core index']
  #allocation1 [shape = 'u32[144,128]{1,0:T(1,128)}', space=vmem, size = 0x12000, scoped, tag = 'internal scratch']
  #allocation2 [shape = 'bf16[128,384]{1,0:T(8,128)(2,1)}', space=vmem, size = 0x18000, scoped, tag = 'scratch operand']
  #allocation3 [shape = 'bf16[128,128]{1,0:T(8,128)(2,1)}', space=vmem, size = 0x8000, scoped, tag = 'scratch operand']
  #allocation4 [shape = 'bf16[128,512]{1,0:T(8,128)(2,1)}', space=vmem, size = 0x20000, scoped, tag = 'scratch operand']
  #allocation5 [shape = 'bf16[512,128]{1,0:T(8,128)(2,1)}', space=vmem, size = 0x20000, scoped, tag = 'scratch operand']
  #allocation6 [shape = 'bf16[128,256]{1,0:T(8,128)(2,1)}', space=vmem, size = 0x10000, scoped, tag = 'scratch operand']
  #allocation7 [shape = 'bf16[8,256]{1,0:T(8,128)(2,1)}', space=vmem, size = 0x1000, scoped, tag = 'scratch operand']
  #allocation8 [shape = 's32[6]{0}', space=sflag, size = 0x18, scoped, tag = 'scratch operand']
  #allocation34 [shape = 's32[]', space=sflag, size = 0x4, offset = 0, fixed_abs, tag = 'sflag constant byte address 0x0 - dummy sync flag']
  #allocation35 [shape = 's32[]', space=sflag, size = 0x4, offset = 0, fixed_abs, tag = 'sflag constant byte address 0x0 - dummy sync flag']
  #allocation36 [shape = 'u32[]', space=smem, size = 0x4, offset = 0x44, fixed_abs, tag = 'smem constant byte address 0x44 - assertion arg 0']
  #allocation37 [shape = 'u32[]', space=smem, size = 0x4, offset = 0x48, fixed_abs, tag = 'smem constant byte address 0x48 - assertion arg 1']
  #allocation38 [shape = 's32[]', space=sflag, size = 0x4, offset = 0, fixed_abs, tag = 'sflag constant byte address 0x0 - dummy sync flag']
  #allocation39 [shape = 's32[]', space=sflag, size = 0x4, offset = 0, fixed_abs, tag = 'sflag constant byte address 0x0 - dummy sync flag']
  #allocation40 [shape = 's32[]', space=sflag, size = 0x4, offset = 0, fixed_abs, tag = 'sflag constant byte address 0x0 - dummy sync flag']
  #allocation41 [shape = 's32[]', space=sflag, size = 0x4, offset = 0, fixed_abs, tag = 'sflag constant byte address 0x0 - dummy sync flag']
  #allocation42 [shape = 's32[]', space=sflag, size = 0x4, offset = 0, fixed_abs, tag = 'sflag constant byte address 0x0 - dummy sync flag']
  #allocation43 [shape = 's32[]', space=sflag, size = 0x4, offset = 0, fixed_abs, tag = 'sflag constant byte address 0x0 - dummy sync flag']
  #allocation44 [shape = 's32[]', space=sflag, size = 0x4, offset = 0, fixed_abs, tag = 'sflag constant byte address 0x0 - dummy sync flag']
  #allocation45 [shape = 's32[]', space=sflag, size = 0x4, offset = 0, fixed_abs, tag = 'sflag constant byte address 0x0 - dummy sync flag']
  %s0 = inlined_call_operand.vmem [shape: f32[16,256], index: 0, kind: input, shape index: {}]
  %s1 = inlined_call_operand.hbm [shape: f32[8,128], index: 1, kind: input, shape index: {}]
  %s2 = inlined_call_operand.vmem [shape: bf16[256,256], index: 2, kind: input, shape index: {}]
  %s3 = inlined_call_operand.hbm [shape: f32[1,256], index: 3, kind: input, shape index: {}]
  %s4 = inlined_call_operand.hbm [shape: bf16[256,128], index: 4, kind: input, shape index: {}]
  %s5 = inlined_call_operand.hbm [shape: f32[1,128], index: 5, kind: input, shape index: {}]
  %s6 = inlined_call_operand.hbm [shape: f32[1,384], index: 6, kind: input, shape index: {}]
  %s7 = inlined_call_operand.hbm [shape: f32[1,128], index: 7, kind: input, shape index: {}]
  %s8 = inlined_call_operand.hbm [shape: f32[1,128], index: 8, kind: input, shape index: {}]
  %s9 = inlined_call_operand.hbm [shape: f32[1,128], index: 9, kind: input, shape index: {}]
  %s10 = inlined_call_operand.hbm [shape: f32[1,512], index: 10, kind: input, shape index: {}]
  %s11 = inlined_call_operand.hbm [shape: f32[1,128], index: 11, kind: input, shape index: {}]
  %s12 = inlined_call_operand.hbm [shape: f32[1,128], index: 12, kind: input, shape index: {}]
  %s13 = inlined_call_operand.hbm [shape: f32[1,128], index: 13, kind: input, shape index: {}]
  %s14 = inlined_call_operand.hbm [shape: f32[1,128], index: 14, kind: input, shape index: {}]
  %s15 = inlined_call_operand.hbm [shape: f32[1,128], index: 15, kind: input, shape index: {}]
  %s16 = inlined_call_operand.hbm [shape: f32[1,256], index: 16, kind: input, shape index: {}]
  %s17 = inlined_call_operand.hbm [shape: f32[1,8], index: 17, kind: input, shape index: {}]
  %s18 = inlined_call_operand.hbm [shape: bf16[128,384], index: 18, kind: input, shape index: {}]
  %s19 = inlined_call_operand.vmem [shape: bf16[128,128], index: 19, kind: input, shape index: {}]
  %s20 = inlined_call_operand.hbm [shape: bf16[128,512], index: 20, kind: input, shape index: {}]
  %s21 = inlined_call_operand.hbm [shape: bf16[512,128], index: 21, kind: input, shape index: {}]
  %s22 = inlined_call_operand.hbm [shape: bf16[128,256], index: 22, kind: input, shape index: {}]
  %s23 = inlined_call_operand.vmem [shape: bf16[8,256], index: 23, kind: input, shape index: {}]
  %s24 = inlined_call_operand.vmem [shape: f32[2,8], index: 24, kind: output, shape index: {}]
  %s25 = sld [smem:[#allocation0]]
  $region230: #{model_forward.1} parent=0
    _
  %s27 = ssub.s32 1, %s25
  %s28 = scalar_select 0, %s27, %s25
  $region1: #{model_forward.1} parent=0
    #allocation9 [shape = 'u8[4096]{0}', space=vmem, size = 0x1000, scoped, tag = 'input window, operand 1, single buffered']
    #allocation10 [shape = 's32[1]{0}', space=sflag, size = 0x4, scoped, tag = 'scoped memory for model_forward.1']
    #allocation11 [shape = 'u8[1024]{0}', space=vmem, size = 0x400, scoped, tag = 'input window, operand 3, single buffered']
    #allocation12 [shape = 's32[1]{0}', space=sflag, size = 0x4, scoped, tag = 'scoped memory for model_forward.1']
    #allocation13 [shape = 'u8[65536]{0}', space=vmem, size = 0x10000, scoped, tag = 'input window, operand 4, single buffered']
    #allocation14 [shape = 'u8[512]{0}', space=vmem, size = 0x400, scoped, tag = 'input window, operand 5, single buffered']
    #allocation15 [shape = 's32[1]{0}', space=sflag, size = 0x4, scoped, tag = 'scoped memory for model_forward.1']
    #allocation16 [shape = 'u8[1536]{0}', space=vmem, size = 0x800, scoped, tag = 'input window, operand 6, single buffered']
    #allocation17 [shape = 'u8[512]{0}', space=vmem, size = 0x400, scoped, tag = 'input window, operand 7, single buffered']
    #allocation18 [shape = 's32[1]{0}', space=sflag, size = 0x4, scoped, tag = 'scoped memory for model_forward.1']
    #allocation19 [shape = 'u8[512]{0}', space=vmem, size = 0x400, scoped, tag = 'input window, operand 8, single buffered']
    #allocation20 [shape = 'u8[512]{0}', space=vmem, size = 0x400, scoped, tag = 'input window, operand 9, single buffered']
    #allocation21 [shape = 's32[1]{0}', space=sflag, size = 0x4, scoped, tag = 'scoped memory for model_forward.1']
    #allocation22 [shape = 'u8[2048]{0}', space=vmem, size = 0x800, scoped, tag = 'input window, operand 10, single buffered']
    #allocation23 [shape = 'u8[512]{0}', space=vmem, size = 0x400, scoped, tag = 'input window, operand 11, single buffered']
    #allocation24 [shape = 's32[1]{0}', space=sflag, size = 0x4, scoped, tag = 'scoped memory for model_forward.1']
    #allocation25 [shape = 'u8[512]{0}', space=vmem, size = 0x400, scoped, tag = 'input window, operand 12, single buffered']
    #allocation26 [shape = 'u8[512]{0}', space=vmem, size = 0x400, scoped, tag = 'input window, operand 13, single buffered']
    #allocation27 [shape = 's32[1]{0}', space=sflag, size = 0x4, scoped, tag = 'scoped memory for model_forward.1']
    #allocation28 [shape = 'u8[512]{0}', space=vmem, size = 0x400, scoped, tag = 'input window, operand 14, single buffered']
    #allocation29 [shape = 'u8[512]{0}', space=vmem, size = 0x400, scoped, tag = 'input window, operand 15, single buffered']
    #allocation30 [shape = 's32[1]{0}', space=sflag, size = 0x4, scoped, tag = 'scoped memory for model_forward.1']
    #allocation31 [shape = 'u8[1024]{0}', space=vmem, size = 0x400, scoped, tag = 'input window, operand 16, single buffered']
    #allocation32 [shape = 'u8[512]{0}', space=vmem, size = 0x400, scoped, tag = 'input window, operand 17, single buffered']
    #allocation33 [shape = 's32[1]{0}', space=sflag, size = 0x4, scoped, tag = 'scoped memory for model_forward.1']
    %29 = vsyncpa [#allocation10], 0
    %30 = vsyncpa [#allocation12], 0
    %31 = vsyncpa [#allocation15], 0
    %32 = vsyncpa [#allocation18], 0
    %33 = vsyncpa [#allocation21], 0
    %34 = vsyncpa [#allocation24], 0
    %35 = vsyncpa [#allocation27], 0
    %36 = vsyncpa [#allocation30], 0
    %37 = vsyncpa [#allocation33], 0
    // Predicated region
    $region2: #{model_forward.1} parent=1 // pred_check
      _
    $region3: #{model_forward.1} parent=1 // pred_check_branch
      %39 = sbr.rel (0) target = $region5
    $region4: #{model_forward.1} parent=1 // pred_region
      _
    $region5: #{model_forward.1} parent=1 // pred_fallthru
      _
    // Predicated region
    $region6: #{model_forward.1} parent=1 // pred_check
      _
    $region7: #{model_forward.1} parent=1 // pred_check_branch
      %41 = sbr.rel (0) target = $region9
    $region8: #{model_forward.1} parent=1 // pred_region
      %s43 = ssub.s32 128, 128
      %44 = vsyncadd [#allocation10], %s43
      %s46 = sshll.u32 [#allocation9], 4
      %s47 = int_to_ptr.vmem [resolvable:$true] %s46
      %49 = dma.hbm_to_vmem [thread:$0]  %s1, 128, %s47, [#allocation10]
    $region9: #{model_forward.1} parent=1 // pred_fallthru
      _
    // Predicated region
    $region10: #{model_forward.1} parent=1 // pred_check
      _
    $region11: #{model_forward.1} parent=1 // pred_check_branch
      %51 = sbr.rel (0) target = $region13
    $region12: #{model_forward.1} parent=1 // pred_region
      _
    $region13: #{model_forward.1} parent=1 // pred_fallthru
      _
    // Predicated region
    $region14: #{model_forward.1} parent=1 // pred_check
      _
    $region15: #{model_forward.1} parent=1 // pred_check_branch
      %53 = sbr.rel (0) target = $region17
    $region16: #{model_forward.1} parent=1 // pred_region
      %s55 = ssub.s32 32, 32
      %56 = vsyncadd [#allocation12], %s55
      %s58 = sshll.u32 [#allocation11], 4
      %s59 = int_to_ptr.vmem [resolvable:$true] %s58
      %61 = dma.hbm_to_vmem [thread:$0]  %s3, 32, %s59, [#allocation12]
    $region17: #{model_forward.1} parent=1 // pred_fallthru
      _
    // Predicated region
    $region18: #{model_forward.1} parent=1 // pred_check
      _
    $region19: #{model_forward.1} parent=1 // pred_check_branch
      %63 = sbr.rel (0) target = $region21
    $region20: #{model_forward.1} parent=1 // pred_region
      %s65 = ssub.s32 2048, 2048
      %66 = vsyncadd [#allocation12], %s65
      %s67 = sshll.u32 [#allocation13], 4
      %s68 = int_to_ptr.vmem [resolvable:$true] %s67
      %73 = dma.hbm_to_vmem [thread:$0]  %s4, 2048, %s68, [#allocation12], 64, 64, 4
    $region21: #{model_forward.1} parent=1 // pred_fallthru
      _
    // Predicated region
    $region22: #{model_forward.1} parent=1 // pred_check
      _
    $region23: #{model_forward.1} parent=1 // pred_check_branch
      %75 = sbr.rel (0) target = $region25
    $region24: #{model_forward.1} parent=1 // pred_region
      %s77 = ssub.s32 16, 16
      %78 = vsyncadd [#allocation15], %s77
      %s80 = sshll.u32 [#allocation14], 4
      %s81 = int_to_ptr.vmem [resolvable:$true] %s80
      %83 = dma.hbm_to_vmem [thread:$0]  %s5, 16, %s81, [#allocation15]
    $region25: #{model_forward.1} parent=1 // pred_fallthru
      _
    // Predicated region
    $region26: #{model_forward.1} parent=1 // pred_check
      _
    $region27: #{model_forward.1} parent=1 // pred_check_branch
      %85 = sbr.rel (0) target = $region29
    $region28: #{model_forward.1} parent=1 // pred_region
      %s87 = ssub.s32 48, 48
      %88 = vsyncadd [#allocation15], %s87
      %s90 = sshll.u32 [#allocation16], 4
      %s91 = int_to_ptr.vmem [resolvable:$true] %s90
      %93 = dma.hbm_to_vmem [thread:$0]  %s6, 48, %s91, [#allocation15]
    $region29: #{model_forward.1} parent=1 // pred_fallthru
      _
    // Predicated region
    $region30: #{model_forward.1} parent=1 // pred_check
      _
    $region31: #{model_forward.1} parent=1 // pred_check_branch
      %95 = sbr.rel (0) target = $region33
    $region32: #{model_forward.1} parent=1 // pred_region
      %s97 = ssub.s32 16, 16
      %98 = vsyncadd [#allocation18], %s97
      %s100 = sshll.u32 [#allocation17], 4
      %s101 = int_to_ptr.vmem [resolvable:$true] %s100
      %103 = dma.hbm_to_vmem [thread:$0]  %s7, 16, %s101, [#allocation18]
    $region33: #{model_forward.1} parent=1 // pred_fallthru
      _
    // Predicated region
    $region34: #{model_forward.1} parent=1 // pred_check
      _
    $region35: #{model_forward.1} parent=1 // pred_check_branch
      %105 = sbr.rel (0) target = $region37
    $region36: #{model_forward.1} parent=1 // pred_region
      %s107 = ssub.s32 16, 16
      %108 = vsyncadd [#allocation18], %s107
      %s110 = sshll.u32 [#allocation19], 4
      %s111 = int_to_ptr.vmem [resolvable:$true] %s110
      %113 = dma.hbm_to_vmem [thread:$0]  %s8, 16, %s111, [#allocation18]
    $region37: #{model_forward.1} parent=1 // pred_fallthru
      _
    // Predicated region
    $region38: #{model_forward.1} parent=1 // pred_check
      _
    $region39: #{model_forward.1} parent=1 // pred_check_branch
      %115 = sbr.rel (0) target = $region41
    $region40: #{model_forward.1} parent=1 // pred_region
      %s117 = ssub.s32 16, 16
      %118 = vsyncadd [#allocation21], %s117
      %s120 = sshll.u32 [#allocation20], 4
      %s121 = int_to_ptr.vmem [resolvable:$true] %s120
      %123 = dma.hbm_to_vmem [thread:$0]  %s9, 16, %s121, [#allocation21]
    $region41: #{model_forward.1} parent=1 // pred_fallthru
      _
    // Predicated region
    $region42: #{model_forward.1} parent=1 // pred_check
      _
    $region43: #{model_forward.1} parent=1 // pred_check_branch
      %125 = sbr.rel (0) target = $region45
    $region44: #{model_forward.1} parent=1 // pred_region
      %s127 = ssub.s32 64, 64
      %128 = vsyncadd [#allocation21], %s127
      %s130 = sshll.u32 [#allocation22], 4
      %s131 = int_to_ptr.vmem [resolvable:$true] %s130
      %133 = dma.hbm_to_vmem [thread:$0]  %s10, 64, %s131, [#allocation21]
    $region45: #{model_forward.1} parent=1 // pred_fallthru
      _
    // Predicated region
    $region46: #{model_forward.1} parent=1 // pred_check
      _
    $region47: #{model_forward.1} parent=1 // pred_check_branch
      %135 = sbr.rel (0) target = $region49
    $region48: #{model_forward.1} parent=1 // pred_region
      %s137 = ssub.s32 16, 16
      %138 = vsyncadd [#allocation24], %s137
      %s140 = sshll.u32 [#allocation23], 4
      %s141 = int_to_ptr.vmem [resolvable:$true] %s140
      %143 = dma.hbm_to_vmem [thread:$0]  %s11, 16, %s141, [#allocation24]
    $region49: #{model_forward.1} parent=1 // pred_fallthru
      _
    // Predicated region
    $region50: #{model_forward.1} parent=1 // pred_check
      _
    $region51: #{model_forward.1} parent=1 // pred_check_branch
      %145 = sbr.rel (0) target = $region53
    $region52: #{model_forward.1} parent=1 // pred_region
      %s147 = ssub.s32 16, 16
      %148 = vsyncadd [#allocation24], %s147
      %s150 = sshll.u32 [#allocation25], 4
      %s151 = int_to_ptr.vmem [resolvable:$true] %s150
      %153 = dma.hbm_to_vmem [thread:$0]  %s12, 16, %s151, [#allocation24]
    $region53: #{model_forward.1} parent=1 // pred_fallthru
      _
    // Predicated region
    $region54: #{model_forward.1} parent=1 // pred_check
      _
    $region55: #{model_forward.1} parent=1 // pred_check_branch
      %155 = sbr.rel (0) target = $region57
    $region56: #{model_forward.1} parent=1 // pred_region
      %s157 = ssub.s32 16, 16
      %158 = vsyncadd [#allocation27], %s157
      %s160 = sshll.u32 [#allocation26], 4
      %s161 = int_to_ptr.vmem [resolvable:$true] %s160
      %163 = dma.hbm_to_vmem [thread:$0]  %s13, 16, %s161, [#allocation27]
    $region57: #{model_forward.1} parent=1 // pred_fallthru
      _
    // Predicated region
    $region58: #{model_forward.1} parent=1 // pred_check
      _
    $region59: #{model_forward.1} parent=1 // pred_check_branch
      %165 = sbr.rel (0) target = $region61
    $region60: #{model_forward.1} parent=1 // pred_region
      %s167 = ssub.s32 16, 16
      %168 = vsyncadd [#allocation27], %s167
      %s170 = sshll.u32 [#allocation28], 4
      %s171 = int_to_ptr.vmem [resolvable:$true] %s170
      %173 = dma.hbm_to_vmem [thread:$0]  %s14, 16, %s171, [#allocation27]
    $region61: #{model_forward.1} parent=1 // pred_fallthru
      _
    // Predicated region
    $region62: #{model_forward.1} parent=1 // pred_check
      _
    $region63: #{model_forward.1} parent=1 // pred_check_branch
      %175 = sbr.rel (0) target = $region65
    $region64: #{model_forward.1} parent=1 // pred_region
      %s177 = ssub.s32 16, 16
      %178 = vsyncadd [#allocation30], %s177
      %s180 = sshll.u32 [#allocation29], 4
      %s181 = int_to_ptr.vmem [resolvable:$true] %s180
      %183 = dma.hbm_to_vmem [thread:$0]  %s15, 16, %s181, [#allocation30]
    $region65: #{model_forward.1} parent=1 // pred_fallthru
      _
    // Predicated region
    $region66: #{model_forward.1} parent=1 // pred_check
      _
    $region67: #{model_forward.1} parent=1 // pred_check_branch
      %185 = sbr.rel (0) target = $region69
    $region68: #{model_forward.1} parent=1 // pred_region
      %s187 = ssub.s32 32, 32
      %188 = vsyncadd [#allocation30], %s187
      %s190 = sshll.u32 [#allocation31], 4
      %s191 = int_to_ptr.vmem [resolvable:$true] %s190
      %193 = dma.hbm_to_vmem [thread:$0]  %s16, 32, %s191, [#allocation30]
    $region69: #{model_forward.1} parent=1 // pred_fallthru
      _
    // Predicated region
    $region70: #{model_forward.1} parent=1 // pred_check
      _
    $region71: #{model_forward.1} parent=1 // pred_check_branch
      %195 = sbr.rel (0) target = $region73
    $region72: #{model_forward.1} parent=1 // pred_region
      %s197 = ssub.s32 16, 16
      %198 = vsyncadd [#allocation33], %s197
      %s200 = sshll.u32 [#allocation32], 4
      %s201 = int_to_ptr.vmem [resolvable:$true] %s200
      %203 = dma.hbm_to_vmem [thread:$0]  %s17, 16, %s201, [#allocation33]
    $region73: #{model_forward.1} parent=1 // pred_fallthru
      _
    // Predicated region
    $region74: #{model_forward.1} parent=1 // pred_check
      _
    $region75: #{model_forward.1} parent=1 // pred_check_branch
      %205 = sbr.rel (0) target = $region77
    $region76: #{model_forward.1} parent=1 // pred_region
      %206 = dma.done [#allocation10], 128
    $region77: #{model_forward.1} parent=1 // pred_fallthru
      _
    // Predicated region
    $region78: #{model_forward.1} parent=1 // pred_check
      _
    $region79: #{model_forward.1} parent=1 // pred_check_branch
      %208 = sbr.rel (0) target = $region81
    $region80: #{model_forward.1} parent=1 // pred_region
      %209 = dma.done [#allocation12], 32
    $region81: #{model_forward.1} parent=1 // pred_fallthru
      _
    // Predicated region
    $region82: #{model_forward.1} parent=1 // pred_check
      _
    $region83: #{model_forward.1} parent=1 // pred_check_branch
      %211 = sbr.rel (0) target = $region85
    $region84: #{model_forward.1} parent=1 // pred_region
      %212 = dma.done [#allocation12], 2048
    $region85: #{model_forward.1} parent=1 // pred_fallthru
      _
    // Predicated region
    $region86: #{model_forward.1} parent=1 // pred_check
      _
    $region87: #{model_forward.1} parent=1 // pred_check_branch
      %214 = sbr.rel (0) target = $region89
    $region88: #{model_forward.1} parent=1 // pred_region
      %215 = dma.done [#allocation15], 16
    $region89: #{model_forward.1} parent=1 // pred_fallthru
      _
    // Predicated region
    $region90: #{model_forward.1} parent=1 // pred_check
      _
    $region91: #{model_forward.1} parent=1 // pred_check_branch
      %217 = sbr.rel (0) target = $region93
    $region92: #{model_forward.1} parent=1 // pred_region
      %218 = dma.done [#allocation15], 48
    $region93: #{model_forward.1} parent=1 // pred_fallthru
      _
    // Predicated region
    $region94: #{model_forward.1} parent=1 // pred_check
      _
    $region95: #{model_forward.1} parent=1 // pred_check_branch
      %220 = sbr.rel (0) target = $region97
    $region96: #{model_forward.1} parent=1 // pred_region
      %221 = dma.done [#allocation18], 16
    $region97: #{model_forward.1} parent=1 // pred_fallthru
      _
    // Predicated region
    $region98: #{model_forward.1} parent=1 // pred_check
      _
    $region99: #{model_forward.1} parent=1 // pred_check_branch
      %223 = sbr.rel (0) target = $region101
    $region100: #{model_forward.1} parent=1 // pred_region
      %224 = dma.done [#allocation18], 16
    $region101: #{model_forward.1} parent=1 // pred_fallthru
      _
    // Predicated region
    $region102: #{model_forward.1} parent=1 // pred_check
      _
    $region103: #{model_forward.1} parent=1 // pred_check_branch
      %226 = sbr.rel (0) target = $region105
    $region104: #{model_forward.1} parent=1 // pred_region
      %227 = dma.done [#allocation21], 16
    $region105: #{model_forward.1} parent=1 // pred_fallthru
      _
    // Predicated region
    $region106: #{model_forward.1} parent=1 // pred_check
      _
    $region107: #{model_forward.1} parent=1 // pred_check_branch
      %229 = sbr.rel (0) target = $region109
    $region108: #{model_forward.1} parent=1 // pred_region
      %230 = dma.done [#allocation21], 64
    $region109: #{model_forward.1} parent=1 // pred_fallthru
      _
    // Predicated region
    $region110: #{model_forward.1} parent=1 // pred_check
      _
    $region111: #{model_forward.1} parent=1 // pred_check_branch
      %232 = sbr.rel (0) target = $region113
    $region112: #{model_forward.1} parent=1 // pred_region
      %233 = dma.done [#allocation24], 16
    $region113: #{model_forward.1} parent=1 // pred_fallthru
      _
    // Predicated region
    $region114: #{model_forward.1} parent=1 // pred_check
      _
    $region115: #{model_forward.1} parent=1 // pred_check_branch
      %235 = sbr.rel (0) target = $region117
    $region116: #{model_forward.1} parent=1 // pred_region
      %236 = dma.done [#allocation24], 16
    $region117: #{model_forward.1} parent=1 // pred_fallthru
      _
    // Predicated region
    $region118: #{model_forward.1} parent=1 // pred_check
      _
    $region119: #{model_forward.1} parent=1 // pred_check_branch
      %238 = sbr.rel (0) target = $region121
    $region120: #{model_forward.1} parent=1 // pred_region
      %239 = dma.done [#allocation27], 16
    $region121: #{model_forward.1} parent=1 // pred_fallthru
      _
    // Predicated region
    $region122: #{model_forward.1} parent=1 // pred_check
      _
    $region123: #{model_forward.1} parent=1 // pred_check_branch
      %241 = sbr.rel (0) target = $region125
    $region124: #{model_forward.1} parent=1 // pred_region
      %242 = dma.done [#allocation27], 16
    $region125: #{model_forward.1} parent=1 // pred_fallthru
      _
    // Predicated region
    $region126: #{model_forward.1} parent=1 // pred_check
      _
    $region127: #{model_forward.1} parent=1 // pred_check_branch
      %244 = sbr.rel (0) target = $region129
    $region128: #{model_forward.1} parent=1 // pred_region
      %245 = dma.done [#allocation30], 16
    $region129: #{model_forward.1} parent=1 // pred_fallthru
      _
    // Predicated region
    $region130: #{model_forward.1} parent=1 // pred_check
      _
    $region131: #{model_forward.1} parent=1 // pred_check_branch
      %247 = sbr.rel (0) target = $region133
    $region132: #{model_forward.1} parent=1 // pred_region
      %248 = dma.done [#allocation30], 32
    $region133: #{model_forward.1} parent=1 // pred_fallthru
      _
    // Predicated region
    $region134: #{model_forward.1} parent=1 // pred_check
      _
    $region135: #{model_forward.1} parent=1 // pred_check_branch
      %250 = sbr.rel (0) target = $region137
    $region136: #{model_forward.1} parent=1 // pred_region
      %251 = dma.done [#allocation33], 16
    $region137: #{model_forward.1} parent=1 // pred_fallthru
      _
    // Predicated region
    $region138: #{model_forward.1} parent=1 // pred_check
      _
    $region139: #{model_forward.1} parent=1 // pred_check_branch
      %254 = sbr.rel target = $region141
    $region140: #{model_forward.1} parent=1 // pred_region
      %255 = sst [smem:[#allocation36]] [#allocation35]
      %256 = sst [smem:[#allocation37]] [#allocation34]
    $region141: #{model_forward.1} parent=1 // pred_fallthru
      _
    %258 = shalt.err (0)
    %s260 = sshll.u32 [#allocation2], 4
    %s261 = int_to_ptr.vmem [resolvable:$true] %s260
    %263 = dma.hbm_to_vmem [thread:$0]  %s18, 3072, %s261, [#allocation8]
    %s264 = scalar_lea.sflag [#allocation8], 1
    %p266 = scmp.lt.u32.totalorder 64, 8
    %p267 = pneg %p266
    // Predicated region
    $region142: #{model_forward.1} parent=1 // pred_check
      _
    $region143: #{model_forward.1} parent=1 // pred_check_branch
      %269 = sbr.rel (%p266) target = $region145
    $region144: #{model_forward.1} parent=1 // pred_region
      %s285 = sand.u32 64, 7
      %p286 = scmp.eq.s32.totalorder %s285, 0
      // Predicated region
      $region157: #{model_forward.1} parent=144 // pred_check
        %p287 = pneg %p286
      $region158: #{model_forward.1} parent=144 // pred_check_branch
        %289 = sbr.rel (%p287) target = $region160
      $region159: #{model_forward.1} parent=144 // pred_region
        loop: start=0, step=1, limit=1
        $region161: #{model_forward.1} parent=159 // loop_pre_header
          _
        $region162: #{model_forward.1} parent=159 // loop_header
          %s291 = sphi 0, %s295
          %p292 = scmp.ge.s32.totalorder %s291, 1
          %s296 = sphi %s19, %s19
          %s297 = sphi [#allocation3], [#allocation3]
        $region163: #{model_forward.1} parent=159 // loop_header_branch
          %294 = sbr.rel (%p292) target = $region167
        $region164: #{model_forward.1} parent=159 // loop_body
          %v298 = vld [vmem:[%s296] sm:$0xff]
          %299 = vst [vmem:[%s297] sm:$0xff] %v298
          %v300 = vld [vmem:[%s296 + $0x8] sm:$0xff]
          %301 = vst [vmem:[%s297 + $0x8] sm:$0xff] %v300
          %v302 = vld [vmem:[%s296 + $0x10] sm:$0xff]
          %303 = vst [vmem:[%s297 + $0x10] sm:$0xff] %v302
          %v304 = vld [vmem:[%s296 + $0x18] sm:$0xff]
          %305 = vst [vmem:[%s297 + $0x18] sm:$0xff] %v304
          %v306 = vld [vmem:[%s296 + $0x20] sm:$0xff]
          %307 = vst [vmem:[%s297 + $0x20] sm:$0xff] %v306
          %v308 = vld [vmem:[%s296 + $0x28] sm:$0xff]
          %309 = vst [vmem:[%s297 + $0x28] sm:$0xff] %v308
          %v310 = vld [vmem:[%s296 + $0x30] sm:$0xff]
          %311 = vst [vmem:[%s297 + $0x30] sm:$0xff] %v310
          %v312 = vld [vmem:[%s296 + $0x38] sm:$0xff]
          %313 = vst [vmem:[%s297 + $0x38] sm:$0xff] %v312
        $region165: #{model_forward.1} parent=159 // loop_footer
          %s295 = sadd.s32 1, %s291
        $region166: #{model_forward.1} parent=159 // loop_footer_branch
          %290 = sbr.rel target = $region162
        $region167: #{model_forward.1} parent=159 // loop_exit
          _
      $region160: #{model_forward.1} parent=144 // pred_fallthru
        _
      %p314 = pneg %p286
      // Predicated region
      $region168: #{model_forward.1} parent=144 // pred_check
        _
      $region169: #{model_forward.1} parent=144 // pred_check_branch
        %316 = sbr.rel (%p286) target = $region171
      $region170: #{model_forward.1} parent=144 // pred_region
        %s317 = sand.u32 64, 7
      $region171: #{model_forward.1} parent=144 // pred_fallthru
        _
    $region145: #{model_forward.1} parent=1 // pred_fallthru
      _
    // Predicated region
    $region146: #{model_forward.1} parent=1 // pred_check
      %p270 = pneg %p266
    $region147: #{model_forward.1} parent=1 // pred_check_branch
      %272 = sbr.rel (%p270) target = $region149
    $region148: #{model_forward.1} parent=1 // pred_region
      %s273 = sshll.u32 1, 64
      %s274 = ssub.s32 %s273, 1
      loop: start=0, step=1, limit=1
      $region150: #{model_forward.1} parent=148 // loop_pre_header
        _
      $region151: #{model_forward.1} parent=148 // loop_header
        %s276 = sphi 0, %s280
        %p277 = scmp.ge.s32.totalorder %s276, 1
        %s281 = sphi %s19, %s19
        %s282 = sphi [#allocation3], [#allocation3]
      $region152: #{model_forward.1} parent=148 // loop_header_branch
        %279 = sbr.rel (%p277) target = $region156
      $region153: #{model_forward.1} parent=148 // loop_body
        %v283 = vld [vmem:[%s281] sm:%s274]
        %284 = vst [vmem:[%s282] sm:%s274] %v283
      $region154: #{model_forward.1} parent=148 // loop_footer
        %s280 = sadd.s32 1, %s276
      $region155: #{model_forward.1} parent=148 // loop_footer_branch
        %275 = sbr.rel target = $region151
      $region156: #{model_forward.1} parent=148 // loop_exit
        _
    $region149: #{model_forward.1} parent=1 // pred_fallthru
      _
    // Predicated region
    $region172: #{model_forward.1} parent=1 // pred_check
      _
    $region173: #{model_forward.1} parent=1 // pred_check_branch
      %320 = sbr.rel (0) target = $region175
    $region174: #{model_forward.1} parent=1 // pred_region
      %321 = vsyncadd %s264, 1024
    $region175: #{model_forward.1} parent=1 // pred_fallthru
      _
    %s322 = scalar_lea.sflag [#allocation8], 2
    // Predicated region
    $region176: #{model_forward.1} parent=1 // pred_check
      _
    $region177: #{model_forward.1} parent=1 // pred_check_branch
      %324 = sbr.rel target = $region179
    $region178: #{model_forward.1} parent=1 // pred_region
      %325 = sst [smem:[#allocation36]] [#allocation40]
      %326 = sst [smem:[#allocation37]] [#allocation39]
    $region179: #{model_forward.1} parent=1 // pred_fallthru
      _
    %328 = shalt.err (0)
    %s330 = sshll.u32 [#allocation4], 4
    %s331 = int_to_ptr.vmem [resolvable:$true] %s330
    %333 = dma.hbm_to_vmem [thread:$0]  %s20, 4096, %s331, %s322
    %s334 = scalar_lea.sflag [#allocation8], 3
    // Predicated region
    $region180: #{model_forward.1} parent=1 // pred_check
      _
    $region181: #{model_forward.1} parent=1 // pred_check_branch
      %336 = sbr.rel target = $region183
    $region182: #{model_forward.1} parent=1 // pred_region
      %337 = sst [smem:[#allocation36]] [#allocation42]
      %338 = sst [smem:[#allocation37]] [#allocation41]
    $region183: #{model_forward.1} parent=1 // pred_fallthru
      _
    %340 = shalt.err (0)
    %s342 = sshll.u32 [#allocation5], 4
    %s343 = int_to_ptr.vmem [resolvable:$true] %s342
    %345 = dma.hbm_to_vmem [thread:$0]  %s21, 4096, %s343, %s334
    %s346 = scalar_lea.sflag [#allocation8], 4
    // Predicated region
    $region184: #{model_forward.1} parent=1 // pred_check
      _
    $region185: #{model_forward.1} parent=1 // pred_check_branch
      %348 = sbr.rel target = $region187
    $region186: #{model_forward.1} parent=1 // pred_region
      %349 = sst [smem:[#allocation36]] [#allocation44]
      %350 = sst [smem:[#allocation37]] [#allocation43]
    $region187: #{model_forward.1} parent=1 // pred_fallthru
      _
    %352 = shalt.err (0)
    %s354 = sshll.u32 [#allocation6], 4
    %s355 = int_to_ptr.vmem [resolvable:$true] %s354
    %357 = dma.hbm_to_vmem [thread:$0]  %s22, 2048, %s355, %s346
    %s358 = scalar_lea.sflag [#allocation8], 5
    %p360 = scmp.lt.u32.totalorder 8, 8
    %p361 = pneg %p360
    // Predicated region
    $region188: #{model_forward.1} parent=1 // pred_check
      _
    $region189: #{model_forward.1} parent=1 // pred_check_branch
      %363 = sbr.rel (%p360) target = $region191
    $region190: #{model_forward.1} parent=1 // pred_region
      %s379 = sand.u32 8, 7
      %p380 = scmp.eq.s32.totalorder %s379, 0
      // Predicated region
      $region203: #{model_forward.1} parent=190 // pred_check
        %p381 = pneg %p380
      $region204: #{model_forward.1} parent=190 // pred_check_branch
        %383 = sbr.rel (%p381) target = $region206
      $region205: #{model_forward.1} parent=190 // pred_region
        loop: start=0, step=1, limit=1
        $region207: #{model_forward.1} parent=205 // loop_pre_header
          _
        $region208: #{model_forward.1} parent=205 // loop_header
          %s385 = sphi 0, %s389
          %p386 = scmp.ge.s32.totalorder %s385, 1
          %s390 = sphi %s23, %s23
          %s391 = sphi [#allocation7], [#allocation7]
        $region209: #{model_forward.1} parent=205 // loop_header_branch
          %388 = sbr.rel (%p386) target = $region213
        $region210: #{model_forward.1} parent=205 // loop_body
          %v392 = vld [vmem:[%s390] sm:$0xff]
          %393 = vst [vmem:[%s391] sm:$0xff] %v392
        $region211: #{model_forward.1} parent=205 // loop_footer
          %s389 = sadd.s32 1, %s385
        $region212: #{model_forward.1} parent=205 // loop_footer_branch
          %384 = sbr.rel target = $region208
        $region213: #{model_forward.1} parent=205 // loop_exit
          _
      $region206: #{model_forward.1} parent=190 // pred_fallthru
        _
      %p394 = pneg %p380
      // Predicated region
      $region214: #{model_forward.1} parent=190 // pred_check
        _
      $region215: #{model_forward.1} parent=190 // pred_check_branch
        %396 = sbr.rel (%p380) target = $region217
      $region216: #{model_forward.1} parent=190 // pred_region
        %s397 = sand.u32 8, 7
      $region217: #{model_forward.1} parent=190 // pred_fallthru
        _
    $region191: #{model_forward.1} parent=1 // pred_fallthru
      _
    // Predicated region
    $region192: #{model_forward.1} parent=1 // pred_check
      %p364 = pneg %p360
    $region193: #{model_forward.1} parent=1 // pred_check_branch
      %366 = sbr.rel (%p364) target = $region195
    $region194: #{model_forward.1} parent=1 // pred_region
      %s367 = sshll.u32 1, 8
      %s368 = ssub.s32 %s367, 1
      loop: start=0, step=1, limit=1
      $region196: #{model_forward.1} parent=194 // loop_pre_header
        _
      $region197: #{model_forward.1} parent=194 // loop_header
        %s370 = sphi 0, %s374
        %p371 = scmp.ge.s32.totalorder %s370, 1
        %s375 = sphi %s23, %s23
        %s376 = sphi [#allocation7], [#allocation7]
      $region198: #{model_forward.1} parent=194 // loop_header_branch
        %373 = sbr.rel (%p371) target = $region202
      $region199: #{model_forward.1} parent=194 // loop_body
        %v377 = vld [vmem:[%s375] sm:%s368]
        %378 = vst [vmem:[%s376] sm:%s368] %v377
      $region200: #{model_forward.1} parent=194 // loop_footer
        %s374 = sadd.s32 1, %s370
      $region201: #{model_forward.1} parent=194 // loop_footer_branch
        %369 = sbr.rel target = $region197
      $region202: #{model_forward.1} parent=194 // loop_exit
        _
    $region195: #{model_forward.1} parent=1 // pred_fallthru
      _
    // Predicated region
    $region218: #{model_forward.1} parent=1 // pred_check
      _
    $region219: #{model_forward.1} parent=1 // pred_check_branch
      %400 = sbr.rel (0) target = $region221
    $region220: #{model_forward.1} parent=1 // pred_region
      %401 = vsyncadd %s358, 128
    $region221: #{model_forward.1} parent=1 // pred_fallthru
      _
    %v402 = vld [vmem:[%s0] sm:$0xff]
    %v403 = vld [vmem:[%s0 + $0x8] sm:$0xff]
    %v404 = vld [vmem:[%s0 + $0x10] sm:$0xff]
    %v405 = vld [vmem:[%s0 + $0x18] sm:$0xff]
    %v406 = vld [vmem:[%s2] sm:$0xff]
    %v407 = vld [vmem:[%s2 + $0x8] sm:$0xff]
    %v408 = vld [vmem:[%s2 + $0x10] sm:$0xff]
    %v409 = vld [vmem:[%s2 + $0x18] sm:$0xff]
    %v410 = vld [vmem:[%s2 + $0x20] sm:$0xff]
    %v411 = vld [vmem:[%s2 + $0x28] sm:$0xff]
    %v412 = vld [vmem:[%s2 + $0x30] sm:$0xff]
    %v413 = vld [vmem:[%s2 + $0x38] sm:$0xff]
    %v414 = vld [vmem:[%s2 + $0x40] sm:$0xff]
    %v415 = vld [vmem:[%s2 + $0x48] sm:$0xff]
    %v416 = vld [vmem:[%s2 + $0x50] sm:$0xff]
    %v417 = vld [vmem:[%s2 + $0x58] sm:$0xff]
    %v418 = vld [vmem:[%s2 + $0x60] sm:$0xff]
    %v419 = vld [vmem:[%s2 + $0x68] sm:$0xff]
    %v420 = vld [vmem:[%s2 + $0x70] sm:$0xff]
    %v421 = vld [vmem:[%s2 + $0x78] sm:$0xff]
    %v422 = vld [vmem:[%s2 + $0x80] sm:$0xff]
    %v423 = vld [vmem:[%s2 + $0x88] sm:$0xff]
    %v424 = vld [vmem:[%s2 + $0x90] sm:$0xff]
    %v425 = vld [vmem:[%s2 + $0x98] sm:$0xff]
    %v426 = vld [vmem:[%s2 + $0xa0] sm:$0xff]
    %v427 = vld [vmem:[%s2 + $0xa8] sm:$0xff]
    %v428 = vld [vmem:[%s2 + $0xb0] sm:$0xff]
    %v429 = vld [vmem:[%s2 + $0xb8] sm:$0xff]
    %v430 = vld [vmem:[%s2 + $0xc0] sm:$0xff]
    %v431 = vld [vmem:[%s2 + $0xc8] sm:$0xff]
    %v432 = vld [vmem:[%s2 + $0xd0] sm:$0xff]
    %v433 = vld [vmem:[%s2 + $0xd8] sm:$0xff]
    %v434 = vld [vmem:[%s2 + $0xe0] sm:$0xff]
    %v435 = vld [vmem:[%s2 + $0xe8] sm:$0xff]
    %v436 = vld [vmem:[%s2 + $0xf0] sm:$0xff]
    %v437 = vld [vmem:[%s2 + $0xf8] sm:$0xff]
    %v438 = vpack.c.bf16 %v404, %v402
    %v439 = vpack.c.bf16 %v405, %v403
    %v440 = vld [vmem:[#allocation11] sm:$0x3]
    %v442 = vlaneseq
    %v443 = vshrl.u32 %v442, 7
    %v444 = vsub.s32 0, %v443
    %v445 = vrot.slane %v440, %v444
    %v446 = vlaneseq
    %v447 = vshrl.u32 %v446, 7
    %v448 = vsub.s32 1, %v447
    %v449 = vrot.slane %v440, %v448
    %v484 = vunpack.c.l.b16 %v406
    %v485 = vunpack.c.h.b16 %v406
    %v486 = vunpack.c.l.b16 %v407
    %v487 = vunpack.c.h.b16 %v407
    %v488 = vunpack.c.l.b16 %v408
    %v489 = vunpack.c.h.b16 %v408
    %v490 = vunpack.c.l.b16 %v409
    %v491 = vunpack.c.h.b16 %v409
    %v492 = vunpack.c.l.b16 %v410
    %v493 = vunpack.c.h.b16 %v410
    %v494 = vunpack.c.l.b16 %v411
    %v495 = vunpack.c.h.b16 %v411
    %v496 = vunpack.c.l.b16 %v412
    %v497 = vunpack.c.h.b16 %v412
    %v498 = vunpack.c.l.b16 %v413
    %v499 = vunpack.c.h.b16 %v413
    %v500 = vunpack.c.l.b16 %v414
    %v501 = vunpack.c.h.b16 %v414
    %v502 = vunpack.c.l.b16 %v415
    %v503 = vunpack.c.h.b16 %v415
    %v504 = vunpack.c.l.b16 %v416
    %v505 = vunpack.c.h.b16 %v416
    %v506 = vunpack.c.l.b16 %v417
    %v507 = vunpack.c.h.b16 %v417
    %v508 = vunpack.c.l.b16 %v418
    %v509 = vunpack.c.h.b16 %v418
    %v510 = vunpack.c.l.b16 %v419
    %v511 = vunpack.c.h.b16 %v419
    %v512 = vunpack.c.l.b16 %v420
    %v513 = vunpack.c.h.b16 %v420
    %v514 = vunpack.c.l.b16 %v421
    %v515 = vunpack.c.h.b16 %v421
    %v516 = vunpack.c.l.b16 %v422
    %v517 = vunpack.c.h.b16 %v422
    %v518 = vunpack.c.l.b16 %v423
    %v519 = vunpack.c.h.b16 %v423
    %v520 = vunpack.c.l.b16 %v424
    %v521 = vunpack.c.h.b16 %v424
    %v522 = vunpack.c.l.b16 %v425
    %v523 = vunpack.c.h.b16 %v425
    %v524 = vunpack.c.l.b16 %v426
    %v525 = vunpack.c.h.b16 %v426
    %v526 = vunpack.c.l.b16 %v427
    %v527 = vunpack.c.h.b16 %v427
    %v528 = vunpack.c.l.b16 %v428
    %v529 = vunpack.c.h.b16 %v428
    %v530 = vunpack.c.l.b16 %v429
    %v531 = vunpack.c.h.b16 %v429
    %v532 = vunpack.c.l.b16 %v430
    %v533 = vunpack.c.h.b16 %v430
    %v534 = vunpack.c.l.b16 %v431
    %v535 = vunpack.c.h.b16 %v431
    %v536 = vunpack.c.l.b16 %v432
    %v537 = vunpack.c.h.b16 %v432
    %v538 = vunpack.c.l.b16 %v433
    %v539 = vunpack.c.h.b16 %v433
    %v540 = vunpack.c.l.b16 %v434
    %v541 = vunpack.c.h.b16 %v434
    %v542 = vunpack.c.l.b16 %v435
    %v543 = vunpack.c.h.b16 %v435
    %v544 = vunpack.c.l.b16 %v436
    %v545 = vunpack.c.h.b16 %v436
    %v546 = vunpack.c.l.b16 %v437
    %v547 = vunpack.c.h.b16 %v437
    %v548 = vpack.c.b16 %v486, %v484
    %v549 = vpack.c.b16 %v487, %v485
    %v550 = vpack.c.b16 %v490, %v488
    %v551 = vpack.c.b16 %v491, %v489
    %v552 = vpack.c.b16 %v494, %v492
    %v553 = vpack.c.b16 %v495, %v493
    %v554 = vpack.c.b16 %v498, %v496
    %v555 = vpack.c.b16 %v499, %v497
    %v556 = vpack.c.b16 %v502, %v500
    %v557 = vpack.c.b16 %v503, %v501
    %v558 = vpack.c.b16 %v506, %v504
    %v559 = vpack.c.b16 %v507, %v505
    %v560 = vpack.c.b16 %v510, %v508
    %v561 = vpack.c.b16 %v511, %v509
    %v562 = vpack.c.b16 %v514, %v512
    %v563 = vpack.c.b16 %v515, %v513
    %v564 = vpack.c.b16 %v518, %v516
    %v565 = vpack.c.b16 %v519, %v517
    %v566 = vpack.c.b16 %v522, %v520
    %v567 = vpack.c.b16 %v523, %v521
    %v568 = vpack.c.b16 %v526, %v524
    %v569 = vpack.c.b16 %v527, %v525
    %v570 = vpack.c.b16 %v530, %v528
    %v571 = vpack.c.b16 %v531, %v529
    %v572 = vpack.c.b16 %v534, %v532
    %v573 = vpack.c.b16 %v535, %v533
    %v574 = vpack.c.b16 %v538, %v536
    %v575 = vpack.c.b16 %v539, %v537
    %v576 = vpack.c.b16 %v542, %v540
    %v577 = vpack.c.b16 %v543, %v541
    %v578 = vpack.c.b16 %v546, %v544
    %v579 = vpack.c.b16 %v547, %v545
    %612 = vmatprep.subr.bf16.mxu0 %v563
    %613 = vmatpush1.bf16.msra.mxu0 %v562
    %614 = vmatprep.subr.bf16.mxu0 %v561
    %615 = vmatpush1.bf16.msra.mxu0 %v560
    %616 = vmatprep.subr.bf16.mxu0 %v559
    %617 = vmatpush1.bf16.msra.mxu0 %v558
    %618 = vmatprep.subr.bf16.mxu0 %v557
    %619 = vmatpush1.bf16.msra.mxu0 %v556
    %620 = vmatprep.subr.bf16.mxu0 %v555
    %621 = vmatpush1.bf16.msra.mxu0 %v554
    %622 = vmatprep.subr.bf16.mxu0 %v553
    %623 = vmatpush1.bf16.msra.mxu0 %v552
    %624 = vmatprep.subr.bf16.mxu0 %v551
    %625 = vmatpush1.bf16.msra.mxu0 %v550
    %626 = vmatprep.subr.bf16.mxu0 %v549
    %627 = vmatpush1.bf16.msra.mxu0 %v548
    %628 = vmatprep.subr.bf16.mxu0 %v579
    %629 = vmatpush2.bf16.msra.mxu0 %v578
    %630 = vmatprep.subr.bf16.mxu0 %v577
    %631 = vmatpush2.bf16.msra.mxu0 %v576
    %632 = vmatprep.subr.bf16.mxu0 %v575
    %633 = vmatpush2.bf16.msra.mxu0 %v574
    %634 = vmatprep.subr.bf16.mxu0 %v573
    %635 = vmatpush2.bf16.msra.mxu0 %v572
    %636 = vmatprep.subr.bf16.mxu0 %v571
    %637 = vmatpush2.bf16.msra.mxu0 %v570
    %638 = vmatprep.subr.bf16.mxu0 %v569
    %639 = vmatpush2.bf16.msra.mxu0 %v568
    %640 = vmatprep.subr.bf16.mxu0 %v567
    %641 = vmatpush2.bf16.msra.mxu0 %v566
    %642 = vmatprep.subr.bf16.mxu0 %v565
    %643 = vmatpush2.bf16.msra.mxu0 %v564
    %644 = vmatprep.mubr.bf16.mxu0 %v439
    %645 = vmatmul.mubr.bf16.gmra.mxu0 %v438
    %v646 = vpop.f32.mrf.mxu0
    %v647 = vadd.f32 %v445, %v646
    %v648 = vpop.f32.mrf.mxu0
    %v649 = vadd.f32 %v449, %v648
    %v650 = vpop.f32.mrf.mxu0
    %v651 = vadd.f32 %v445, %v650
    %v652 = vpop.f32.mrf.mxu0
    %v653 = vadd.f32 %v449, %v652
    %654 = vdwg.mxu0
    %v655 = vmax.f32 %v647, 0.0
    %v656 = vmax.f32 %v649, 0.0
    %v657 = vmax.f32 %v651, 0.0
    %v658 = vmax.f32 %v653, 0.0
    %v659 = vld [vmem:[#allocation13] sm:$0xf]
    %v660 = vld [vmem:[#allocation13 + $0x4] sm:$0xf]
    %v661 = vld [vmem:[#allocation13 + $0x8] sm:$0xf]
    %v662 = vld [vmem:[#allocation13 + $0xc] sm:$0xf]
    %v663 = vld [vmem:[#allocation13 + $0x10] sm:$0xf]
    %v664 = vld [vmem:[#allocation13 + $0x14] sm:$0xf]
    %v665 = vld [vmem:[#allocation13 + $0x18] sm:$0xf]
    %v666 = vld [vmem:[#allocation13 + $0x1c] sm:$0xf]
    %v667 = vld [vmem:[#allocation13 + $0x20] sm:$0xf]
    %v668 = vld [vmem:[#allocation13 + $0x24] sm:$0xf]
    %v669 = vld [vmem:[#allocation13 + $0x28] sm:$0xf]
    %v670 = vld [vmem:[#allocation13 + $0x2c] sm:$0xf]
    %v671 = vld [vmem:[#allocation13 + $0x30] sm:$0xf]
    %v672 = vld [vmem:[#allocation13 + $0x34] sm:$0xf]
    %v673 = vld [vmem:[#allocation13 + $0x38] sm:$0xf]
    %v674 = vld [vmem:[#allocation13 + $0x3c] sm:$0xf]
    %v675 = vld [vmem:[#allocation13 + $0x40] sm:$0xf]
    %v676 = vld [vmem:[#allocation13 + $0x44] sm:$0xf]
    %v677 = vld [vmem:[#allocation13 + $0x48] sm:$0xf]
    %v678 = vld [vmem:[#allocation13 + $0x4c] sm:$0xf]
    %v679 = vld [vmem:[#allocation13 + $0x50] sm:$0xf]
    %v680 = vld [vmem:[#allocation13 + $0x54] sm:$0xf]
    %v681 = vld [vmem:[#allocation13 + $0x58] sm:$0xf]
    %v682 = vld [vmem:[#allocation13 + $0x5c] sm:$0xf]
    %v683 = vld [vmem:[#allocation13 + $0x60] sm:$0xf]
    %v684 = vld [vmem:[#allocation13 + $0x64] sm:$0xf]
    %v685 = vld [vmem:[#allocation13 + $0x68] sm:$0xf]
    %v686 = vld [vmem:[#allocation13 + $0x6c] sm:$0xf]
    %v687 = vld [vmem:[#allocation13 + $0x70] sm:$0xf]
    %v688 = vld [vmem:[#allocation13 + $0x74] sm:$0xf]
    %v689 = vld [vmem:[#allocation13 + $0x78] sm:$0xf]
    %v690 = vld [vmem:[#allocation13 + $0x7c] sm:$0xf]
    %v691 = vpack.c.bf16 %v657, %v655
    %v692 = vpack.c.bf16 %v658, %v656
    %v693 = vld [vmem:[#allocation14] sm:$0x1]
    %v695 = vlaneseq
    %v696 = vshrl.u32 %v695, 7
    %v697 = vsub.s32 0, %v696
    %v698 = vrot.slane %v693, %v697
    %v732 = vunpack.c.l.b16 %v659
    %v733 = vunpack.c.l.b16 %v660
    %v734 = vunpack.c.l.b16 %v661
    %v735 = vunpack.c.l.b16 %v662
    %v736 = vunpack.c.l.b16 %v663
    %v737 = vunpack.c.l.b16 %v664
    %v738 = vunpack.c.l.b16 %v665
    %v739 = vunpack.c.l.b16 %v666
    %v740 = vunpack.c.l.b16 %v667
    %v741 = vunpack.c.l.b16 %v668
    %v742 = vunpack.c.l.b16 %v669
    %v743 = vunpack.c.l.b16 %v670
    %v744 = vunpack.c.l.b16 %v671
    %v745 = vunpack.c.l.b16 %v672
    %v746 = vunpack.c.l.b16 %v673
    %v747 = vunpack.c.l.b16 %v674
    %v748 = vunpack.c.l.b16 %v675
    %v749 = vunpack.c.l.b16 %v676
    %v750 = vunpack.c.l.b16 %v677
    %v751 = vunpack.c.l.b16 %v678
    %v752 = vunpack.c.l.b16 %v679
    %v753 = vunpack.c.l.b16 %v680
    %v754 = vunpack.c.l.b16 %v681
    %v755 = vunpack.c.l.b16 %v682
    %v756 = vunpack.c.l.b16 %v683
    %v757 = vunpack.c.l.b16 %v684
    %v758 = vunpack.c.l.b16 %v685
    %v759 = vunpack.c.l.b16 %v686
    %v760 = vunpack.c.l.b16 %v687
    %v761 = vunpack.c.l.b16 %v688
    %v762 = vunpack.c.l.b16 %v689
    %v763 = vunpack.c.l.b16 %v690
    %v764 = vpack.c.b16 %v733, %v732
    %v765 = vpack.c.b16 %v735, %v734
    %v766 = vpack.c.b16 %v737, %v736
    %v767 = vpack.c.b16 %v739, %v738
    %v768 = vpack.c.b16 %v741, %v740
    %v769 = vpack.c.b16 %v743, %v742
    %v770 = vpack.c.b16 %v745, %v744
    %v771 = vpack.c.b16 %v747, %v746
    %v772 = vpack.c.b16 %v749, %v748
    %v773 = vpack.c.b16 %v751, %v750
    %v774 = vpack.c.b16 %v753, %v752
    %v775 = vpack.c.b16 %v755, %v754
    %v776 = vpack.c.b16 %v757, %v756
    %v777 = vpack.c.b16 %v759, %v758
    %v778 = vpack.c.b16 %v761, %v760
    %v779 = vpack.c.b16 %v763, %v762
    %796 = vmatprep.subr.bf16.mxu0 0
    %797 = vmatpush1.bf16.msra.mxu0 %v771
    %798 = vmatprep.subr.bf16.mxu0 0
    %799 = vmatpush1.bf16.msra.mxu0 %v770
    %800 = vmatprep.subr.bf16.mxu0 0
    %801 = vmatpush1.bf16.msra.mxu0 %v769
    %802 = vmatprep.subr.bf16.mxu0 0
    %803 = vmatpush1.bf16.msra.mxu0 %v768
    %804 = vmatprep.subr.bf16.mxu0 0
    %805 = vmatpush1.bf16.msra.mxu0 %v767
    %806 = vmatprep.subr.bf16.mxu0 0
    %807 = vmatpush1.bf16.msra.mxu0 %v766
    %808 = vmatprep.subr.bf16.mxu0 0
    %809 = vmatpush1.bf16.msra.mxu0 %v765
    %810 = vmatprep.subr.bf16.mxu0 0
    %811 = vmatpush1.bf16.msra.mxu0 %v764
    %812 = vmatprep.subr.bf16.mxu0 0
    %813 = vmatpush2.bf16.msra.mxu0 %v779
    %814 = vmatprep.subr.bf16.mxu0 0
    %815 = vmatpush2.bf16.msra.mxu0 %v778
    %816 = vmatprep.subr.bf16.mxu0 0
    %817 = vmatpush2.bf16.msra.mxu0 %v777
    %818 = vmatprep.subr.bf16.mxu0 0
    %819 = vmatpush2.bf16.msra.mxu0 %v776
    %820 = vmatprep.subr.bf16.mxu0 0
    %821 = vmatpush2.bf16.msra.mxu0 %v775
    %822 = vmatprep.subr.bf16.mxu0 0
    %823 = vmatpush2.bf16.msra.mxu0 %v774
    %824 = vmatprep.subr.bf16.mxu0 0
    %825 = vmatpush2.bf16.msra.mxu0 %v773
    %826 = vmatprep.subr.bf16.mxu0 0
    %827 = vmatpush2.bf16.msra.mxu0 %v772
    %828 = vmatprep.mubr.bf16.mxu0 %v692
    %829 = vmatmul.mubr.bf16.gmra.mxu0 %v691
    %v830 = vpop.f32.mrf.mxu0
    %v831 = vadd.f32 %v698, %v830
    %v832 = vpop.f32.mrf.mxu0
    %v833 = vpop.f32.mrf.mxu0
    %v834 = vadd.f32 %v698, %v833
    %v835 = vpop.f32.mrf.mxu0
    %836 = vdwg.mxu0
    %v837 = vmax.f32 %v831, 0.0
    %v838 = vmax.f32 %v834, 0.0
    %v839 = vld [vmem:[#allocation9] sm:$0xff]
    %v840 = vadd.f32 %v837, %v839
    %v841 = vadd.f32 %v838, %v839
    %s842 = smul.u32 4, 16
    %s843 = smul.u32 %s842, 3
    %s844 = sshll.u32 %s843, 4
    %845 = dma.done [#allocation8], %s844
    %v846 = vld [vmem:[#allocation2] sm:$0xff]
    %v847 = vld [vmem:[#allocation2 + $0x8] sm:$0xf]
    %v848 = vld [vmem:[#allocation2 + $0xc] sm:$0xff]
    %v849 = vld [vmem:[#allocation2 + $0x14] sm:$0xf]
    %v850 = vld [vmem:[#allocation2 + $0x18] sm:$0xff]
    %v851 = vld [vmem:[#allocation2 + $0x20] sm:$0xf]
    %v852 = vld [vmem:[#allocation2 + $0x24] sm:$0xff]
    %v853 = vld [vmem:[#allocation2 + $0x2c] sm:$0xf]
    %v854 = vld [vmem:[#allocation2 + $0x30] sm:$0xff]
    %v855 = vld [vmem:[#allocation2 + $0x38] sm:$0xf]
    %v856 = vld [vmem:[#allocation2 + $0x3c] sm:$0xff]
    %v857 = vld [vmem:[#allocation2 + $0x44] sm:$0xf]
    %v858 = vld [vmem:[#allocation2 + $0x48] sm:$0xff]
    %v859 = vld [vmem:[#allocation2 + $0x50] sm:$0xf]
    %v860 = vld [vmem:[#allocation2 + $0x54] sm:$0xff]
    %v861 = vld [vmem:[#allocation2 + $0x5c] sm:$0xf]
    %v862 = vld [vmem:[#allocation2 + $0x60] sm:$0xff]
    %v863 = vld [vmem:[#allocation2 + $0x68] sm:$0xf]
    %v864 = vld [vmem:[#allocation2 + $0x6c] sm:$0xff]
    %v865 = vld [vmem:[#allocation2 + $0x74] sm:$0xf]
    %v866 = vld [vmem:[#allocation2 + $0x78] sm:$0xff]
    %v867 = vld [vmem:[#allocation2 + $0x80] sm:$0xf]
    %v868 = vld [vmem:[#allocation2 + $0x84] sm:$0xff]
    %v869 = vld [vmem:[#allocation2 + $0x8c] sm:$0xf]
    %v870 = vld [vmem:[#allocation2 + $0x90] sm:$0xff]
    %v871 = vld [vmem:[#allocation2 + $0x98] sm:$0xf]
    %v872 = vld [vmem:[#allocation2 + $0x9c] sm:$0xff]
    %v873 = vld [vmem:[#allocation2 + $0xa4] sm:$0xf]
    %v874 = vld [vmem:[#allocation2 + $0xa8] sm:$0xff]
    %v875 = vld [vmem:[#allocation2 + $0xb0] sm:$0xf]
    %v876 = vld [vmem:[#allocation2 + $0xb4] sm:$0xff]
    %v877 = vld [vmem:[#allocation2 + $0xbc] sm:$0xf]
    %v878 = vpack.c.bf16 %v841, %v840
    %v879 = vld [vmem:[#allocation16] sm:$0x7]
    %v881 = vlaneseq
    %v882 = vshrl.u32 %v881, 7
    %v883 = vsub.s32 0, %v882
    %v884 = vrot.slane %v879, %v883
    %v885 = vlaneseq
    %v886 = vshrl.u32 %v885, 7
    %v887 = vsub.s32 1, %v886
    %v888 = vrot.slane %v879, %v887
    %v889 = vlaneseq
    %v890 = vshrl.u32 %v889, 7
    %v891 = vsub.s32 2, %v890
    %v892 = vrot.slane %v879, %v891
    %v928 = vunpack.c.l.b16 %v846
    %v929 = vunpack.c.h.b16 %v846
    %v930 = vunpack.c.l.b16 %v847
    %v931 = vunpack.c.l.b16 %v848
    %v932 = vunpack.c.h.b16 %v848
    %v933 = vunpack.c.l.b16 %v849
    %v934 = vunpack.c.l.b16 %v850
    %v935 = vunpack.c.h.b16 %v850
    %v936 = vunpack.c.l.b16 %v851
    %v937 = vunpack.c.l.b16 %v852
    %v938 = vunpack.c.h.b16 %v852
    %v939 = vunpack.c.l.b16 %v853
    %v940 = vunpack.c.l.b16 %v854
    %v941 = vunpack.c.h.b16 %v854
    %v942 = vunpack.c.l.b16 %v855
    %v943 = vunpack.c.l.b16 %v856
    %v944 = vunpack.c.h.b16 %v856
    %v945 = vunpack.c.l.b16 %v857
    %v946 = vunpack.c.l.b16 %v858
    %v947 = vunpack.c.h.b16 %v858
    %v948 = vunpack.c.l.b16 %v859
    %v949 = vunpack.c.l.b16 %v860
    %v950 = vunpack.c.h.b16 %v860
    %v951 = vunpack.c.l.b16 %v861
    %v952 = vunpack.c.l.b16 %v862
    %v953 = vunpack.c.h.b16 %v862
    %v954 = vunpack.c.l.b16 %v863
    %v955 = vunpack.c.l.b16 %v864
    %v956 = vunpack.c.h.b16 %v864
    %v957 = vunpack.c.l.b16 %v865
    %v958 = vunpack.c.l.b16 %v866
    %v959 = vunpack.c.h.b16 %v866
    %v960 = vunpack.c.l.b16 %v867
    %v961 = vunpack.c.l.b16 %v868
    %v962 = vunpack.c.h.b16 %v868
    %v963 = vunpack.c.l.b16 %v869
    %v964 = vunpack.c.l.b16 %v870
    %v965 = vunpack.c.h.b16 %v870
    %v966 = vunpack.c.l.b16 %v871
    %v967 = vunpack.c.l.b16 %v872
    %v968 = vunpack.c.h.b16 %v872
    %v969 = vunpack.c.l.b16 %v873
    %v970 = vunpack.c.l.b16 %v874
    %v971 = vunpack.c.h.b16 %v874
    %v972 = vunpack.c.l.b16 %v875
    %v973 = vunpack.c.l.b16 %v876
    %v974 = vunpack.c.h.b16 %v876
    %v975 = vunpack.c.l.b16 %v877
    %v976 = vpack.c.b16 %v931, %v928
    %v977 = vpack.c.b16 %v932, %v929
    %v978 = vpack.c.b16 %v933, %v930
    %v979 = vpack.c.b16 %v937, %v934
    %v980 = vpack.c.b16 %v938, %v935
    %v981 = vpack.c.b16 %v939, %v936
    %v982 = vpack.c.b16 %v943, %v940
    %v983 = vpack.c.b16 %v944, %v941
    %v984 = vpack.c.b16 %v945, %v942
    %v985 = vpack.c.b16 %v949, %v946
    %v986 = vpack.c.b16 %v950, %v947
    %v987 = vpack.c.b16 %v951, %v948
    %v988 = vpack.c.b16 %v955, %v952
    %v989 = vpack.c.b16 %v956, %v953
    %v990 = vpack.c.b16 %v957, %v954
    %v991 = vpack.c.b16 %v961, %v958
    %v992 = vpack.c.b16 %v962, %v959
    %v993 = vpack.c.b16 %v963, %v960
    %v994 = vpack.c.b16 %v967, %v964
    %v995 = vpack.c.b16 %v968, %v965
    %v996 = vpack.c.b16 %v969, %v966
    %v997 = vpack.c.b16 %v973, %v970
    %v998 = vpack.c.b16 %v974, %v971
    %v999 = vpack.c.b16 %v975, %v972
    %1024 = vmatprep.subr.bf16.mxu0 %v998
    %1025 = vmatpush1.bf16.msra.mxu0 %v997
    %1026 = vmatprep.subr.bf16.mxu0 %v995
    %1027 = vmatpush1.bf16.msra.mxu0 %v994
    %1028 = vmatprep.subr.bf16.mxu0 %v992
    %1029 = vmatpush1.bf16.msra.mxu0 %v991
    %1030 = vmatprep.subr.bf16.mxu0 %v989
    %1031 = vmatpush1.bf16.msra.mxu0 %v988
    %1032 = vmatprep.subr.bf16.mxu0 %v986
    %1033 = vmatpush1.bf16.msra.mxu0 %v985
    %1034 = vmatprep.subr.bf16.mxu0 %v983
    %1035 = vmatpush1.bf16.msra.mxu0 %v982
    %1036 = vmatprep.subr.bf16.mxu0 %v980
    %1037 = vmatpush1.bf16.msra.mxu0 %v979
    %1038 = vmatprep.subr.bf16.mxu0 %v977
    %1039 = vmatpush1.bf16.msra.mxu0 %v976
    %1040 = vmatprep.subr.bf16.mxu0 0
    %1041 = vmatpush2.bf16.msra.mxu0 0
    %1042 = vmatprep.subr.bf16.mxu0 0
    %1043 = vmatpush2.bf16.msra.mxu0 0
    %1044 = vmatprep.subr.bf16.mxu0 0
    %1045 = vmatpush2.bf16.msra.mxu0 0
    %1046 = vmatprep.subr.bf16.mxu0 0
    %1047 = vmatpush2.bf16.msra.mxu0 0
    %1048 = vmatprep.subr.bf16.mxu0 0
    %1049 = vmatpush2.bf16.msra.mxu0 0
    %1050 = vmatprep.subr.bf16.mxu0 0
    %1051 = vmatpush2.bf16.msra.mxu0 0
    %1052 = vmatprep.subr.bf16.mxu0 0
    %1053 = vmatpush2.bf16.msra.mxu0 0
    %1054 = vmatprep.subr.bf16.mxu0 0
    %1055 = vmatpush2.bf16.msra.mxu0 0
    %1056 = vmatprep.mubr.bf16.mxu0 0
    %1057 = vmatmul.mubr.bf16.gmra.mxu0 %v878
    %v1058 = vpop.f32.mrf.mxu0
    %v1059 = vadd.f32 %v884, %v1058
    %v1060 = vpop.f32.mrf.mxu0
    %v1061 = vadd.f32 %v888, %v1060
    %v1062 = vpop.f32.mrf.mxu0
    %v1063 = vadd.f32 %v884, %v1062
    %v1064 = vpop.f32.mrf.mxu0
    %v1065 = vadd.f32 %v888, %v1064
    %1066 = vdwg.mxu0
    %1067 = vmatprep.subr.bf16.mxu0 0
    %1068 = vmatpush1.bf16.msra.mxu0 %v999
    %1069 = vmatprep.subr.bf16.mxu0 0
    %1070 = vmatpush1.bf16.msra.mxu0 %v996
    %1071 = vmatprep.subr.bf16.mxu0 0
    %1072 = vmatpush1.bf16.msra.mxu0 %v993
    %1073 = vmatprep.subr.bf16.mxu0 0
    %1074 = vmatpush1.bf16.msra.mxu0 %v990
    %1075 = vmatprep.subr.bf16.mxu0 0
    %1076 = vmatpush1.bf16.msra.mxu0 %v987
    %1077 = vmatprep.subr.bf16.mxu0 0
    %1078 = vmatpush1.bf16.msra.mxu0 %v984
    %1079 = vmatprep.subr.bf16.mxu0 0
    %1080 = vmatpush1.bf16.msra.mxu0 %v981
    %1081 = vmatprep.subr.bf16.mxu0 0
    %1082 = vmatpush1.bf16.msra.mxu0 %v978
    %1083 = vmatprep.subr.bf16.mxu0 0
    %1084 = vmatpush2.bf16.msra.mxu0 0
    %1085 = vmatprep.subr.bf16.mxu0 0
    %1086 = vmatpush2.bf16.msra.mxu0 0
    %1087 = vmatprep.subr.bf16.mxu0 0
    %1088 = vmatpush2.bf16.msra.mxu0 0
    %1089 = vmatprep.subr.bf16.mxu0 0
    %1090 = vmatpush2.bf16.msra.mxu0 0
    %1091 = vmatprep.subr.bf16.mxu0 0
    %1092 = vmatpush2.bf16.msra.mxu0 0
    %1093 = vmatprep.subr.bf16.mxu0 0
    %1094 = vmatpush2.bf16.msra.mxu0 0
    %1095 = vmatprep.subr.bf16.mxu0 0
    %1096 = vmatpush2.bf16.msra.mxu0 0
    %1097 = vmatprep.subr.bf16.mxu0 0
    %1098 = vmatpush2.bf16.msra.mxu0 0
    %1099 = vmatprep.mubr.bf16.mxu0 0
    %1100 = vmatmul.mubr.bf16.gmra.mxu0 %v878
    %v1101 = vpop.f32.mrf.mxu0
    %v1102 = vadd.f32 %v892, %v1101
    %v1103 = vpop.f32.mrf.mxu0
    %v1104 = vpop.f32.mrf.mxu0
    %v1105 = vadd.f32 %v892, %v1104
    %v1106 = vpop.f32.mrf.mxu0
    %1107 = vdwg.mxu0
    %1109 = vrot.lane.b32.xlu0 %v1059, 112
    %v1110 = vpop.permute.xlu0 %1109
    %1112 = vrot.lane.b32.xlu0 %v1059, 96
    %v1113 = vpop.permute.xlu0 %1112
    %1115 = vrot.lane.b32.xlu0 %v1059, 80
    %v1116 = vpop.permute.xlu0 %1115
    %1118 = vrot.lane.b32.xlu0 %v1059, 64
    %v1119 = vpop.permute.xlu0 %1118
    %1121 = vrot.lane.b32.xlu0 %v1059, 48
    %v1122 = vpop.permute.xlu0 %1121
    %1124 = vrot.lane.b32.xlu0 %v1059, 32
    %v1125 = vpop.permute.xlu0 %1124
    %1127 = vrot.lane.b32.xlu0 %v1059, 16
    %v1128 = vpop.permute.xlu0 %1127
    %1131 = vrot.lane.b32.xlu0 %v1063, 112
    %v1132 = vpop.permute.xlu0 %1131
    %1134 = vrot.lane.b32.xlu0 %v1063, 96
    %v1135 = vpop.permute.xlu0 %1134
    %1137 = vrot.lane.b32.xlu0 %v1063, 80
    %v1138 = vpop.permute.xlu0 %1137
    %1140 = vrot.lane.b32.xlu0 %v1063, 64
    %v1141 = vpop.permute.xlu0 %1140
    %1143 = vrot.lane.b32.xlu0 %v1063, 48
    %v1144 = vpop.permute.xlu0 %1143
    %1146 = vrot.lane.b32.xlu0 %v1063, 32
    %v1147 = vpop.permute.xlu0 %1146
    %1149 = vrot.lane.b32.xlu0 %v1063, 16
    %v1150 = vpop.permute.xlu0 %1149
    %1153 = vrot.lane.b32.xlu0 %v1061, 112
    %v1154 = vpop.permute.xlu0 %1153
    %1156 = vrot.lane.b32.xlu0 %v1061, 96
    %v1157 = vpop.permute.xlu0 %1156
    %1159 = vrot.lane.b32.xlu0 %v1061, 80
    %v1160 = vpop.permute.xlu0 %1159
    %1162 = vrot.lane.b32.xlu0 %v1061, 64
    %v1163 = vpop.permute.xlu0 %1162
    %1165 = vrot.lane.b32.xlu0 %v1061, 48
    %v1166 = vpop.permute.xlu0 %1165
    %1168 = vrot.lane.b32.xlu0 %v1061, 32
    %v1169 = vpop.permute.xlu0 %1168
    %1171 = vrot.lane.b32.xlu0 %v1061, 16
    %v1172 = vpop.permute.xlu0 %1171
    %1175 = vrot.lane.b32.xlu0 %v1065, 112
    %v1176 = vpop.permute.xlu0 %1175
    %1178 = vrot.lane.b32.xlu0 %v1065, 96
    %v1179 = vpop.permute.xlu0 %1178
    %1181 = vrot.lane.b32.xlu0 %v1065, 80
    %v1182 = vpop.permute.xlu0 %1181
    %1184 = vrot.lane.b32.xlu0 %v1065, 64
    %v1185 = vpop.permute.xlu0 %1184
    %1187 = vrot.lane.b32.xlu0 %v1065, 48
    %v1188 = vpop.permute.xlu0 %1187
    %1190 = vrot.lane.b32.xlu0 %v1065, 32
    %v1191 = vpop.permute.xlu0 %1190
    %1193 = vrot.lane.b32.xlu0 %v1065, 16
    %v1194 = vpop.permute.xlu0 %1193
    %1197 = vrot.lane.b32.xlu0 %v1102, 112
    %v1198 = vpop.permute.xlu0 %1197
    %1200 = vrot.lane.b32.xlu0 %v1102, 96
    %v1201 = vpop.permute.xlu0 %1200
    %1203 = vrot.lane.b32.xlu0 %v1102, 80
    %v1204 = vpop.permute.xlu0 %1203
    %1206 = vrot.lane.b32.xlu0 %v1102, 64
    %v1207 = vpop.permute.xlu0 %1206
    %1209 = vrot.lane.b32.xlu0 %v1102, 48
    %v1210 = vpop.permute.xlu0 %1209
    %1212 = vrot.lane.b32.xlu0 %v1102, 32
    %v1213 = vpop.permute.xlu0 %1212
    %1215 = vrot.lane.b32.xlu0 %v1102, 16
    %v1216 = vpop.permute.xlu0 %1215
    %1219 = vrot.lane.b32.xlu0 %v1105, 112
    %v1220 = vpop.permute.xlu0 %1219
    %1222 = vrot.lane.b32.xlu0 %v1105, 96
    %v1223 = vpop.permute.xlu0 %1222
    %1225 = vrot.lane.b32.xlu0 %v1105, 80
    %v1226 = vpop.permute.xlu0 %1225
    %1228 = vrot.lane.b32.xlu0 %v1105, 64
    %v1229 = vpop.permute.xlu0 %1228
    %1231 = vrot.lane.b32.xlu0 %v1105, 48
    %v1232 = vpop.permute.xlu0 %1231
    %1234 = vrot.lane.b32.xlu0 %v1105, 32
    %v1235 = vpop.permute.xlu0 %1234
    %1237 = vrot.lane.b32.xlu0 %v1105, 16
    %v1238 = vpop.permute.xlu0 %1237
    %v1240 = vpack.c.bf16 %v1059, %v1059
    %v1241 = vpack.c.bf16 %v1110, %v1110
    %v1242 = vpack.c.bf16 %v1113, %v1113
    %v1243 = vpack.c.bf16 %v1116, %v1116
    %v1244 = vpack.c.bf16 %v1119, %v1119
    %v1245 = vpack.c.bf16 %v1122, %v1122
    %v1246 = vpack.c.bf16 %v1125, %v1125
    %v1247 = vpack.c.bf16 %v1128, %v1128
    %v1248 = vpack.c.bf16 %v1063, %v1063
    %v1249 = vpack.c.bf16 %v1132, %v1132
    %v1250 = vpack.c.bf16 %v1135, %v1135
    %v1251 = vpack.c.bf16 %v1138, %v1138
    %v1252 = vpack.c.bf16 %v1141, %v1141
    %v1253 = vpack.c.bf16 %v1144, %v1144
    %v1254 = vpack.c.bf16 %v1147, %v1147
    %v1255 = vpack.c.bf16 %v1150, %v1150
    %v1256 = vpack.c.bf16 %v1061, %v1061
    %v1257 = vpack.c.bf16 %v1154, %v1154
    %v1258 = vpack.c.bf16 %v1157, %v1157
    %v1259 = vpack.c.bf16 %v1160, %v1160
    %v1260 = vpack.c.bf16 %v1163, %v1163
    %v1261 = vpack.c.bf16 %v1166, %v1166
    %v1262 = vpack.c.bf16 %v1169, %v1169
    %v1263 = vpack.c.bf16 %v1172, %v1172
    %v1264 = vpack.c.bf16 %v1065, %v1065
    %v1265 = vpack.c.bf16 %v1176, %v1176
    %v1266 = vpack.c.bf16 %v1179, %v1179
    %v1267 = vpack.c.bf16 %v1182, %v1182
    %v1268 = vpack.c.bf16 %v1185, %v1185
    %v1269 = vpack.c.bf16 %v1188, %v1188
    %v1270 = vpack.c.bf16 %v1191, %v1191
    %v1271 = vpack.c.bf16 %v1194, %v1194
    %vm1272 = vcmask 130048
    %v1274 = vsel %vm1272, %v1240, 0
    %v1277 = vsel %vm1272, %v1256, 0
    %1279 = vmatprep.subr.bf16.mxu0 0
    %1280 = vmatpush1.bf16.xpose.msra.mxu0 0
    %1281 = vmatprep.subr.bf16.mxu0 0
    %1282 = vmatpush1.bf16.xpose.msra.mxu0 0
    %1283 = vmatprep.subr.bf16.mxu0 0
    %1284 = vmatpush1.bf16.xpose.msra.mxu0 0
    %1285 = vmatprep.subr.bf16.mxu0 0
    %1286 = vmatpush1.bf16.xpose.msra.mxu0 0
    %1287 = vmatprep.subr.bf16.mxu0 0
    %1288 = vmatpush1.bf16.xpose.msra.mxu0 0
    %1289 = vmatprep.subr.bf16.mxu0 0
    %1290 = vmatpush1.bf16.xpose.msra.mxu0 0
    %1291 = vmatprep.subr.bf16.mxu0 0
    %1292 = vmatpush1.bf16.xpose.msra.mxu0 0
    %1293 = vmatprep.subr.bf16.mxu0 0
    %1294 = vmatpush1.bf16.xpose.msra.mxu0 %v1277
    %1295 = vmatprep.subr.bf16.mxu0 0
    %1296 = vmatpush2.bf16.xpose.msra.mxu0 0
    %1297 = vmatprep.subr.bf16.mxu0 0
    %1298 = vmatpush2.bf16.xpose.msra.mxu0 0
    %1299 = vmatprep.subr.bf16.mxu0 0
    %1300 = vmatpush2.bf16.xpose.msra.mxu0 0
    %1301 = vmatprep.subr.bf16.mxu0 0
    %1302 = vmatpush2.bf16.xpose.msra.mxu0 0
    %1303 = vmatprep.subr.bf16.mxu0 0
    %1304 = vmatpush2.bf16.xpose.msra.mxu0 0
    %1305 = vmatprep.subr.bf16.mxu0 0
    %1306 = vmatpush2.bf16.xpose.msra.mxu0 0
    %1307 = vmatprep.subr.bf16.mxu0 0
    %1308 = vmatpush2.bf16.xpose.msra.mxu0 0
    %1309 = vmatprep.subr.bf16.mxu0 0
    %1310 = vmatpush2.bf16.xpose.msra.mxu0 0
    %1311 = vmatprep.mubr.bf16.mxu0 0
    %1312 = vmatmul.mubr.bf16.gmra.mxu0 %v1274
    %v1313 = vpop.f32.mrf.mxu0
    %v1314 = vadd.f32 0.0, %v1313
    %v1315 = vpop.f32.mrf.mxu0
    %v1316 = vpop.f32.mrf.mxu0
    %v1317 = vpop.f32.mrf.mxu0
    %1318 = vdwg.mxu0
    %v1320 = vsel %vm1272, %v1241, 0
    %v1323 = vsel %vm1272, %v1257, 0
    %1325 = vmatprep.subr.bf16.mxu0 0
    %1326 = vmatpush1.bf16.xpose.msra.mxu0 0
    %1327 = vmatprep.subr.bf16.mxu0 0
    %1328 = vmatpush1.bf16.xpose.msra.mxu0 0
    %1329 = vmatprep.subr.bf16.mxu0 0
    %1330 = vmatpush1.bf16.xpose.msra.mxu0 0
    %1331 = vmatprep.subr.bf16.mxu0 0
    %1332 = vmatpush1.bf16.xpose.msra.mxu0 0
    %1333 = vmatprep.subr.bf16.mxu0 0
    %1334 = vmatpush1.bf16.xpose.msra.mxu0 0
    %1335 = vmatprep.subr.bf16.mxu0 0
    %1336 = vmatpush1.bf16.xpose.msra.mxu0 0
    %1337 = vmatprep.subr.bf16.mxu0 0
    %1338 = vmatpush1.bf16.xpose.msra.mxu0 0
    %1339 = vmatprep.subr.bf16.mxu0 0
    %1340 = vmatpush1.bf16.xpose.msra.mxu0 %v1323
    %1341 = vmatprep.subr.bf16.mxu0 0
    %1342 = vmatpush2.bf16.xpose.msra.mxu0 0
    %1343 = vmatprep.subr.bf16.mxu0 0
    %1344 = vmatpush2.bf16.xpose.msra.mxu0 0
    %1345 = vmatprep.subr.bf16.mxu0 0
    %1346 = vmatpush2.bf16.xpose.msra.mxu0 0
    %1347 = vmatprep.subr.bf16.mxu0 0
    %1348 = vmatpush2.bf16.xpose.msra.mxu0 0
    %1349 = vmatprep.subr.bf16.mxu0 0
    %1350 = vmatpush2.bf16.xpose.msra.mxu0 0
    %1351 = vmatprep.subr.bf16.mxu0 0
    %1352 = vmatpush2.bf16.xpose.msra.mxu0 0
    %1353 = vmatprep.subr.bf16.mxu0 0
    %1354 = vmatpush2.bf16.xpose.msra.mxu0 0
    %1355 = vmatprep.subr.bf16.mxu0 0
    %1356 = vmatpush2.bf16.xpose.msra.mxu0 0
    %1357 = vmatprep.mubr.bf16.mxu0 0
    %1358 = vmatmul.mubr.bf16.gmra.mxu0 %v1320
    %v1359 = vpop.f32.mrf.mxu0
    %v1360 = vadd.f32 0.0, %v1359
    %v1361 = vpop.f32.mrf.mxu0
    %v1362 = vpop.f32.mrf.mxu0
    %v1363 = vpop.f32.mrf.mxu0
    %1364 = vdwg.mxu0
    %v1366 = vsel %vm1272, %v1242, 0
    %v1369 = vsel %vm1272, %v1258, 0
    %1371 = vmatprep.subr.bf16.mxu0 0
    %1372 = vmatpush1.bf16.xpose.msra.mxu0 0
    %1373 = vmatprep.subr.bf16.mxu0 0
    %1374 = vmatpush1.bf16.xpose.msra.mxu0 0
    %1375 = vmatprep.subr.bf16.mxu0 0
    %1376 = vmatpush1.bf16.xpose.msra.mxu0 0
    %1377 = vmatprep.subr.bf16.mxu0 0
    %1378 = vmatpush1.bf16.xpose.msra.mxu0 0
    %1379 = vmatprep.subr.bf16.mxu0 0
    %1380 = vmatpush1.bf16.xpose.msra.mxu0 0
    %1381 = vmatprep.subr.bf16.mxu0 0
    %1382 = vmatpush1.bf16.xpose.msra.mxu0 0
    %1383 = vmatprep.subr.bf16.mxu0 0
    %1384 = vmatpush1.bf16.xpose.msra.mxu0 0
    %1385 = vmatprep.subr.bf16.mxu0 0
    %1386 = vmatpush1.bf16.xpose.msra.mxu0 %v1369
    %1387 = vmatprep.subr.bf16.mxu0 0
    %1388 = vmatpush2.bf16.xpose.msra.mxu0 0
    %1389 = vmatprep.subr.bf16.mxu0 0
    %1390 = vmatpush2.bf16.xpose.msra.mxu0 0
    %1391 = vmatprep.subr.bf16.mxu0 0
    %1392 = vmatpush2.bf16.xpose.msra.mxu0 0
    %1393 = vmatprep.subr.bf16.mxu0 0
    %1394 = vmatpush2.bf16.xpose.msra.mxu0 0
    %1395 = vmatprep.subr.bf16.mxu0 0
    %1396 = vmatpush2.bf16.xpose.msra.mxu0 0
    %1397 = vmatprep.subr.bf16.mxu0 0
    %1398 = vmatpush2.bf16.xpose.msra.mxu0 0
    %1399 = vmatprep.subr.bf16.mxu0 0
    %1400 = vmatpush2.bf16.xpose.msra.mxu0 0
    %1401 = vmatprep.subr.bf16.mxu0 0
    %1402 = vmatpush2.bf16.xpose.msra.mxu0 0
    %1403 = vmatprep.mubr.bf16.mxu0 0
    %1404 = vmatmul.mubr.bf16.gmra.mxu0 %v1366
    %v1405 = vpop.f32.mrf.mxu0
    %v1406 = vadd.f32 0.0, %v1405
    %v1407 = vpop.f32.mrf.mxu0
    %v1408 = vpop.f32.mrf.mxu0
    %v1409 = vpop.f32.mrf.mxu0
    %1410 = vdwg.mxu0
    %v1412 = vsel %vm1272, %v1243, 0
    %v1415 = vsel %vm1272, %v1259, 0
    %1417 = vmatprep.subr.bf16.mxu0 0
    %1418 = vmatpush1.bf16.xpose.msra.mxu0 0
    %1419 = vmatprep.subr.bf16.mxu0 0
    %1420 = vmatpush1.bf16.xpose.msra.mxu0 0
    %1421 = vmatprep.subr.bf16.mxu0 0
    %1422 = vmatpush1.bf16.xpose.msra.mxu0 0
    %1423 = vmatprep.subr.bf16.mxu0 0
    %1424 = vmatpush1.bf16.xpose.msra.mxu0 0
    %1425 = vmatprep.subr.bf16.mxu0 0
    %1426 = vmatpush1.bf16.xpose.msra.mxu0 0
    %1427 = vmatprep.subr.bf16.mxu0 0
    %1428 = vmatpush1.bf16.xpose.msra.mxu0 0
    %1429 = vmatprep.subr.bf16.mxu0 0
    %1430 = vmatpush1.bf16.xpose.msra.mxu0 0
    %1431 = vmatprep.subr.bf16.mxu0 0
    %1432 = vmatpush1.bf16.xpose.msra.mxu0 %v1415
    %1433 = vmatprep.subr.bf16.mxu0 0
    %1434 = vmatpush2.bf16.xpose.msra.mxu0 0
    %1435 = vmatprep.subr.bf16.mxu0 0
    %1436 = vmatpush2.bf16.xpose.msra.mxu0 0
    %1437 = vmatprep.subr.bf16.mxu0 0
    %1438 = vmatpush2.bf16.xpose.msra.mxu0 0
    %1439 = vmatprep.subr.bf16.mxu0 0
    %1440 = vmatpush2.bf16.xpose.msra.mxu0 0
    %1441 = vmatprep.subr.bf16.mxu0 0
    %1442 = vmatpush2.bf16.xpose.msra.mxu0 0
    %1443 = vmatprep.subr.bf16.mxu0 0
    %1444 = vmatpush2.bf16.xpose.msra.mxu0 0
    %1445 = vmatprep.subr.bf16.mxu0 0
    %1446 = vmatpush2.bf16.xpose.msra.mxu0 0
    %1447 = vmatprep.subr.bf16.mxu0 0
    %1448 = vmatpush2.bf16.xpose.msra.mxu0 0
    %1449 = vmatprep.mubr.bf16.mxu0 0
    %1450 = vmatmul.mubr.bf16.gmra.mxu0 %v1412
    %v1451 = vpop.f32.mrf.mxu0
    %v1452 = vadd.f32 0.0, %v1451
    %v1453 = vpop.f32.mrf.mxu0
    %v1454 = vpop.f32.mrf.mxu0
    %v1455 = vpop.f32.mrf.mxu0
    %1456 = vdwg.mxu0
    %v1458 = vsel %vm1272, %v1244, 0
    %v1461 = vsel %vm1272, %v1260, 0
    %1463 = vmatprep.subr.bf16.mxu0 0
    %1464 = vmatpush1.bf16.xpose.msra.mxu0 0
    %1465 = vmatprep.subr.bf16.mxu0 0
    %1466 = vmatpush1.bf16.xpose.msra.mxu0 0
    %1467 = vmatprep.subr.bf16.mxu0 0
    %1468 = vmatpush1.bf16.xpose.msra.mxu0 0
    %1469 = vmatprep.subr.bf16.mxu0 0
    %1470 = vmatpush1.bf16.xpose.msra.mxu0 0
    %1471 = vmatprep.subr.bf16.mxu0 0
    %1472 = vmatpush1.bf16.xpose.msra.mxu0 0
    %1473 = vmatprep.subr.bf16.mxu0 0
    %1474 = vmatpush1.bf16.xpose.msra.mxu0 0
    %1475 = vmatprep.subr.bf16.mxu0 0
    %1476 = vmatpush1.bf16.xpose.msra.mxu0 0
    %1477 = vmatprep.subr.bf16.mxu0 0
    %1478 = vmatpush1.bf16.xpose.msra.mxu0 %v1461
    %1479 = vmatprep.subr.bf16.mxu0 0
    %1480 = vmatpush2.bf16.xpose.msra.mxu0 0
    %1481 = vmatprep.subr.bf16.mxu0 0
    %1482 = vmatpush2.bf16.xpose.msra.mxu0 0
    %1483 = vmatprep.subr.bf16.mxu0 0
    %1484 = vmatpush2.bf16.xpose.msra.mxu0 0
    %1485 = vmatprep.subr.bf16.mxu0 0
    %1486 = vmatpush2.bf16.xpose.msra.mxu0 0
    %1487 = vmatprep.subr.bf16.mxu0 0
    %1488 = vmatpush2.bf16.xpose.msra.mxu0 0
    %1489 = vmatprep.subr.bf16.mxu0 0
    %1490 = vmatpush2.bf16.xpose.msra.mxu0 0
    %1491 = vmatprep.subr.bf16.mxu0 0
    %1492 = vmatpush2.bf16.xpose.msra.mxu0 0
    %1493 = vmatprep.subr.bf16.mxu0 0
    %1494 = vmatpush2.bf16.xpose.msra.mxu0 0
    %1495 = vmatprep.mubr.bf16.mxu0 0
    %1496 = vmatmul.mubr.bf16.gmra.mxu0 %v1458
    %v1497 = vpop.f32.mrf.mxu0
    %v1498 = vadd.f32 0.0, %v1497
    %v1499 = vpop.f32.mrf.mxu0
    %v1500 = vpop.f32.mrf.mxu0
    %v1501 = vpop.f32.mrf.mxu0
    %1502 = vdwg.mxu0
    %v1504 = vsel %vm1272, %v1245, 0
    %v1507 = vsel %vm1272, %v1261, 0
    %1509 = vmatprep.subr.bf16.mxu0 0
    %1510 = vmatpush1.bf16.xpose.msra.mxu0 0
    %1511 = vmatprep.subr.bf16.mxu0 0
    %1512 = vmatpush1.bf16.xpose.msra.mxu0 0
    %1513 = vmatprep.subr.bf16.mxu0 0
    %1514 = vmatpush1.bf16.xpose.msra.mxu0 0
    %1515 = vmatprep.subr.bf16.mxu0 0
    %1516 = vmatpush1.bf16.xpose.msra.mxu0 0
    %1517 = vmatprep.subr.bf16.mxu0 0
    %1518 = vmatpush1.bf16.xpose.msra.mxu0 0
    %1519 = vmatprep.subr.bf16.mxu0 0
    %1520 = vmatpush1.bf16.xpose.msra.mxu0 0
    %1521 = vmatprep.subr.bf16.mxu0 0
    %1522 = vmatpush1.bf16.xpose.msra.mxu0 0
    %1523 = vmatprep.subr.bf16.mxu0 0
    %1524 = vmatpush1.bf16.xpose.msra.mxu0 %v1507
    %1525 = vmatprep.subr.bf16.mxu0 0
    %1526 = vmatpush2.bf16.xpose.msra.mxu0 0
    %1527 = vmatprep.subr.bf16.mxu0 0
    %1528 = vmatpush2.bf16.xpose.msra.mxu0 0
    %1529 = vmatprep.subr.bf16.mxu0 0
    %1530 = vmatpush2.bf16.xpose.msra.mxu0 0
    %1531 = vmatprep.subr.bf16.mxu0 0
    %1532 = vmatpush2.bf16.xpose.msra.mxu0 0
    %1533 = vmatprep.subr.bf16.mxu0 0
    %1534 = vmatpush2.bf16.xpose.msra.mxu0 0
    %1535 = vmatprep.subr.bf16.mxu0 0
    %1536 = vmatpush2.bf16.xpose.msra.mxu0 0
    %1537 = vmatprep.subr.bf16.mxu0 0
    %1538 = vmatpush2.bf16.xpose.msra.mxu0 0
    %1539 = vmatprep.subr.bf16.mxu0 0
    %1540 = vmatpush2.bf16.xpose.msra.mxu0 0
    %1541 = vmatprep.mubr.bf16.mxu0 0
    %1542 = vmatmul.mubr.bf16.gmra.mxu0 %v1504
    %v1543 = vpop.f32.mrf.mxu0
    %v1544 = vadd.f32 0.0, %v1543
    %v1545 = vpop.f32.mrf.mxu0
    %v1546 = vpop.f32.mrf.mxu0
    %v1547 = vpop.f32.mrf.mxu0
    %1548 = vdwg.mxu0
    %v1550 = vsel %vm1272, %v1246, 0
    %v1553 = vsel %vm1272, %v1262, 0
    %1555 = vmatprep.subr.bf16.mxu0 0
    %1556 = vmatpush1.bf16.xpose.msra.mxu0 0
    %1557 = vmatprep.subr.bf16.mxu0 0
    %1558 = vmatpush1.bf16.xpose.msra.mxu0 0
    %1559 = vmatprep.subr.bf16.mxu0 0
    %1560 = vmatpush1.bf16.xpose.msra.mxu0 0
    %1561 = vmatprep.subr.bf16.mxu0 0
    %1562 = vmatpush1.bf16.xpose.msra.mxu0 0
    %1563 = vmatprep.subr.bf16.mxu0 0
    %1564 = vmatpush1.bf16.xpose.msra.mxu0 0
    %1565 = vmatprep.subr.bf16.mxu0 0
    %1566 = vmatpush1.bf16.xpose.msra.mxu0 0
    %1567 = vmatprep.subr.bf16.mxu0 0
    %1568 = vmatpush1.bf16.xpose.msra.mxu0 0
    %1569 = vmatprep.subr.bf16.mxu0 0
    %1570 = vmatpush1.bf16.xpose.msra.mxu0 %v1553
    %1571 = vmatprep.subr.bf16.mxu0 0
    %1572 = vmatpush2.bf16.xpose.msra.mxu0 0
    %1573 = vmatprep.subr.bf16.mxu0 0
    %1574 = vmatpush2.bf16.xpose.msra.mxu0 0
    %1575 = vmatprep.subr.bf16.mxu0 0
    %1576 = vmatpush2.bf16.xpose.msra.mxu0 0
    %1577 = vmatprep.subr.bf16.mxu0 0
    %1578 = vmatpush2.bf16.xpose.msra.mxu0 0
    %1579 = vmatprep.subr.bf16.mxu0 0
    %1580 = vmatpush2.bf16.xpose.msra.mxu0 0
    %1581 = vmatprep.subr.bf16.mxu0 0
    %1582 = vmatpush2.bf16.xpose.msra.mxu0 0
    %1583 = vmatprep.subr.bf16.mxu0 0
    %1584 = vmatpush2.bf16.xpose.msra.mxu0 0
    %1585 = vmatprep.subr.bf16.mxu0 0
    %1586 = vmatpush2.bf16.xpose.msra.mxu0 0
    %1587 = vmatprep.mubr.bf16.mxu0 0
    %1588 = vmatmul.mubr.bf16.gmra.mxu0 %v1550
    %v1589 = vpop.f32.mrf.mxu0
    %v1590 = vadd.f32 0.0, %v1589
    %v1591 = vpop.f32.mrf.mxu0
    %v1592 = vpop.f32.mrf.mxu0
    %v1593 = vpop.f32.mrf.mxu0
    %1594 = vdwg.mxu0
    %v1596 = vsel %vm1272, %v1247, 0
    %v1599 = vsel %vm1272, %v1263, 0
    %1601 = vmatprep.subr.bf16.mxu0 0
    %1602 = vmatpush1.bf16.xpose.msra.mxu0 0
    %1603 = vmatprep.subr.bf16.mxu0 0
    %1604 = vmatpush1.bf16.xpose.msra.mxu0 0
    %1605 = vmatprep.subr.bf16.mxu0 0
    %1606 = vmatpush1.bf16.xpose.msra.mxu0 0
    %1607 = vmatprep.subr.bf16.mxu0 0
    %1608 = vmatpush1.bf16.xpose.msra.mxu0 0
    %1609 = vmatprep.subr.bf16.mxu0 0
    %1610 = vmatpush1.bf16.xpose.msra.mxu0 0
    %1611 = vmatprep.subr.bf16.mxu0 0
    %1612 = vmatpush1.bf16.xpose.msra.mxu0 0
    %1613 = vmatprep.subr.bf16.mxu0 0
    %1614 = vmatpush1.bf16.xpose.msra.mxu0 0
    %1615 = vmatprep.subr.bf16.mxu0 0
    %1616 = vmatpush1.bf16.xpose.msra.mxu0 %v1599
    %1617 = vmatprep.subr.bf16.mxu0 0
    %1618 = vmatpush2.bf16.xpose.msra.mxu0 0
    %1619 = vmatprep.subr.bf16.mxu0 0
    %1620 = vmatpush2.bf16.xpose.msra.mxu0 0
    %1621 = vmatprep.subr.bf16.mxu0 0
    %1622 = vmatpush2.bf16.xpose.msra.mxu0 0
    %1623 = vmatprep.subr.bf16.mxu0 0
    %1624 = vmatpush2.bf16.xpose.msra.mxu0 0
    %1625 = vmatprep.subr.bf16.mxu0 0
    %1626 = vmatpush2.bf16.xpose.msra.mxu0 0
    %1627 = vmatprep.subr.bf16.mxu0 0
    %1628 = vmatpush2.bf16.xpose.msra.mxu0 0
    %1629 = vmatprep.subr.bf16.mxu0 0
    %1630 = vmatpush2.bf16.xpose.msra.mxu0 0
    %1631 = vmatprep.subr.bf16.mxu0 0
    %1632 = vmatpush2.bf16.xpose.msra.mxu0 0
    %1633 = vmatprep.mubr.bf16.mxu0 0
    %1634 = vmatmul.mubr.bf16.gmra.mxu0 %v1596
    %v1635 = vpop.f32.mrf.mxu0
    %v1636 = vadd.f32 0.0, %v1635
    %v1637 = vpop.f32.mrf.mxu0
    %v1638 = vpop.f32.mrf.mxu0
    %v1639 = vpop.f32.mrf.mxu0
    %1640 = vdwg.mxu0
    %v1642 = vsel %vm1272, %v1248, 0
    %v1645 = vsel %vm1272, %v1264, 0
    %1647 = vmatprep.subr.bf16.mxu0 0
    %1648 = vmatpush1.bf16.xpose.msra.mxu0 0
    %1649 = vmatprep.subr.bf16.mxu0 0
    %1650 = vmatpush1.bf16.xpose.msra.mxu0 0
    %1651 = vmatprep.subr.bf16.mxu0 0
    %1652 = vmatpush1.bf16.xpose.msra.mxu0 0
    %1653 = vmatprep.subr.bf16.mxu0 0
    %1654 = vmatpush1.bf16.xpose.msra.mxu0 0
    %1655 = vmatprep.subr.bf16.mxu0 0
    %1656 = vmatpush1.bf16.xpose.msra.mxu0 0
    %1657 = vmatprep.subr.bf16.mxu0 0
    %1658 = vmatpush1.bf16.xpose.msra.mxu0 0
    %1659 = vmatprep.subr.bf16.mxu0 0
    %1660 = vmatpush1.bf16.xpose.msra.mxu0 0
    %1661 = vmatprep.subr.bf16.mxu0 0
    %1662 = vmatpush1.bf16.xpose.msra.mxu0 %v1645
    %1663 = vmatprep.subr.bf16.mxu0 0
    %1664 = vmatpush2.bf16.xpose.msra.mxu0 0
    %1665 = vmatprep.subr.bf16.mxu0 0
    %1666 = vmatpush2.bf16.xpose.msra.mxu0 0
    %1667 = vmatprep.subr.bf16.mxu0 0
    %1668 = vmatpush2.bf16.xpose.msra.mxu0 0
    %1669 = vmatprep.subr.bf16.mxu0 0
    %1670 = vmatpush2.bf16.xpose.msra.mxu0 0
    %1671 = vmatprep.subr.bf16.mxu0 0
    %1672 = vmatpush2.bf16.xpose.msra.mxu0 0
    %1673 = vmatprep.subr.bf16.mxu0 0
    %1674 = vmatpush2.bf16.xpose.msra.mxu0 0
    %1675 = vmatprep.subr.bf16.mxu0 0
    %1676 = vmatpush2.bf16.xpose.msra.mxu0 0
    %1677 = vmatprep.subr.bf16.mxu0 0
    %1678 = vmatpush2.bf16.xpose.msra.mxu0 0
    %1679 = vmatprep.mubr.bf16.mxu0 0
    %1680 = vmatmul.mubr.bf16.gmra.mxu0 %v1642
    %v1681 = vpop.f32.mrf.mxu0
    %v1682 = vadd.f32 0.0, %v1681
    %v1683 = vpop.f32.mrf.mxu0
    %v1684 = vpop.f32.mrf.mxu0
    %v1685 = vpop.f32.mrf.mxu0
    %1686 = vdwg.mxu0
    %v1688 = vsel %vm1272, %v1249, 0
    %v1691 = vsel %vm1272, %v1265, 0
    %1693 = vmatprep.subr.bf16.mxu0 0
    %1694 = vmatpush1.bf16.xpose.msra.mxu0 0
    %1695 = vmatprep.subr.bf16.mxu0 0
    %1696 = vmatpush1.bf16.xpose.msra.mxu0 0
    %1697 = vmatprep.subr.bf16.mxu0 0
    %1698 = vmatpush1.bf16.xpose.msra.mxu0 0
    %1699 = vmatprep.subr.bf16.mxu0 0
    %1700 = vmatpush1.bf16.xpose.msra.mxu0 0
    %1701 = vmatprep.subr.bf16.mxu0 0
    %1702 = vmatpush1.bf16.xpose.msra.mxu0 0
    %1703 = vmatprep.subr.bf16.mxu0 0
    %1704 = vmatpush1.bf16.xpose.msra.mxu0 0
    %1705 = vmatprep.subr.bf16.mxu0 0
    %1706 = vmatpush1.bf16.xpose.msra.mxu0 0
    %1707 = vmatprep.subr.bf16.mxu0 0
    %1708 = vmatpush1.bf16.xpose.msra.mxu0 %v1691
    %1709 = vmatprep.subr.bf16.mxu0 0
    %1710 = vmatpush2.bf16.xpose.msra.mxu0 0
    %1711 = vmatprep.subr.bf16.mxu0 0
    %1712 = vmatpush2.bf16.xpose.msra.mxu0 0
    %1713 = vmatprep.subr.bf16.mxu0 0
    %1714 = vmatpush2.bf16.xpose.msra.mxu0 0
    %1715 = vmatprep.subr.bf16.mxu0 0
    %1716 = vmatpush2.bf16.xpose.msra.mxu0 0
    %1717 = vmatprep.subr.bf16.mxu0 0
    %1718 = vmatpush2.bf16.xpose.msra.mxu0 0
    %1719 = vmatprep.subr.bf16.mxu0 0
    %1720 = vmatpush2.bf16.xpose.msra.mxu0 0
    %1721 = vmatprep.subr.bf16.mxu0 0
    %1722 = vmatpush2.bf16.xpose.msra.mxu0 0
    %1723 = vmatprep.subr.bf16.mxu0 0
    %1724 = vmatpush2.bf16.xpose.msra.mxu0 0
    %1725 = vmatprep.mubr.bf16.mxu0 0
    %1726 = vmatmul.mubr.bf16.gmra.mxu0 %v1688
    %v1727 = vpop.f32.mrf.mxu0
    %v1728 = vadd.f32 0.0, %v1727
    %v1729 = vpop.f32.mrf.mxu0
    %v1730 = vpop.f32.mrf.mxu0
    %v1731 = vpop.f32.mrf.mxu0
    %1732 = vdwg.mxu0
    %v1734 = vsel %vm1272, %v1250, 0
    %v1737 = vsel %vm1272, %v1266, 0
    %1739 = vmatprep.subr.bf16.mxu0 0
    %1740 = vmatpush1.bf16.xpose.msra.mxu0 0
    %1741 = vmatprep.subr.bf16.mxu0 0
    %1742 = vmatpush1.bf16.xpose.msra.mxu0 0
    %1743 = vmatprep.subr.bf16.mxu0 0
    %1744 = vmatpush1.bf16.xpose.msra.mxu0 0
    %1745 = vmatprep.subr.bf16.mxu0 0
    %1746 = vmatpush1.bf16.xpose.msra.mxu0 0
    %1747 = vmatprep.subr.bf16.mxu0 0
    %1748 = vmatpush1.bf16.xpose.msra.mxu0 0
    %1749 = vmatprep.subr.bf16.mxu0 0
    %1750 = vmatpush1.bf16.xpose.msra.mxu0 0
    %1751 = vmatprep.subr.bf16.mxu0 0
    %1752 = vmatpush1.bf16.xpose.msra.mxu0 0
    %1753 = vmatprep.subr.bf16.mxu0 0
    %1754 = vmatpush1.bf16.xpose.msra.mxu0 %v1737
    %1755 = vmatprep.subr.bf16.mxu0 0
    %1756 = vmatpush2.bf16.xpose.msra.mxu0 0
    %1757 = vmatprep.subr.bf16.mxu0 0
    %1758 = vmatpush2.bf16.xpose.msra.mxu0 0
    %1759 = vmatprep.subr.bf16.mxu0 0
    %1760 = vmatpush2.bf16.xpose.msra.mxu0 0
    %1761 = vmatprep.subr.bf16.mxu0 0
    %1762 = vmatpush2.bf16.xpose.msra.mxu0 0
    %1763 = vmatprep.subr.bf16.mxu0 0
    %1764 = vmatpush2.bf16.xpose.msra.mxu0 0
    %1765 = vmatprep.subr.bf16.mxu0 0
    %1766 = vmatpush2.bf16.xpose.msra.mxu0 0
    %1767 = vmatprep.subr.bf16.mxu0 0
    %1768 = vmatpush2.bf16.xpose.msra.mxu0 0
    %1769 = vmatprep.subr.bf16.mxu0 0
    %1770 = vmatpush2.bf16.xpose.msra.mxu0 0
    %1771 = vmatprep.mubr.bf16.mxu0 0
    %1772 = vmatmul.mubr.bf16.gmra.mxu0 %v1734
    %v1773 = vpop.f32.mrf.mxu0
    %v1774 = vadd.f32 0.0, %v1773
    %v1775 = vpop.f32.mrf.mxu0
    %v1776 = vpop.f32.mrf.mxu0
    %v1777 = vpop.f32.mrf.mxu0
    %1778 = vdwg.mxu0
    %v1780 = vsel %vm1272, %v1251, 0
    %v1783 = vsel %vm1272, %v1267, 0
    %1785 = vmatprep.subr.bf16.mxu0 0
    %1786 = vmatpush1.bf16.xpose.msra.mxu0 0
    %1787 = vmatprep.subr.bf16.mxu0 0
    %1788 = vmatpush1.bf16.xpose.msra.mxu0 0
    %1789 = vmatprep.subr.bf16.mxu0 0
    %1790 = vmatpush1.bf16.xpose.msra.mxu0 0
    %1791 = vmatprep.subr.bf16.mxu0 0
    %1792 = vmatpush1.bf16.xpose.msra.mxu0 0
    %1793 = vmatprep.subr.bf16.mxu0 0
    %1794 = vmatpush1.bf16.xpose.msra.mxu0 0
    %1795 = vmatprep.subr.bf16.mxu0 0
    %1796 = vmatpush1.bf16.xpose.msra.mxu0 0
    %1797 = vmatprep.subr.bf16.mxu0 0
    %1798 = vmatpush1.bf16.xpose.msra.mxu0 0
    %1799 = vmatprep.subr.bf16.mxu0 0
    %1800 = vmatpush1.bf16.xpose.msra.mxu0 %v1783
    %1801 = vmatprep.subr.bf16.mxu0 0
    %1802 = vmatpush2.bf16.xpose.msra.mxu0 0
    %1803 = vmatprep.subr.bf16.mxu0 0
    %1804 = vmatpush2.bf16.xpose.msra.mxu0 0
    %1805 = vmatprep.subr.bf16.mxu0 0
    %1806 = vmatpush2.bf16.xpose.msra.mxu0 0
    %1807 = vmatprep.subr.bf16.mxu0 0
    %1808 = vmatpush2.bf16.xpose.msra.mxu0 0
    %1809 = vmatprep.subr.bf16.mxu0 0
    %1810 = vmatpush2.bf16.xpose.msra.mxu0 0
    %1811 = vmatprep.subr.bf16.mxu0 0
    %1812 = vmatpush2.bf16.xpose.msra.mxu0 0
    %1813 = vmatprep.subr.bf16.mxu0 0
    %1814 = vmatpush2.bf16.xpose.msra.mxu0 0
    %1815 = vmatprep.subr.bf16.mxu0 0
    %1816 = vmatpush2.bf16.xpose.msra.mxu0 0
    %1817 = vmatprep.mubr.bf16.mxu0 0
    %1818 = vmatmul.mubr.bf16.gmra.mxu0 %v1780
    %v1819 = vpop.f32.mrf.mxu0
    %v1820 = vadd.f32 0.0, %v1819
    %v1821 = vpop.f32.mrf.mxu0
    %v1822 = vpop.f32.mrf.mxu0
    %v1823 = vpop.f32.mrf.mxu0
    %1824 = vdwg.mxu0
    %v1826 = vsel %vm1272, %v1252, 0
    %v1829 = vsel %vm1272, %v1268, 0
    %1831 = vmatprep.subr.bf16.mxu0 0
    %1832 = vmatpush1.bf16.xpose.msra.mxu0 0
    %1833 = vmatprep.subr.bf16.mxu0 0
    %1834 = vmatpush1.bf16.xpose.msra.mxu0 0
    %1835 = vmatprep.subr.bf16.mxu0 0
    %1836 = vmatpush1.bf16.xpose.msra.mxu0 0
    %1837 = vmatprep.subr.bf16.mxu0 0
    %1838 = vmatpush1.bf16.xpose.msra.mxu0 0
    %1839 = vmatprep.subr.bf16.mxu0 0
    %1840 = vmatpush1.bf16.xpose.msra.mxu0 0
    %1841 = vmatprep.subr.bf16.mxu0 0
    %1842 = vmatpush1.bf16.xpose.msra.mxu0 0
    %1843 = vmatprep.subr.bf16.mxu0 0
    %1844 = vmatpush1.bf16.xpose.msra.mxu0 0
    %1845 = vmatprep.subr.bf16.mxu0 0
    %1846 = vmatpush1.bf16.xpose.msra.mxu0 %v1829
    %1847 = vmatprep.subr.bf16.mxu0 0
    %1848 = vmatpush2.bf16.xpose.msra.mxu0 0
    %1849 = vmatprep.subr.bf16.mxu0 0
    %1850 = vmatpush2.bf16.xpose.msra.mxu0 0
    %1851 = vmatprep.subr.bf16.mxu0 0
    %1852 = vmatpush2.bf16.xpose.msra.mxu0 0
    %1853 = vmatprep.subr.bf16.mxu0 0
    %1854 = vmatpush2.bf16.xpose.msra.mxu0 0
    %1855 = vmatprep.subr.bf16.mxu0 0
    %1856 = vmatpush2.bf16.xpose.msra.mxu0 0
    %1857 = vmatprep.subr.bf16.mxu0 0
    %1858 = vmatpush2.bf16.xpose.msra.mxu0 0
    %1859 = vmatprep.subr.bf16.mxu0 0
    %1860 = vmatpush2.bf16.xpose.msra.mxu0 0
    %1861 = vmatprep.subr.bf16.mxu0 0
    %1862 = vmatpush2.bf16.xpose.msra.mxu0 0
    %1863 = vmatprep.mubr.bf16.mxu0 0
    %1864 = vmatmul.mubr.bf16.gmra.mxu0 %v1826
    %v1865 = vpop.f32.mrf.mxu0
    %v1866 = vadd.f32 0.0, %v1865
    %v1867 = vpop.f32.mrf.mxu0
    %v1868 = vpop.f32.mrf.mxu0
    %v1869 = vpop.f32.mrf.mxu0
    %1870 = vdwg.mxu0
    %v1872 = vsel %vm1272, %v1253, 0
    %v1875 = vsel %vm1272, %v1269, 0
    %1877 = vmatprep.subr.bf16.mxu0 0
    %1878 = vmatpush1.bf16.xpose.msra.mxu0 0
    %1879 = vmatprep.subr.bf16.mxu0 0
    %1880 = vmatpush1.bf16.xpose.msra.mxu0 0
    %1881 = vmatprep.subr.bf16.mxu0 0
    %1882 = vmatpush1.bf16.xpose.msra.mxu0 0
    %1883 = vmatprep.subr.bf16.mxu0 0
    %1884 = vmatpush1.bf16.xpose.msra.mxu0 0
    %1885 = vmatprep.subr.bf16.mxu0 0
    %1886 = vmatpush1.bf16.xpose.msra.mxu0 0
    %1887 = vmatprep.subr.bf16.mxu0 0
    %1888 = vmatpush1.bf16.xpose.msra.mxu0 0
    %1889 = vmatprep.subr.bf16.mxu0 0
    %1890 = vmatpush1.bf16.xpose.msra.mxu0 0
    %1891 = vmatprep.subr.bf16.mxu0 0
    %1892 = vmatpush1.bf16.xpose.msra.mxu0 %v1875
    %1893 = vmatprep.subr.bf16.mxu0 0
    %1894 = vmatpush2.bf16.xpose.msra.mxu0 0
    %1895 = vmatprep.subr.bf16.mxu0 0
    %1896 = vmatpush2.bf16.xpose.msra.mxu0 0
    %1897 = vmatprep.subr.bf16.mxu0 0
    %1898 = vmatpush2.bf16.xpose.msra.mxu0 0
    %1899 = vmatprep.subr.bf16.mxu0 0
    %1900 = vmatpush2.bf16.xpose.msra.mxu0 0
    %1901 = vmatprep.subr.bf16.mxu0 0
    %1902 = vmatpush2.bf16.xpose.msra.mxu0 0
    %1903 = vmatprep.subr.bf16.mxu0 0
    %1904 = vmatpush2.bf16.xpose.msra.mxu0 0
    %1905 = vmatprep.subr.bf16.mxu0 0
    %1906 = vmatpush2.bf16.xpose.msra.mxu0 0
    %1907 = vmatprep.subr.bf16.mxu0 0
    %1908 = vmatpush2.bf16.xpose.msra.mxu0 0
    %1909 = vmatprep.mubr.bf16.mxu0 0
    %1910 = vmatmul.mubr.bf16.gmra.mxu0 %v1872
    %v1911 = vpop.f32.mrf.mxu0
    %v1912 = vadd.f32 0.0, %v1911
    %v1913 = vpop.f32.mrf.mxu0
    %v1914 = vpop.f32.mrf.mxu0
    %v1915 = vpop.f32.mrf.mxu0
    %1916 = vdwg.mxu0
    %v1918 = vsel %vm1272, %v1254, 0
    %v1921 = vsel %vm1272, %v1270, 0
    %1923 = vmatprep.subr.bf16.mxu0 0
    %1924 = vmatpush1.bf16.xpose.msra.mxu0 0
    %1925 = vmatprep.subr.bf16.mxu0 0
    %1926 = vmatpush1.bf16.xpose.msra.mxu0 0
    %1927 = vmatprep.subr.bf16.mxu0 0
    %1928 = vmatpush1.bf16.xpose.msra.mxu0 0
    %1929 = vmatprep.subr.bf16.mxu0 0
    %1930 = vmatpush1.bf16.xpose.msra.mxu0 0
    %1931 = vmatprep.subr.bf16.mxu0 0
    %1932 = vmatpush1.bf16.xpose.msra.mxu0 0
    %1933 = vmatprep.subr.bf16.mxu0 0
    %1934 = vmatpush1.bf16.xpose.msra.mxu0 0
    %1935 = vmatprep.subr.bf16.mxu0 0
    %1936 = vmatpush1.bf16.xpose.msra.mxu0 0
    %1937 = vmatprep.subr.bf16.mxu0 0
    %1938 = vmatpush1.bf16.xpose.msra.mxu0 %v1921
    %1939 = vmatprep.subr.bf16.mxu0 0
    %1940 = vmatpush2.bf16.xpose.msra.mxu0 0
    %1941 = vmatprep.subr.bf16.mxu0 0
    %1942 = vmatpush2.bf16.xpose.msra.mxu0 0
    %1943 = vmatprep.subr.bf16.mxu0 0
    %1944 = vmatpush2.bf16.xpose.msra.mxu0 0
    %1945 = vmatprep.subr.bf16.mxu0 0
    %1946 = vmatpush2.bf16.xpose.msra.mxu0 0
    %1947 = vmatprep.subr.bf16.mxu0 0
    %1948 = vmatpush2.bf16.xpose.msra.mxu0 0
    %1949 = vmatprep.subr.bf16.mxu0 0
    %1950 = vmatpush2.bf16.xpose.msra.mxu0 0
    %1951 = vmatprep.subr.bf16.mxu0 0
    %1952 = vmatpush2.bf16.xpose.msra.mxu0 0
    %1953 = vmatprep.subr.bf16.mxu0 0
    %1954 = vmatpush2.bf16.xpose.msra.mxu0 0
    %1955 = vmatprep.mubr.bf16.mxu0 0
    %1956 = vmatmul.mubr.bf16.gmra.mxu0 %v1918
    %v1957 = vpop.f32.mrf.mxu0
    %v1958 = vadd.f32 0.0, %v1957
    %v1959 = vpop.f32.mrf.mxu0
    %v1960 = vpop.f32.mrf.mxu0
    %v1961 = vpop.f32.mrf.mxu0
    %1962 = vdwg.mxu0
    %v1964 = vsel %vm1272, %v1255, 0
    %v1967 = vsel %vm1272, %v1271, 0
    %1969 = vmatprep.subr.bf16.mxu0 0
    %1970 = vmatpush1.bf16.xpose.msra.mxu0 0
    %1971 = vmatprep.subr.bf16.mxu0 0
    %1972 = vmatpush1.bf16.xpose.msra.mxu0 0
    %1973 = vmatprep.subr.bf16.mxu0 0
    %1974 = vmatpush1.bf16.xpose.msra.mxu0 0
    %1975 = vmatprep.subr.bf16.mxu0 0
    %1976 = vmatpush1.bf16.xpose.msra.mxu0 0
    %1977 = vmatprep.subr.bf16.mxu0 0
    %1978 = vmatpush1.bf16.xpose.msra.mxu0 0
    %1979 = vmatprep.subr.bf16.mxu0 0
    %1980 = vmatpush1.bf16.xpose.msra.mxu0 0
    %1981 = vmatprep.subr.bf16.mxu0 0
    %1982 = vmatpush1.bf16.xpose.msra.mxu0 0
    %1983 = vmatprep.subr.bf16.mxu0 0
    %1984 = vmatpush1.bf16.xpose.msra.mxu0 %v1967
    %1985 = vmatprep.subr.bf16.mxu0 0
    %1986 = vmatpush2.bf16.xpose.msra.mxu0 0
    %1987 = vmatprep.subr.bf16.mxu0 0
    %1988 = vmatpush2.bf16.xpose.msra.mxu0 0
    %1989 = vmatprep.subr.bf16.mxu0 0
    %1990 = vmatpush2.bf16.xpose.msra.mxu0 0
    %1991 = vmatprep.subr.bf16.mxu0 0
    %1992 = vmatpush2.bf16.xpose.msra.mxu0 0
    %1993 = vmatprep.subr.bf16.mxu0 0
    %1994 = vmatpush2.bf16.xpose.msra.mxu0 0
    %1995 = vmatprep.subr.bf16.mxu0 0
    %1996 = vmatpush2.bf16.xpose.msra.mxu0 0
    %1997 = vmatprep.subr.bf16.mxu0 0
    %1998 = vmatpush2.bf16.xpose.msra.mxu0 0
    %1999 = vmatprep.subr.bf16.mxu0 0
    %2000 = vmatpush2.bf16.xpose.msra.mxu0 0
    %2001 = vmatprep.mubr.bf16.mxu0 0
    %2002 = vmatmul.mubr.bf16.gmra.mxu0 %v1964
    %v2003 = vpop.f32.mrf.mxu0
    %v2004 = vadd.f32 0.0, %v2003
    %v2005 = vpop.f32.mrf.mxu0
    %v2006 = vpop.f32.mrf.mxu0
    %v2007 = vpop.f32.mrf.mxu0
    %2008 = vdwg.mxu0
    %vm2009 = vcmask 64512
    %v2010 = vsel %vm2009, %v1314, -inf
    %2011 = vmax.xlane.f32.xlu0 %v2010
    %v2012 = vpop.xlane.xlu0 %2011
    %v2013 = vsel %vm2009, %v1360, -inf
    %2014 = vmax.xlane.f32.xlu0 %v2013
    %v2015 = vpop.xlane.xlu0 %2014
    %v2016 = vsel %vm2009, %v1406, -inf
    %2017 = vmax.xlane.f32.xlu0 %v2016
    %v2018 = vpop.xlane.xlu0 %2017
    %v2019 = vsel %vm2009, %v1452, -inf
    %2020 = vmax.xlane.f32.xlu0 %v2019
    %v2021 = vpop.xlane.xlu0 %2020
    %v2022 = vsel %vm2009, %v1498, -inf
    %2023 = vmax.xlane.f32.xlu0 %v2022
    %v2024 = vpop.xlane.xlu0 %2023
    %v2025 = vsel %vm2009, %v1544, -inf
    %2026 = vmax.xlane.f32.xlu0 %v2025
    %v2027 = vpop.xlane.xlu0 %2026
    %v2028 = vsel %vm2009, %v1590, -inf
    %2029 = vmax.xlane.f32.xlu0 %v2028
    %v2030 = vpop.xlane.xlu0 %2029
    %v2031 = vsel %vm2009, %v1636, -inf
    %2032 = vmax.xlane.f32.xlu0 %v2031
    %v2033 = vpop.xlane.xlu0 %2032
    %v2034 = vsel %vm2009, %v1682, -inf
    %2035 = vmax.xlane.f32.xlu0 %v2034
    %v2036 = vpop.xlane.xlu0 %2035
    %v2037 = vsel %vm2009, %v1728, -inf
    %2038 = vmax.xlane.f32.xlu0 %v2037
    %v2039 = vpop.xlane.xlu0 %2038
    %v2040 = vsel %vm2009, %v1774, -inf
    %2041 = vmax.xlane.f32.xlu0 %v2040
    %v2042 = vpop.xlane.xlu0 %2041
    %v2043 = vsel %vm2009, %v1820, -inf
    %2044 = vmax.xlane.f32.xlu0 %v2043
    %v2045 = vpop.xlane.xlu0 %2044
    %v2046 = vsel %vm2009, %v1866, -inf
    %2047 = vmax.xlane.f32.xlu0 %v2046
    %v2048 = vpop.xlane.xlu0 %2047
    %v2049 = vsel %vm2009, %v1912, -inf
    %2050 = vmax.xlane.f32.xlu0 %v2049
    %v2051 = vpop.xlane.xlu0 %2050
    %v2052 = vsel %vm2009, %v1958, -inf
    %2053 = vmax.xlane.f32.xlu0 %v2052
    %v2054 = vpop.xlane.xlu0 %2053
    %v2055 = vsel %vm2009, %v2004, -inf
    %2056 = vmax.xlane.f32.xlu0 %v2055
    %v2057 = vpop.xlane.xlu0 %2056
    %v2058 = vsub.f32 %v1314, %v2012
    %v2059 = vsub.f32 %v1360, %v2015
    %v2060 = vsub.f32 %v1406, %v2018
    %v2061 = vsub.f32 %v1452, %v2021
    %v2062 = vsub.f32 %v1498, %v2024
    %v2063 = vsub.f32 %v1544, %v2027
    %v2064 = vsub.f32 %v1590, %v2030
    %v2065 = vsub.f32 %v1636, %v2033
    %v2066 = vsub.f32 %v1682, %v2036
    %v2067 = vsub.f32 %v1728, %v2039
    %v2068 = vsub.f32 %v1774, %v2042
    %v2069 = vsub.f32 %v1820, %v2045
    %v2070 = vsub.f32 %v1866, %v2048
    %v2071 = vsub.f32 %v1912, %v2051
    %v2072 = vsub.f32 %v1958, %v2054
    %v2073 = vsub.f32 %v2004, %v2057
    %v2074 = vmul.f32 %v2058, 1.442695
    %v2075 = vpow.pop %v2074
    %v2076 = vmul.f32 %v2059, 1.442695
    %v2077 = vpow.pop %v2076
    %v2078 = vmul.f32 %v2060, 1.442695
    %v2079 = vpow.pop %v2078
    %v2080 = vmul.f32 %v2061, 1.442695
    %v2081 = vpow.pop %v2080
    %v2082 = vmul.f32 %v2062, 1.442695
    %v2083 = vpow.pop %v2082
    %v2084 = vmul.f32 %v2063, 1.442695
    %v2085 = vpow.pop %v2084
    %v2086 = vmul.f32 %v2064, 1.442695
    %v2087 = vpow.pop %v2086
    %v2088 = vmul.f32 %v2065, 1.442695
    %v2089 = vpow.pop %v2088
    %v2090 = vmul.f32 %v2066, 1.442695
    %v2091 = vpow.pop %v2090
    %v2092 = vmul.f32 %v2067, 1.442695
    %v2093 = vpow.pop %v2092
    %v2094 = vmul.f32 %v2068, 1.442695
    %v2095 = vpow.pop %v2094
    %v2096 = vmul.f32 %v2069, 1.442695
    %v2097 = vpow.pop %v2096
    %v2098 = vmul.f32 %v2070, 1.442695
    %v2099 = vpow.pop %v2098
    %v2100 = vmul.f32 %v2071, 1.442695
    %v2101 = vpow.pop %v2100
    %v2102 = vmul.f32 %v2072, 1.442695
    %v2103 = vpow.pop %v2102
    %v2104 = vmul.f32 %v2073, 1.442695
    %v2105 = vpow.pop %v2104
    %v2106 = vsel %vm2009, %v2075, 0.0
    %2107 = vadd.xlane.f32.xlu0 %v2106
    %v2108 = vpop.xlane.xlu0 %2107
    %v2109 = vsel %vm2009, %v2077, 0.0
    %2110 = vadd.xlane.f32.xlu0 %v2109
    %v2111 = vpop.xlane.xlu0 %2110
    %v2112 = vsel %vm2009, %v2079, 0.0
    %2113 = vadd.xlane.f32.xlu0 %v2112
    %v2114 = vpop.xlane.xlu0 %2113
    %v2115 = vsel %vm2009, %v2081, 0.0
    %2116 = vadd.xlane.f32.xlu0 %v2115
    %v2117 = vpop.xlane.xlu0 %2116
    %v2118 = vsel %vm2009, %v2083, 0.0
    %2119 = vadd.xlane.f32.xlu0 %v2118
    %v2120 = vpop.xlane.xlu0 %2119
    %v2121 = vsel %vm2009, %v2085, 0.0
    %2122 = vadd.xlane.f32.xlu0 %v2121
    %v2123 = vpop.xlane.xlu0 %2122
    %v2124 = vsel %vm2009, %v2087, 0.0
    %2125 = vadd.xlane.f32.xlu0 %v2124
    %v2126 = vpop.xlane.xlu0 %2125
    %v2127 = vsel %vm2009, %v2089, 0.0
    %2128 = vadd.xlane.f32.xlu0 %v2127
    %v2129 = vpop.xlane.xlu0 %2128
    %v2130 = vsel %vm2009, %v2091, 0.0
    %2131 = vadd.xlane.f32.xlu0 %v2130
    %v2132 = vpop.xlane.xlu0 %2131
    %v2133 = vsel %vm2009, %v2093, 0.0
    %2134 = vadd.xlane.f32.xlu0 %v2133
    %v2135 = vpop.xlane.xlu0 %2134
    %v2136 = vsel %vm2009, %v2095, 0.0
    %2137 = vadd.xlane.f32.xlu0 %v2136
    %v2138 = vpop.xlane.xlu0 %2137
    %v2139 = vsel %vm2009, %v2097, 0.0
    %2140 = vadd.xlane.f32.xlu0 %v2139
    %v2141 = vpop.xlane.xlu0 %2140
    %v2142 = vsel %vm2009, %v2099, 0.0
    %2143 = vadd.xlane.f32.xlu0 %v2142
    %v2144 = vpop.xlane.xlu0 %2143
    %v2145 = vsel %vm2009, %v2101, 0.0
    %2146 = vadd.xlane.f32.xlu0 %v2145
    %v2147 = vpop.xlane.xlu0 %2146
    %v2148 = vsel %vm2009, %v2103, 0.0
    %2149 = vadd.xlane.f32.xlu0 %v2148
    %v2150 = vpop.xlane.xlu0 %2149
    %v2151 = vsel %vm2009, %v2105, 0.0
    %2152 = vadd.xlane.f32.xlu0 %v2151
    %v2153 = vpop.xlane.xlu0 %2152
    %v2154 = vrcp.pop %v2108
    %v2155 = vrcp.pop %v2111
    %v2156 = vrcp.pop %v2114
    %v2157 = vrcp.pop %v2117
    %v2158 = vrcp.pop %v2120
    %v2159 = vrcp.pop %v2123
    %v2160 = vrcp.pop %v2126
    %v2161 = vrcp.pop %v2129
    %v2162 = vrcp.pop %v2132
    %v2163 = vrcp.pop %v2135
    %v2164 = vrcp.pop %v2138
    %v2165 = vrcp.pop %v2141
    %v2166 = vrcp.pop %v2144
    %v2167 = vrcp.pop %v2147
    %v2168 = vrcp.pop %v2150
    %v2169 = vrcp.pop %v2153
    %v2170 = vmul.f32 %v2075, %v2154
    %v2171 = vmul.f32 %v2077, %v2155
    %v2172 = vmul.f32 %v2079, %v2156
    %v2173 = vmul.f32 %v2081, %v2157
    %v2174 = vmul.f32 %v2083, %v2158
    %v2175 = vmul.f32 %v2085, %v2159
    %v2176 = vmul.f32 %v2087, %v2160
    %v2177 = vmul.f32 %v2089, %v2161
    %v2178 = vmul.f32 %v2091, %v2162
    %v2179 = vmul.f32 %v2093, %v2163
    %v2180 = vmul.f32 %v2095, %v2164
    %v2181 = vmul.f32 %v2097, %v2165
    %v2182 = vmul.f32 %v2099, %v2166
    %v2183 = vmul.f32 %v2101, %v2167
    %v2184 = vmul.f32 %v2103, %v2168
    %v2185 = vmul.f32 %v2105, %v2169
    %v2186 = vpack.c.bf16 %v2170, %v2170
    %v2187 = vpack.c.bf16 %v2171, %v2171
    %v2188 = vpack.c.bf16 %v2172, %v2172
    %v2189 = vpack.c.bf16 %v2173, %v2173
    %v2190 = vpack.c.bf16 %v2174, %v2174
    %v2191 = vpack.c.bf16 %v2175, %v2175
    %v2192 = vpack.c.bf16 %v2176, %v2176
    %v2193 = vpack.c.bf16 %v2177, %v2177
    %v2194 = vpack.c.bf16 %v2178, %v2178
    %v2195 = vpack.c.bf16 %v2179, %v2179
    %v2196 = vpack.c.bf16 %v2180, %v2180
    %v2197 = vpack.c.bf16 %v2181, %v2181
    %v2198 = vpack.c.bf16 %v2182, %v2182
    %v2199 = vpack.c.bf16 %v2183, %v2183
    %v2200 = vpack.c.bf16 %v2184, %v2184
    %v2201 = vpack.c.bf16 %v2185, %v2185
    %v2202 = vpack.c.bf16 %v1102, %v1102
    %v2203 = vpack.c.bf16 %v1198, %v1198
    %v2204 = vpack.c.bf16 %v1201, %v1201
    %v2205 = vpack.c.bf16 %v1204, %v1204
    %v2206 = vpack.c.bf16 %v1207, %v1207
    %v2207 = vpack.c.bf16 %v1210, %v1210
    %v2208 = vpack.c.bf16 %v1213, %v1213
    %v2209 = vpack.c.bf16 %v1216, %v1216
    %v2210 = vpack.c.bf16 %v1105, %v1105
    %v2211 = vpack.c.bf16 %v1220, %v1220
    %v2212 = vpack.c.bf16 %v1223, %v1223
    %v2213 = vpack.c.bf16 %v1226, %v1226
    %v2214 = vpack.c.bf16 %v1229, %v1229
    %v2215 = vpack.c.bf16 %v1232, %v1232
    %v2216 = vpack.c.bf16 %v1235, %v1235
    %v2217 = vpack.c.bf16 %v1238, %v1238
    %v2219 = vsel %vm2009, %v2186, 0
    %vm2221 = vcmask 1043456
    %v2223 = vsel %vm2221, %v2202, 0
    %2225 = vmatprep.subr.bf16.mxu0 0
    %2226 = vmatpush1.bf16.msra.mxu0 0
    %2227 = vmatprep.subr.bf16.mxu0 0
    %2228 = vmatpush1.bf16.msra.mxu0 0
    %2229 = vmatprep.subr.bf16.mxu0 0
    %2230 = vmatpush1.bf16.msra.mxu0 0
    %2231 = vmatprep.subr.bf16.mxu0 0
    %2232 = vmatpush1.bf16.msra.mxu0 0
    %2233 = vmatprep.subr.bf16.mxu0 0
    %2234 = vmatpush1.bf16.msra.mxu0 0
    %2235 = vmatprep.subr.bf16.mxu0 0
    %2236 = vmatpush1.bf16.msra.mxu0 0
    %2237 = vmatprep.subr.bf16.mxu0 0
    %2238 = vmatpush1.bf16.msra.mxu0 0
    %2239 = vmatprep.subr.bf16.mxu0 0
    %2240 = vmatpush1.bf16.msra.mxu0 %v2223
    %2241 = vmatprep.subr.bf16.mxu0 0
    %2242 = vmatpush2.bf16.msra.mxu0 0
    %2243 = vmatprep.subr.bf16.mxu0 0
    %2244 = vmatpush2.bf16.msra.mxu0 0
    %2245 = vmatprep.subr.bf16.mxu0 0
    %2246 = vmatpush2.bf16.msra.mxu0 0
    %2247 = vmatprep.subr.bf16.mxu0 0
    %2248 = vmatpush2.bf16.msra.mxu0 0
    %2249 = vmatprep.subr.bf16.mxu0 0
    %2250 = vmatpush2.bf16.msra.mxu0 0
    %2251 = vmatprep.subr.bf16.mxu0 0
    %2252 = vmatpush2.bf16.msra.mxu0 0
    %2253 = vmatprep.subr.bf16.mxu0 0
    %2254 = vmatpush2.bf16.msra.mxu0 0
    %2255 = vmatprep.subr.bf16.mxu0 0
    %2256 = vmatpush2.bf16.msra.mxu0 0
    %2257 = vmatprep.mubr.bf16.mxu0 0
    %2258 = vmatmul.mubr.bf16.gmra.mxu0 %v2219
    %v2259 = vpop.f32.mrf.mxu0
    %v2260 = vadd.f32 0.0, %v2259
    %v2261 = vpop.f32.mrf.mxu0
    %v2262 = vpop.f32.mrf.mxu0
    %v2263 = vpop.f32.mrf.mxu0
    %2264 = vdwg.mxu0
    %v2266 = vsel %vm2009, %v2187, 0
    %v2269 = vsel %vm2221, %v2203, 0
    %2271 = vmatprep.subr.bf16.mxu0 0
    %2272 = vmatpush1.bf16.msra.mxu0 0
    %2273 = vmatprep.subr.bf16.mxu0 0
    %2274 = vmatpush1.bf16.msra.mxu0 0
    %2275 = vmatprep.subr.bf16.mxu0 0
    %2276 = vmatpush1.bf16.msra.mxu0 0
    %2277 = vmatprep.subr.bf16.mxu0 0
    %2278 = vmatpush1.bf16.msra.mxu0 0
    %2279 = vmatprep.subr.bf16.mxu0 0
    %2280 = vmatpush1.bf16.msra.mxu0 0
    %2281 = vmatprep.subr.bf16.mxu0 0
    %2282 = vmatpush1.bf16.msra.mxu0 0
    %2283 = vmatprep.subr.bf16.mxu0 0
    %2284 = vmatpush1.bf16.msra.mxu0 0
    %2285 = vmatprep.subr.bf16.mxu0 0
    %2286 = vmatpush1.bf16.msra.mxu0 %v2269
    %2287 = vmatprep.subr.bf16.mxu0 0
    %2288 = vmatpush2.bf16.msra.mxu0 0
    %2289 = vmatprep.subr.bf16.mxu0 0
    %2290 = vmatpush2.bf16.msra.mxu0 0
    %2291 = vmatprep.subr.bf16.mxu0 0
    %2292 = vmatpush2.bf16.msra.mxu0 0
    %2293 = vmatprep.subr.bf16.mxu0 0
    %2294 = vmatpush2.bf16.msra.mxu0 0
    %2295 = vmatprep.subr.bf16.mxu0 0
    %2296 = vmatpush2.bf16.msra.mxu0 0
    %2297 = vmatprep.subr.bf16.mxu0 0
    %2298 = vmatpush2.bf16.msra.mxu0 0
    %2299 = vmatprep.subr.bf16.mxu0 0
    %2300 = vmatpush2.bf16.msra.mxu0 0
    %2301 = vmatprep.subr.bf16.mxu0 0
    %2302 = vmatpush2.bf16.msra.mxu0 0
    %2303 = vmatprep.mubr.bf16.mxu0 0
    %2304 = vmatmul.mubr.bf16.gmra.mxu0 %v2266
    %v2305 = vpop.f32.mrf.mxu0
    %v2306 = vadd.f32 0.0, %v2305
    %v2307 = vpop.f32.mrf.mxu0
    %v2308 = vpop.f32.mrf.mxu0
    %v2309 = vpop.f32.mrf.mxu0
    %2310 = vdwg.mxu0
    %v2312 = vsel %vm2009, %v2188, 0
    %v2315 = vsel %vm2221, %v2204, 0
    %2317 = vmatprep.subr.bf16.mxu0 0
    %2318 = vmatpush1.bf16.msra.mxu0 0
    %2319 = vmatprep.subr.bf16.mxu0 0
    %2320 = vmatpush1.bf16.msra.mxu0 0
    %2321 = vmatprep.subr.bf16.mxu0 0
    %2322 = vmatpush1.bf16.msra.mxu0 0
    %2323 = vmatprep.subr.bf16.mxu0 0
    %2324 = vmatpush1.bf16.msra.mxu0 0
    %2325 = vmatprep.subr.bf16.mxu0 0
    %2326 = vmatpush1.bf16.msra.mxu0 0
    %2327 = vmatprep.subr.bf16.mxu0 0
    %2328 = vmatpush1.bf16.msra.mxu0 0
    %2329 = vmatprep.subr.bf16.mxu0 0
    %2330 = vmatpush1.bf16.msra.mxu0 0
    %2331 = vmatprep.subr.bf16.mxu0 0
    %2332 = vmatpush1.bf16.msra.mxu0 %v2315
    %2333 = vmatprep.subr.bf16.mxu0 0
    %2334 = vmatpush2.bf16.msra.mxu0 0
    %2335 = vmatprep.subr.bf16.mxu0 0
    %2336 = vmatpush2.bf16.msra.mxu0 0
    %2337 = vmatprep.subr.bf16.mxu0 0
    %2338 = vmatpush2.bf16.msra.mxu0 0
    %2339 = vmatprep.subr.bf16.mxu0 0
    %2340 = vmatpush2.bf16.msra.mxu0 0
    %2341 = vmatprep.subr.bf16.mxu0 0
    %2342 = vmatpush2.bf16.msra.mxu0 0
    %2343 = vmatprep.subr.bf16.mxu0 0
    %2344 = vmatpush2.bf16.msra.mxu0 0
    %2345 = vmatprep.subr.bf16.mxu0 0
    %2346 = vmatpush2.bf16.msra.mxu0 0
    %2347 = vmatprep.subr.bf16.mxu0 0
    %2348 = vmatpush2.bf16.msra.mxu0 0
    %2349 = vmatprep.mubr.bf16.mxu0 0
    %2350 = vmatmul.mubr.bf16.gmra.mxu0 %v2312
    %v2351 = vpop.f32.mrf.mxu0
    %v2352 = vadd.f32 0.0, %v2351
    %v2353 = vpop.f32.mrf.mxu0
    %v2354 = vpop.f32.mrf.mxu0
    %v2355 = vpop.f32.mrf.mxu0
    %2356 = vdwg.mxu0
    %v2358 = vsel %vm2009, %v2189, 0
    %v2361 = vsel %vm2221, %v2205, 0
    %2363 = vmatprep.subr.bf16.mxu0 0
    %2364 = vmatpush1.bf16.msra.mxu0 0
    %2365 = vmatprep.subr.bf16.mxu0 0
    %2366 = vmatpush1.bf16.msra.mxu0 0
    %2367 = vmatprep.subr.bf16.mxu0 0
    %2368 = vmatpush1.bf16.msra.mxu0 0
    %2369 = vmatprep.subr.bf16.mxu0 0
    %2370 = vmatpush1.bf16.msra.mxu0 0
    %2371 = vmatprep.subr.bf16.mxu0 0
    %2372 = vmatpush1.bf16.msra.mxu0 0
    %2373 = vmatprep.subr.bf16.mxu0 0
    %2374 = vmatpush1.bf16.msra.mxu0 0
    %2375 = vmatprep.subr.bf16.mxu0 0
    %2376 = vmatpush1.bf16.msra.mxu0 0
    %2377 = vmatprep.subr.bf16.mxu0 0
    %2378 = vmatpush1.bf16.msra.mxu0 %v2361
    %2379 = vmatprep.subr.bf16.mxu0 0
    %2380 = vmatpush2.bf16.msra.mxu0 0
    %2381 = vmatprep.subr.bf16.mxu0 0
    %2382 = vmatpush2.bf16.msra.mxu0 0
    %2383 = vmatprep.subr.bf16.mxu0 0
    %2384 = vmatpush2.bf16.msra.mxu0 0
    %2385 = vmatprep.subr.bf16.mxu0 0
    %2386 = vmatpush2.bf16.msra.mxu0 0
    %2387 = vmatprep.subr.bf16.mxu0 0
    %2388 = vmatpush2.bf16.msra.mxu0 0
    %2389 = vmatprep.subr.bf16.mxu0 0
    %2390 = vmatpush2.bf16.msra.mxu0 0
    %2391 = vmatprep.subr.bf16.mxu0 0
    %2392 = vmatpush2.bf16.msra.mxu0 0
    %2393 = vmatprep.subr.bf16.mxu0 0
    %2394 = vmatpush2.bf16.msra.mxu0 0
    %2395 = vmatprep.mubr.bf16.mxu0 0
    %2396 = vmatmul.mubr.bf16.gmra.mxu0 %v2358
    %v2397 = vpop.f32.mrf.mxu0
    %v2398 = vadd.f32 0.0, %v2397
    %v2399 = vpop.f32.mrf.mxu0
    %v2400 = vpop.f32.mrf.mxu0
    %v2401 = vpop.f32.mrf.mxu0
    %2402 = vdwg.mxu0
    %v2404 = vsel %vm2009, %v2190, 0
    %v2407 = vsel %vm2221, %v2206, 0
    %2409 = vmatprep.subr.bf16.mxu0 0
    %2410 = vmatpush1.bf16.msra.mxu0 0
    %2411 = vmatprep.subr.bf16.mxu0 0
    %2412 = vmatpush1.bf16.msra.mxu0 0
    %2413 = vmatprep.subr.bf16.mxu0 0
    %2414 = vmatpush1.bf16.msra.mxu0 0
    %2415 = vmatprep.subr.bf16.mxu0 0
    %2416 = vmatpush1.bf16.msra.mxu0 0
    %2417 = vmatprep.subr.bf16.mxu0 0
    %2418 = vmatpush1.bf16.msra.mxu0 0
    %2419 = vmatprep.subr.bf16.mxu0 0
    %2420 = vmatpush1.bf16.msra.mxu0 0
    %2421 = vmatprep.subr.bf16.mxu0 0
    %2422 = vmatpush1.bf16.msra.mxu0 0
    %2423 = vmatprep.subr.bf16.mxu0 0
    %2424 = vmatpush1.bf16.msra.mxu0 %v2407
    %2425 = vmatprep.subr.bf16.mxu0 0
    %2426 = vmatpush2.bf16.msra.mxu0 0
    %2427 = vmatprep.subr.bf16.mxu0 0
    %2428 = vmatpush2.bf16.msra.mxu0 0
    %2429 = vmatprep.subr.bf16.mxu0 0
    %2430 = vmatpush2.bf16.msra.mxu0 0
    %2431 = vmatprep.subr.bf16.mxu0 0
    %2432 = vmatpush2.bf16.msra.mxu0 0
    %2433 = vmatprep.subr.bf16.mxu0 0
    %2434 = vmatpush2.bf16.msra.mxu0 0
    %2435 = vmatprep.subr.bf16.mxu0 0
    %2436 = vmatpush2.bf16.msra.mxu0 0
    %2437 = vmatprep.subr.bf16.mxu0 0
    %2438 = vmatpush2.bf16.msra.mxu0 0
    %2439 = vmatprep.subr.bf16.mxu0 0
    %2440 = vmatpush2.bf16.msra.mxu0 0
    %2441 = vmatprep.mubr.bf16.mxu0 0
    %2442 = vmatmul.mubr.bf16.gmra.mxu0 %v2404
    %v2443 = vpop.f32.mrf.mxu0
    %v2444 = vadd.f32 0.0, %v2443
    %v2445 = vpop.f32.mrf.mxu0
    %v2446 = vpop.f32.mrf.mxu0
    %v2447 = vpop.f32.mrf.mxu0
    %2448 = vdwg.mxu0
    %v2450 = vsel %vm2009, %v2191, 0
    %v2453 = vsel %vm2221, %v2207, 0
    %2455 = vmatprep.subr.bf16.mxu0 0
    %2456 = vmatpush1.bf16.msra.mxu0 0
    %2457 = vmatprep.subr.bf16.mxu0 0
    %2458 = vmatpush1.bf16.msra.mxu0 0
    %2459 = vmatprep.subr.bf16.mxu0 0
    %2460 = vmatpush1.bf16.msra.mxu0 0
    %2461 = vmatprep.subr.bf16.mxu0 0
    %2462 = vmatpush1.bf16.msra.mxu0 0
    %2463 = vmatprep.subr.bf16.mxu0 0
    %2464 = vmatpush1.bf16.msra.mxu0 0
    %2465 = vmatprep.subr.bf16.mxu0 0
    %2466 = vmatpush1.bf16.msra.mxu0 0
    %2467 = vmatprep.subr.bf16.mxu0 0
    %2468 = vmatpush1.bf16.msra.mxu0 0
    %2469 = vmatprep.subr.bf16.mxu0 0
    %2470 = vmatpush1.bf16.msra.mxu0 %v2453
    %2471 = vmatprep.subr.bf16.mxu0 0
    %2472 = vmatpush2.bf16.msra.mxu0 0
    %2473 = vmatprep.subr.bf16.mxu0 0
    %2474 = vmatpush2.bf16.msra.mxu0 0
    %2475 = vmatprep.subr.bf16.mxu0 0
    %2476 = vmatpush2.bf16.msra.mxu0 0
    %2477 = vmatprep.subr.bf16.mxu0 0
    %2478 = vmatpush2.bf16.msra.mxu0 0
    %2479 = vmatprep.subr.bf16.mxu0 0
    %2480 = vmatpush2.bf16.msra.mxu0 0
    %2481 = vmatprep.subr.bf16.mxu0 0
    %2482 = vmatpush2.bf16.msra.mxu0 0
    %2483 = vmatprep.subr.bf16.mxu0 0
    %2484 = vmatpush2.bf16.msra.mxu0 0
    %2485 = vmatprep.subr.bf16.mxu0 0
    %2486 = vmatpush2.bf16.msra.mxu0 0
    %2487 = vmatprep.mubr.bf16.mxu0 0
    %2488 = vmatmul.mubr.bf16.gmra.mxu0 %v2450
    %v2489 = vpop.f32.mrf.mxu0
    %v2490 = vadd.f32 0.0, %v2489
    %v2491 = vpop.f32.mrf.mxu0
    %v2492 = vpop.f32.mrf.mxu0
    %v2493 = vpop.f32.mrf.mxu0
    %2494 = vdwg.mxu0
    %v2496 = vsel %vm2009, %v2192, 0
    %v2499 = vsel %vm2221, %v2208, 0
    %2501 = vmatprep.subr.bf16.mxu0 0
    %2502 = vmatpush1.bf16.msra.mxu0 0
    %2503 = vmatprep.subr.bf16.mxu0 0
    %2504 = vmatpush1.bf16.msra.mxu0 0
    %2505 = vmatprep.subr.bf16.mxu0 0
    %2506 = vmatpush1.bf16.msra.mxu0 0
    %2507 = vmatprep.subr.bf16.mxu0 0
    %2508 = vmatpush1.bf16.msra.mxu0 0
    %2509 = vmatprep.subr.bf16.mxu0 0
    %2510 = vmatpush1.bf16.msra.mxu0 0
    %2511 = vmatprep.subr.bf16.mxu0 0
    %2512 = vmatpush1.bf16.msra.mxu0 0
    %2513 = vmatprep.subr.bf16.mxu0 0
    %2514 = vmatpush1.bf16.msra.mxu0 0
    %2515 = vmatprep.subr.bf16.mxu0 0
    %2516 = vmatpush1.bf16.msra.mxu0 %v2499
    %2517 = vmatprep.subr.bf16.mxu0 0
    %2518 = vmatpush2.bf16.msra.mxu0 0
    %2519 = vmatprep.subr.bf16.mxu0 0
    %2520 = vmatpush2.bf16.msra.mxu0 0
    %2521 = vmatprep.subr.bf16.mxu0 0
    %2522 = vmatpush2.bf16.msra.mxu0 0
    %2523 = vmatprep.subr.bf16.mxu0 0
    %2524 = vmatpush2.bf16.msra.mxu0 0
    %2525 = vmatprep.subr.bf16.mxu0 0
    %2526 = vmatpush2.bf16.msra.mxu0 0
    %2527 = vmatprep.subr.bf16.mxu0 0
    %2528 = vmatpush2.bf16.msra.mxu0 0
    %2529 = vmatprep.subr.bf16.mxu0 0
    %2530 = vmatpush2.bf16.msra.mxu0 0
    %2531 = vmatprep.subr.bf16.mxu0 0
    %2532 = vmatpush2.bf16.msra.mxu0 0
    %2533 = vmatprep.mubr.bf16.mxu0 0
    %2534 = vmatmul.mubr.bf16.gmra.mxu0 %v2496
    %v2535 = vpop.f32.mrf.mxu0
    %v2536 = vadd.f32 0.0, %v2535
    %v2537 = vpop.f32.mrf.mxu0
    %v2538 = vpop.f32.mrf.mxu0
    %v2539 = vpop.f32.mrf.mxu0
    %2540 = vdwg.mxu0
    %v2542 = vsel %vm2009, %v2193, 0
    %v2545 = vsel %vm2221, %v2209, 0
    %2547 = vmatprep.subr.bf16.mxu0 0
    %2548 = vmatpush1.bf16.msra.mxu0 0
    %2549 = vmatprep.subr.bf16.mxu0 0
    %2550 = vmatpush1.bf16.msra.mxu0 0
    %2551 = vmatprep.subr.bf16.mxu0 0
    %2552 = vmatpush1.bf16.msra.mxu0 0
    %2553 = vmatprep.subr.bf16.mxu0 0
    %2554 = vmatpush1.bf16.msra.mxu0 0
    %2555 = vmatprep.subr.bf16.mxu0 0
    %2556 = vmatpush1.bf16.msra.mxu0 0
    %2557 = vmatprep.subr.bf16.mxu0 0
    %2558 = vmatpush1.bf16.msra.mxu0 0
    %2559 = vmatprep.subr.bf16.mxu0 0
    %2560 = vmatpush1.bf16.msra.mxu0 0
    %2561 = vmatprep.subr.bf16.mxu0 0
    %2562 = vmatpush1.bf16.msra.mxu0 %v2545
    %2563 = vmatprep.subr.bf16.mxu0 0
    %2564 = vmatpush2.bf16.msra.mxu0 0
    %2565 = vmatprep.subr.bf16.mxu0 0
    %2566 = vmatpush2.bf16.msra.mxu0 0
    %2567 = vmatprep.subr.bf16.mxu0 0
    %2568 = vmatpush2.bf16.msra.mxu0 0
    %2569 = vmatprep.subr.bf16.mxu0 0
    %2570 = vmatpush2.bf16.msra.mxu0 0
    %2571 = vmatprep.subr.bf16.mxu0 0
    %2572 = vmatpush2.bf16.msra.mxu0 0
    %2573 = vmatprep.subr.bf16.mxu0 0
    %2574 = vmatpush2.bf16.msra.mxu0 0
    %2575 = vmatprep.subr.bf16.mxu0 0
    %2576 = vmatpush2.bf16.msra.mxu0 0
    %2577 = vmatprep.subr.bf16.mxu0 0
    %2578 = vmatpush2.bf16.msra.mxu0 0
    %2579 = vmatprep.mubr.bf16.mxu0 0
    %2580 = vmatmul.mubr.bf16.gmra.mxu0 %v2542
    %v2581 = vpop.f32.mrf.mxu0
    %v2582 = vadd.f32 0.0, %v2581
    %v2583 = vpop.f32.mrf.mxu0
    %v2584 = vpop.f32.mrf.mxu0
    %v2585 = vpop.f32.mrf.mxu0
    %2586 = vdwg.mxu0
    %v2588 = vsel %vm2009, %v2194, 0
    %v2591 = vsel %vm2221, %v2210, 0
    %2593 = vmatprep.subr.bf16.mxu0 0
    %2594 = vmatpush1.bf16.msra.mxu0 0
    %2595 = vmatprep.subr.bf16.mxu0 0
    %2596 = vmatpush1.bf16.msra.mxu0 0
    %2597 = vmatprep.subr.bf16.mxu0 0
    %2598 = vmatpush1.bf16.msra.mxu0 0
    %2599 = vmatprep.subr.bf16.mxu0 0
    %2600 = vmatpush1.bf16.msra.mxu0 0
    %2601 = vmatprep.subr.bf16.mxu0 0
    %2602 = vmatpush1.bf16.msra.mxu0 0
    %2603 = vmatprep.subr.bf16.mxu0 0
    %2604 = vmatpush1.bf16.msra.mxu0 0
    %2605 = vmatprep.subr.bf16.mxu0 0
    %2606 = vmatpush1.bf16.msra.mxu0 0
    %2607 = vmatprep.subr.bf16.mxu0 0
    %2608 = vmatpush1.bf16.msra.mxu0 %v2591
    %2609 = vmatprep.subr.bf16.mxu0 0
    %2610 = vmatpush2.bf16.msra.mxu0 0
    %2611 = vmatprep.subr.bf16.mxu0 0
    %2612 = vmatpush2.bf16.msra.mxu0 0
    %2613 = vmatprep.subr.bf16.mxu0 0
    %2614 = vmatpush2.bf16.msra.mxu0 0
    %2615 = vmatprep.subr.bf16.mxu0 0
    %2616 = vmatpush2.bf16.msra.mxu0 0
    %2617 = vmatprep.subr.bf16.mxu0 0
    %2618 = vmatpush2.bf16.msra.mxu0 0
    %2619 = vmatprep.subr.bf16.mxu0 0
    %2620 = vmatpush2.bf16.msra.mxu0 0
    %2621 = vmatprep.subr.bf16.mxu0 0
    %2622 = vmatpush2.bf16.msra.mxu0 0
    %2623 = vmatprep.subr.bf16.mxu0 0
    %2624 = vmatpush2.bf16.msra.mxu0 0
    %2625 = vmatprep.mubr.bf16.mxu0 0
    %2626 = vmatmul.mubr.bf16.gmra.mxu0 %v2588
    %v2627 = vpop.f32.mrf.mxu0
    %v2628 = vadd.f32 0.0, %v2627
    %v2629 = vpop.f32.mrf.mxu0
    %v2630 = vpop.f32.mrf.mxu0
    %v2631 = vpop.f32.mrf.mxu0
    %2632 = vdwg.mxu0
    %v2634 = vsel %vm2009, %v2195, 0
    %v2637 = vsel %vm2221, %v2211, 0
    %2639 = vmatprep.subr.bf16.mxu0 0
    %2640 = vmatpush1.bf16.msra.mxu0 0
    %2641 = vmatprep.subr.bf16.mxu0 0
    %2642 = vmatpush1.bf16.msra.mxu0 0
    %2643 = vmatprep.subr.bf16.mxu0 0
    %2644 = vmatpush1.bf16.msra.mxu0 0
    %2645 = vmatprep.subr.bf16.mxu0 0
    %2646 = vmatpush1.bf16.msra.mxu0 0
    %2647 = vmatprep.subr.bf16.mxu0 0
    %2648 = vmatpush1.bf16.msra.mxu0 0
    %2649 = vmatprep.subr.bf16.mxu0 0
    %2650 = vmatpush1.bf16.msra.mxu0 0
    %2651 = vmatprep.subr.bf16.mxu0 0
    %2652 = vmatpush1.bf16.msra.mxu0 0
    %2653 = vmatprep.subr.bf16.mxu0 0
    %2654 = vmatpush1.bf16.msra.mxu0 %v2637
    %2655 = vmatprep.subr.bf16.mxu0 0
    %2656 = vmatpush2.bf16.msra.mxu0 0
    %2657 = vmatprep.subr.bf16.mxu0 0
    %2658 = vmatpush2.bf16.msra.mxu0 0
    %2659 = vmatprep.subr.bf16.mxu0 0
    %2660 = vmatpush2.bf16.msra.mxu0 0
    %2661 = vmatprep.subr.bf16.mxu0 0
    %2662 = vmatpush2.bf16.msra.mxu0 0
    %2663 = vmatprep.subr.bf16.mxu0 0
    %2664 = vmatpush2.bf16.msra.mxu0 0
    %2665 = vmatprep.subr.bf16.mxu0 0
    %2666 = vmatpush2.bf16.msra.mxu0 0
    %2667 = vmatprep.subr.bf16.mxu0 0
    %2668 = vmatpush2.bf16.msra.mxu0 0
    %2669 = vmatprep.subr.bf16.mxu0 0
    %2670 = vmatpush2.bf16.msra.mxu0 0
    %2671 = vmatprep.mubr.bf16.mxu0 0
    %2672 = vmatmul.mubr.bf16.gmra.mxu0 %v2634
    %v2673 = vpop.f32.mrf.mxu0
    %v2674 = vadd.f32 0.0, %v2673
    %v2675 = vpop.f32.mrf.mxu0
    %v2676 = vpop.f32.mrf.mxu0
    %v2677 = vpop.f32.mrf.mxu0
    %2678 = vdwg.mxu0
    %v2680 = vsel %vm2009, %v2196, 0
    %v2683 = vsel %vm2221, %v2212, 0
    %2685 = vmatprep.subr.bf16.mxu0 0
    %2686 = vmatpush1.bf16.msra.mxu0 0
    %2687 = vmatprep.subr.bf16.mxu0 0
    %2688 = vmatpush1.bf16.msra.mxu0 0
    %2689 = vmatprep.subr.bf16.mxu0 0
    %2690 = vmatpush1.bf16.msra.mxu0 0
    %2691 = vmatprep.subr.bf16.mxu0 0
    %2692 = vmatpush1.bf16.msra.mxu0 0
    %2693 = vmatprep.subr.bf16.mxu0 0
    %2694 = vmatpush1.bf16.msra.mxu0 0
    %2695 = vmatprep.subr.bf16.mxu0 0
    %2696 = vmatpush1.bf16.msra.mxu0 0
    %2697 = vmatprep.subr.bf16.mxu0 0
    %2698 = vmatpush1.bf16.msra.mxu0 0
    %2699 = vmatprep.subr.bf16.mxu0 0
    %2700 = vmatpush1.bf16.msra.mxu0 %v2683
    %2701 = vmatprep.subr.bf16.mxu0 0
    %2702 = vmatpush2.bf16.msra.mxu0 0
    %2703 = vmatprep.subr.bf16.mxu0 0
    %2704 = vmatpush2.bf16.msra.mxu0 0
    %2705 = vmatprep.subr.bf16.mxu0 0
    %2706 = vmatpush2.bf16.msra.mxu0 0
    %2707 = vmatprep.subr.bf16.mxu0 0
    %2708 = vmatpush2.bf16.msra.mxu0 0
    %2709 = vmatprep.subr.bf16.mxu0 0
    %2710 = vmatpush2.bf16.msra.mxu0 0
    %2711 = vmatprep.subr.bf16.mxu0 0
    %2712 = vmatpush2.bf16.msra.mxu0 0
    %2713 = vmatprep.subr.bf16.mxu0 0
    %2714 = vmatpush2.bf16.msra.mxu0 0
    %2715 = vmatprep.subr.bf16.mxu0 0
    %2716 = vmatpush2.bf16.msra.mxu0 0
    %2717 = vmatprep.mubr.bf16.mxu0 0
    %2718 = vmatmul.mubr.bf16.gmra.mxu0 %v2680
    %v2719 = vpop.f32.mrf.mxu0
    %v2720 = vadd.f32 0.0, %v2719
    %v2721 = vpop.f32.mrf.mxu0
    %v2722 = vpop.f32.mrf.mxu0
    %v2723 = vpop.f32.mrf.mxu0
    %2724 = vdwg.mxu0
    %v2726 = vsel %vm2009, %v2197, 0
    %v2729 = vsel %vm2221, %v2213, 0
    %2731 = vmatprep.subr.bf16.mxu0 0
    %2732 = vmatpush1.bf16.msra.mxu0 0
    %2733 = vmatprep.subr.bf16.mxu0 0
    %2734 = vmatpush1.bf16.msra.mxu0 0
    %2735 = vmatprep.subr.bf16.mxu0 0
    %2736 = vmatpush1.bf16.msra.mxu0 0
    %2737 = vmatprep.subr.bf16.mxu0 0
    %2738 = vmatpush1.bf16.msra.mxu0 0
    %2739 = vmatprep.subr.bf16.mxu0 0
    %2740 = vmatpush1.bf16.msra.mxu0 0
    %2741 = vmatprep.subr.bf16.mxu0 0
    %2742 = vmatpush1.bf16.msra.mxu0 0
    %2743 = vmatprep.subr.bf16.mxu0 0
    %2744 = vmatpush1.bf16.msra.mxu0 0
    %2745 = vmatprep.subr.bf16.mxu0 0
    %2746 = vmatpush1.bf16.msra.mxu0 %v2729
    %2747 = vmatprep.subr.bf16.mxu0 0
    %2748 = vmatpush2.bf16.msra.mxu0 0
    %2749 = vmatprep.subr.bf16.mxu0 0
    %2750 = vmatpush2.bf16.msra.mxu0 0
    %2751 = vmatprep.subr.bf16.mxu0 0
    %2752 = vmatpush2.bf16.msra.mxu0 0
    %2753 = vmatprep.subr.bf16.mxu0 0
    %2754 = vmatpush2.bf16.msra.mxu0 0
    %2755 = vmatprep.subr.bf16.mxu0 0
    %2756 = vmatpush2.bf16.msra.mxu0 0
    %2757 = vmatprep.subr.bf16.mxu0 0
    %2758 = vmatpush2.bf16.msra.mxu0 0
    %2759 = vmatprep.subr.bf16.mxu0 0
    %2760 = vmatpush2.bf16.msra.mxu0 0
    %2761 = vmatprep.subr.bf16.mxu0 0
    %2762 = vmatpush2.bf16.msra.mxu0 0
    %2763 = vmatprep.mubr.bf16.mxu0 0
    %2764 = vmatmul.mubr.bf16.gmra.mxu0 %v2726
    %v2765 = vpop.f32.mrf.mxu0
    %v2766 = vadd.f32 0.0, %v2765
    %v2767 = vpop.f32.mrf.mxu0
    %v2768 = vpop.f32.mrf.mxu0
    %v2769 = vpop.f32.mrf.mxu0
    %2770 = vdwg.mxu0
    %v2772 = vsel %vm2009, %v2198, 0
    %v2775 = vsel %vm2221, %v2214, 0
    %2777 = vmatprep.subr.bf16.mxu0 0
    %2778 = vmatpush1.bf16.msra.mxu0 0
    %2779 = vmatprep.subr.bf16.mxu0 0
    %2780 = vmatpush1.bf16.msra.mxu0 0
    %2781 = vmatprep.subr.bf16.mxu0 0
    %2782 = vmatpush1.bf16.msra.mxu0 0
    %2783 = vmatprep.subr.bf16.mxu0 0
    %2784 = vmatpush1.bf16.msra.mxu0 0
    %2785 = vmatprep.subr.bf16.mxu0 0
    %2786 = vmatpush1.bf16.msra.mxu0 0
    %2787 = vmatprep.subr.bf16.mxu0 0
    %2788 = vmatpush1.bf16.msra.mxu0 0
    %2789 = vmatprep.subr.bf16.mxu0 0
    %2790 = vmatpush1.bf16.msra.mxu0 0
    %2791 = vmatprep.subr.bf16.mxu0 0
    %2792 = vmatpush1.bf16.msra.mxu0 %v2775
    %2793 = vmatprep.subr.bf16.mxu0 0
    %2794 = vmatpush2.bf16.msra.mxu0 0
    %2795 = vmatprep.subr.bf16.mxu0 0
    %2796 = vmatpush2.bf16.msra.mxu0 0
    %2797 = vmatprep.subr.bf16.mxu0 0
    %2798 = vmatpush2.bf16.msra.mxu0 0
    %2799 = vmatprep.subr.bf16.mxu0 0
    %2800 = vmatpush2.bf16.msra.mxu0 0
    %2801 = vmatprep.subr.bf16.mxu0 0
    %2802 = vmatpush2.bf16.msra.mxu0 0
    %2803 = vmatprep.subr.bf16.mxu0 0
    %2804 = vmatpush2.bf16.msra.mxu0 0
    %2805 = vmatprep.subr.bf16.mxu0 0
    %2806 = vmatpush2.bf16.msra.mxu0 0
    %2807 = vmatprep.subr.bf16.mxu0 0
    %2808 = vmatpush2.bf16.msra.mxu0 0
    %2809 = vmatprep.mubr.bf16.mxu0 0
    %2810 = vmatmul.mubr.bf16.gmra.mxu0 %v2772
    %v2811 = vpop.f32.mrf.mxu0
    %v2812 = vadd.f32 0.0, %v2811
    %v2813 = vpop.f32.mrf.mxu0
    %v2814 = vpop.f32.mrf.mxu0
    %v2815 = vpop.f32.mrf.mxu0
    %2816 = vdwg.mxu0
    %v2818 = vsel %vm2009, %v2199, 0
    %v2821 = vsel %vm2221, %v2215, 0
    %2823 = vmatprep.subr.bf16.mxu0 0
    %2824 = vmatpush1.bf16.msra.mxu0 0
    %2825 = vmatprep.subr.bf16.mxu0 0
    %2826 = vmatpush1.bf16.msra.mxu0 0
    %2827 = vmatprep.subr.bf16.mxu0 0
    %2828 = vmatpush1.bf16.msra.mxu0 0
    %2829 = vmatprep.subr.bf16.mxu0 0
    %2830 = vmatpush1.bf16.msra.mxu0 0
    %2831 = vmatprep.subr.bf16.mxu0 0
    %2832 = vmatpush1.bf16.msra.mxu0 0
    %2833 = vmatprep.subr.bf16.mxu0 0
    %2834 = vmatpush1.bf16.msra.mxu0 0
    %2835 = vmatprep.subr.bf16.mxu0 0
    %2836 = vmatpush1.bf16.msra.mxu0 0
    %2837 = vmatprep.subr.bf16.mxu0 0
    %2838 = vmatpush1.bf16.msra.mxu0 %v2821
    %2839 = vmatprep.subr.bf16.mxu0 0
    %2840 = vmatpush2.bf16.msra.mxu0 0
    %2841 = vmatprep.subr.bf16.mxu0 0
    %2842 = vmatpush2.bf16.msra.mxu0 0
    %2843 = vmatprep.subr.bf16.mxu0 0
    %2844 = vmatpush2.bf16.msra.mxu0 0
    %2845 = vmatprep.subr.bf16.mxu0 0
    %2846 = vmatpush2.bf16.msra.mxu0 0
    %2847 = vmatprep.subr.bf16.mxu0 0
    %2848 = vmatpush2.bf16.msra.mxu0 0
    %2849 = vmatprep.subr.bf16.mxu0 0
    %2850 = vmatpush2.bf16.msra.mxu0 0
    %2851 = vmatprep.subr.bf16.mxu0 0
    %2852 = vmatpush2.bf16.msra.mxu0 0
    %2853 = vmatprep.subr.bf16.mxu0 0
    %2854 = vmatpush2.bf16.msra.mxu0 0
    %2855 = vmatprep.mubr.bf16.mxu0 0
    %2856 = vmatmul.mubr.bf16.gmra.mxu0 %v2818
    %v2857 = vpop.f32.mrf.mxu0
    %v2858 = vadd.f32 0.0, %v2857
    %v2859 = vpop.f32.mrf.mxu0
    %v2860 = vpop.f32.mrf.mxu0
    %v2861 = vpop.f32.mrf.mxu0
    %2862 = vdwg.mxu0
    %v2864 = vsel %vm2009, %v2200, 0
    %v2867 = vsel %vm2221, %v2216, 0
    %2869 = vmatprep.subr.bf16.mxu0 0
    %2870 = vmatpush1.bf16.msra.mxu0 0
    %2871 = vmatprep.subr.bf16.mxu0 0
    %2872 = vmatpush1.bf16.msra.mxu0 0
    %2873 = vmatprep.subr.bf16.mxu0 0
    %2874 = vmatpush1.bf16.msra.mxu0 0
    %2875 = vmatprep.subr.bf16.mxu0 0
    %2876 = vmatpush1.bf16.msra.mxu0 0
    %2877 = vmatprep.subr.bf16.mxu0 0
    %2878 = vmatpush1.bf16.msra.mxu0 0
    %2879 = vmatprep.subr.bf16.mxu0 0
    %2880 = vmatpush1.bf16.msra.mxu0 0
    %2881 = vmatprep.subr.bf16.mxu0 0
    %2882 = vmatpush1.bf16.msra.mxu0 0
    %2883 = vmatprep.subr.bf16.mxu0 0
    %2884 = vmatpush1.bf16.msra.mxu0 %v2867
    %2885 = vmatprep.subr.bf16.mxu0 0
    %2886 = vmatpush2.bf16.msra.mxu0 0
    %2887 = vmatprep.subr.bf16.mxu0 0
    %2888 = vmatpush2.bf16.msra.mxu0 0
    %2889 = vmatprep.subr.bf16.mxu0 0
    %2890 = vmatpush2.bf16.msra.mxu0 0
    %2891 = vmatprep.subr.bf16.mxu0 0
    %2892 = vmatpush2.bf16.msra.mxu0 0
    %2893 = vmatprep.subr.bf16.mxu0 0
    %2894 = vmatpush2.bf16.msra.mxu0 0
    %2895 = vmatprep.subr.bf16.mxu0 0
    %2896 = vmatpush2.bf16.msra.mxu0 0
    %2897 = vmatprep.subr.bf16.mxu0 0
    %2898 = vmatpush2.bf16.msra.mxu0 0
    %2899 = vmatprep.subr.bf16.mxu0 0
    %2900 = vmatpush2.bf16.msra.mxu0 0
    %2901 = vmatprep.mubr.bf16.mxu0 0
    %2902 = vmatmul.mubr.bf16.gmra.mxu0 %v2864
    %v2903 = vpop.f32.mrf.mxu0
    %v2904 = vadd.f32 0.0, %v2903
    %v2905 = vpop.f32.mrf.mxu0
    %v2906 = vpop.f32.mrf.mxu0
    %v2907 = vpop.f32.mrf.mxu0
    %2908 = vdwg.mxu0
    %v2910 = vsel %vm2009, %v2201, 0
    %v2913 = vsel %vm2221, %v2217, 0
    %2915 = vmatprep.subr.bf16.mxu0 0
    %2916 = vmatpush1.bf16.msra.mxu0 0
    %2917 = vmatprep.subr.bf16.mxu0 0
    %2918 = vmatpush1.bf16.msra.mxu0 0
    %2919 = vmatprep.subr.bf16.mxu0 0
    %2920 = vmatpush1.bf16.msra.mxu0 0
    %2921 = vmatprep.subr.bf16.mxu0 0
    %2922 = vmatpush1.bf16.msra.mxu0 0
    %2923 = vmatprep.subr.bf16.mxu0 0
    %2924 = vmatpush1.bf16.msra.mxu0 0
    %2925 = vmatprep.subr.bf16.mxu0 0
    %2926 = vmatpush1.bf16.msra.mxu0 0
    %2927 = vmatprep.subr.bf16.mxu0 0
    %2928 = vmatpush1.bf16.msra.mxu0 0
    %2929 = vmatprep.subr.bf16.mxu0 0
    %2930 = vmatpush1.bf16.msra.mxu0 %v2913
    %2931 = vmatprep.subr.bf16.mxu0 0
    %2932 = vmatpush2.bf16.msra.mxu0 0
    %2933 = vmatprep.subr.bf16.mxu0 0
    %2934 = vmatpush2.bf16.msra.mxu0 0
    %2935 = vmatprep.subr.bf16.mxu0 0
    %2936 = vmatpush2.bf16.msra.mxu0 0
    %2937 = vmatprep.subr.bf16.mxu0 0
    %2938 = vmatpush2.bf16.msra.mxu0 0
    %2939 = vmatprep.subr.bf16.mxu0 0
    %2940 = vmatpush2.bf16.msra.mxu0 0
    %2941 = vmatprep.subr.bf16.mxu0 0
    %2942 = vmatpush2.bf16.msra.mxu0 0
    %2943 = vmatprep.subr.bf16.mxu0 0
    %2944 = vmatpush2.bf16.msra.mxu0 0
    %2945 = vmatprep.subr.bf16.mxu0 0
    %2946 = vmatpush2.bf16.msra.mxu0 0
    %2947 = vmatprep.mubr.bf16.mxu0 0
    %2948 = vmatmul.mubr.bf16.gmra.mxu0 %v2910
    %v2949 = vpop.f32.mrf.mxu0
    %v2950 = vadd.f32 0.0, %v2949
    %v2951 = vpop.f32.mrf.mxu0
    %v2952 = vpop.f32.mrf.mxu0
    %v2953 = vpop.f32.mrf.mxu0
    %2954 = vdwg.mxu0
    %2956 = vrot.lane.b32.xlu0 %v2306, 16
    %v2957 = vpop.permute.xlu0 %2956
    %2960 = vrot.lane.b32.xlu0 %v2352, 32
    %v2961 = vpop.permute.xlu0 %2960
    %2964 = vrot.lane.b32.xlu0 %v2398, 48
    %v2965 = vpop.permute.xlu0 %2964
    %2968 = vrot.lane.b32.xlu0 %v2444, 64
    %v2969 = vpop.permute.xlu0 %2968
    %2972 = vrot.lane.b32.xlu0 %v2490, 80
    %v2973 = vpop.permute.xlu0 %2972
    %2976 = vrot.lane.b32.xlu0 %v2536, 96
    %v2977 = vpop.permute.xlu0 %2976
    %2980 = vrot.lane.b32.xlu0 %v2582, 112
    %v2981 = vpop.permute.xlu0 %2980
    %v2983 = vsel %vm1272, %v2260, %v2957
    %vm2984 = vcmask 261120
    %v2985 = vsel %vm2984, %v2983, %v2961
    %vm2986 = vcmask 392192
    %v2987 = vsel %vm2986, %v2985, %v2965
    %vm2988 = vcmask 523264
    %v2989 = vsel %vm2988, %v2987, %v2969
    %vm2990 = vcmask 654336
    %v2991 = vsel %vm2990, %v2989, %v2973
    %vm2992 = vcmask 785408
    %v2993 = vsel %vm2992, %v2991, %v2977
    %vm2994 = vcmask 916480
    %v2995 = vsel %vm2994, %v2993, %v2981
    %2997 = vrot.lane.b32.xlu0 %v2674, 16
    %v2998 = vpop.permute.xlu0 %2997
    %3001 = vrot.lane.b32.xlu0 %v2720, 32
    %v3002 = vpop.permute.xlu0 %3001
    %3005 = vrot.lane.b32.xlu0 %v2766, 48
    %v3006 = vpop.permute.xlu0 %3005
    %3009 = vrot.lane.b32.xlu0 %v2812, 64
    %v3010 = vpop.permute.xlu0 %3009
    %3013 = vrot.lane.b32.xlu0 %v2858, 80
    %v3014 = vpop.permute.xlu0 %3013
    %3017 = vrot.lane.b32.xlu0 %v2904, 96
    %v3018 = vpop.permute.xlu0 %3017
    %3021 = vrot.lane.b32.xlu0 %v2950, 112
    %v3022 = vpop.permute.xlu0 %3021
    %v3024 = vsel %vm1272, %v2628, %v2998
    %v3025 = vsel %vm2984, %v3024, %v3002
    %v3026 = vsel %vm2986, %v3025, %v3006
    %v3027 = vsel %vm2988, %v3026, %v3010
    %v3028 = vsel %vm2990, %v3027, %v3014
    %v3029 = vsel %vm2992, %v3028, %v3018
    %v3030 = vsel %vm2994, %v3029, %v3022
    %s3031 = smul.u32 %s842, 1
    %s3032 = sshll.u32 %s3031, 4
    %3033 = dma.done %s264, %s3032
    %v3034 = vld [vmem:[#allocation3] sm:$0xf]
    %v3035 = vld [vmem:[#allocation3 + $0x4] sm:$0xf]
    %v3036 = vld [vmem:[#allocation3 + $0x8] sm:$0xf]
    %v3037 = vld [vmem:[#allocation3 + $0xc] sm:$0xf]
    %v3038 = vld [vmem:[#allocation3 + $0x10] sm:$0xf]
    %v3039 = vld [vmem:[#allocation3 + $0x14] sm:$0xf]
    %v3040 = vld [vmem:[#allocation3 + $0x18] sm:$0xf]
    %v3041 = vld [vmem:[#allocation3 + $0x1c] sm:$0xf]
    %v3042 = vld [vmem:[#allocation3 + $0x20] sm:$0xf]
    %v3043 = vld [vmem:[#allocation3 + $0x24] sm:$0xf]
    %v3044 = vld [vmem:[#allocation3 + $0x28] sm:$0xf]
    %v3045 = vld [vmem:[#allocation3 + $0x2c] sm:$0xf]
    %v3046 = vld [vmem:[#allocation3 + $0x30] sm:$0xf]
    %v3047 = vld [vmem:[#allocation3 + $0x34] sm:$0xf]
    %v3048 = vld [vmem:[#allocation3 + $0x38] sm:$0xf]
    %v3049 = vld [vmem:[#allocation3 + $0x3c] sm:$0xf]
    %v3050 = vpack.c.bf16 %v3030, %v2995
    %v3051 = vld [vmem:[#allocation17] sm:$0x1]
    %v3053 = vlaneseq
    %v3054 = vshrl.u32 %v3053, 7
    %v3055 = vsub.s32 0, %v3054
    %v3056 = vrot.slane %v3051, %v3055
    %v3074 = vunpack.c.l.b16 %v3034
    %v3075 = vunpack.c.l.b16 %v3035
    %v3076 = vunpack.c.l.b16 %v3036
    %v3077 = vunpack.c.l.b16 %v3037
    %v3078 = vunpack.c.l.b16 %v3038
    %v3079 = vunpack.c.l.b16 %v3039
    %v3080 = vunpack.c.l.b16 %v3040
    %v3081 = vunpack.c.l.b16 %v3041
    %v3082 = vunpack.c.l.b16 %v3042
    %v3083 = vunpack.c.l.b16 %v3043
    %v3084 = vunpack.c.l.b16 %v3044
    %v3085 = vunpack.c.l.b16 %v3045
    %v3086 = vunpack.c.l.b16 %v3046
    %v3087 = vunpack.c.l.b16 %v3047
    %v3088 = vunpack.c.l.b16 %v3048
    %v3089 = vunpack.c.l.b16 %v3049
    %v3090 = vpack.c.b16 %v3075, %v3074
    %v3091 = vpack.c.b16 %v3077, %v3076
    %v3092 = vpack.c.b16 %v3079, %v3078
    %v3093 = vpack.c.b16 %v3081, %v3080
    %v3094 = vpack.c.b16 %v3083, %v3082
    %v3095 = vpack.c.b16 %v3085, %v3084
    %v3096 = vpack.c.b16 %v3087, %v3086
    %v3097 = vpack.c.b16 %v3089, %v3088
    %3106 = vmatprep.subr.bf16.mxu0 0
    %3107 = vmatpush1.bf16.msra.mxu0 %v3097
    %3108 = vmatprep.subr.bf16.mxu0 0
    %3109 = vmatpush1.bf16.msra.mxu0 %v3096
    %3110 = vmatprep.subr.bf16.mxu0 0
    %3111 = vmatpush1.bf16.msra.mxu0 %v3095
    %3112 = vmatprep.subr.bf16.mxu0 0
    %3113 = vmatpush1.bf16.msra.mxu0 %v3094
    %3114 = vmatprep.subr.bf16.mxu0 0
    %3115 = vmatpush1.bf16.msra.mxu0 %v3093
    %3116 = vmatprep.subr.bf16.mxu0 0
    %3117 = vmatpush1.bf16.msra.mxu0 %v3092
    %3118 = vmatprep.subr.bf16.mxu0 0
    %3119 = vmatpush1.bf16.msra.mxu0 %v3091
    %3120 = vmatprep.subr.bf16.mxu0 0
    %3121 = vmatpush1.bf16.msra.mxu0 %v3090
    %3122 = vmatprep.subr.bf16.mxu0 0
    %3123 = vmatpush2.bf16.msra.mxu0 0
    %3124 = vmatprep.subr.bf16.mxu0 0
    %3125 = vmatpush2.bf16.msra.mxu0 0
    %3126 = vmatprep.subr.bf16.mxu0 0
    %3127 = vmatpush2.bf16.msra.mxu0 0
    %3128 = vmatprep.subr.bf16.mxu0 0
    %3129 = vmatpush2.bf16.msra.mxu0 0
    %3130 = vmatprep.subr.bf16.mxu0 0
    %3131 = vmatpush2.bf16.msra.mxu0 0
    %3132 = vmatprep.subr.bf16.mxu0 0
    %3133 = vmatpush2.bf16.msra.mxu0 0
    %3134 = vmatprep.subr.bf16.mxu0 0
    %3135 = vmatpush2.bf16.msra.mxu0 0
    %3136 = vmatprep.subr.bf16.mxu0 0
    %3137 = vmatpush2.bf16.msra.mxu0 0
    %3138 = vmatprep.mubr.bf16.mxu0 0
    %3139 = vmatmul.mubr.bf16.gmra.mxu0 %v3050
    %v3140 = vpop.f32.mrf.mxu0
    %v3141 = vadd.f32 %v3056, %v3140
    %v3142 = vpop.f32.mrf.mxu0
    %v3143 = vpop.f32.mrf.mxu0
    %v3144 = vadd.f32 %v3056, %v3143
    %v3145 = vpop.f32.mrf.mxu0
    %3146 = vdwg.mxu0
    %v3147 = vadd.f32 %v840, %v3141
    %v3148 = vadd.f32 %v841, %v3144
    %v3149 = vld [vmem:[#allocation19] sm:$0x1]
    %v3150 = vld [vmem:[#allocation20] sm:$0x1]
    %3151 = vadd.xlane.f32.xlu0 %v3147
    %v3152 = vpop.xlane.xlu0 %3151
    %3153 = vadd.xlane.f32.xlu0 %v3148
    %v3154 = vpop.xlane.xlu0 %3153
    %v3155 = vrcp.pop 128.0
    %v3156 = vmul.f32 %v3152, %v3155
    %v3157 = vmul.f32 %v3154, %v3155
    %v3158 = vsub.f32 %v3147, %v3156
    %v3159 = vsub.f32 %v3148, %v3157
    %v3160 = vmul.f32 %v3158, %v3158
    %v3161 = vmul.f32 %v3159, %v3159
    %3162 = vadd.xlane.f32.xlu0 %v3160
    %v3163 = vpop.xlane.xlu0 %3162
    %3164 = vadd.xlane.f32.xlu0 %v3161
    %v3165 = vpop.xlane.xlu0 %3164
    %v3166 = vmul.f32 %v3163, %v3155
    %v3167 = vmul.f32 %v3165, %v3155
    %v3168 = vadd.f32 %v3166, 1e-05
    %v3169 = vadd.f32 %v3167, 1e-05
    %v3170 = vrsqrt.pop %v3168
    %v3171 = vrsqrt.pop %v3169
    %v3172 = vmul.f32 %v3158, %v3170
    %v3173 = vmul.f32 %v3159, %v3171
    %v3175 = vlaneseq
    %v3176 = vshrl.u32 %v3175, 7
    %v3177 = vsub.s32 0, %v3176
    %v3178 = vrot.slane %v3149, %v3177
    %v3180 = vmul.f32 %v3172, %v3178
    %v3181 = vmul.f32 %v3173, %v3178
    %v3183 = vlaneseq
    %v3184 = vshrl.u32 %v3183, 7
    %v3185 = vsub.s32 0, %v3184
    %v3186 = vrot.slane %v3150, %v3185
    %v3188 = vadd.f32 %v3180, %v3186
    %v3189 = vadd.f32 %v3181, %v3186
    %s3190 = smul.u32 %s842, 4
    %s3191 = sshll.u32 %s3190, 4
    %3192 = dma.done %s322, %s3191
    %v3193 = vld [vmem:[#allocation4] sm:$0xff]
    %v3194 = vld [vmem:[#allocation4 + $0x8] sm:$0xff]
    %v3195 = vld [vmem:[#allocation4 + $0x10] sm:$0xff]
    %v3196 = vld [vmem:[#allocation4 + $0x18] sm:$0xff]
    %v3197 = vld [vmem:[#allocation4 + $0x20] sm:$0xff]
    %v3198 = vld [vmem:[#allocation4 + $0x28] sm:$0xff]
    %v3199 = vld [vmem:[#allocation4 + $0x30] sm:$0xff]
    %v3200 = vld [vmem:[#allocation4 + $0x38] sm:$0xff]
    %v3201 = vld [vmem:[#allocation4 + $0x40] sm:$0xff]
    %v3202 = vld [vmem:[#allocation4 + $0x48] sm:$0xff]
    %v3203 = vld [vmem:[#allocation4 + $0x50] sm:$0xff]
    %v3204 = vld [vmem:[#allocation4 + $0x58] sm:$0xff]
    %v3205 = vld [vmem:[#allocation4 + $0x60] sm:$0xff]
    %v3206 = vld [vmem:[#allocation4 + $0x68] sm:$0xff]
    %v3207 = vld [vmem:[#allocation4 + $0x70] sm:$0xff]
    %v3208 = vld [vmem:[#allocation4 + $0x78] sm:$0xff]
    %v3209 = vld [vmem:[#allocation4 + $0x80] sm:$0xff]
    %v3210 = vld [vmem:[#allocation4 + $0x88] sm:$0xff]
    %v3211 = vld [vmem:[#allocation4 + $0x90] sm:$0xff]
    %v3212 = vld [vmem:[#allocation4 + $0x98] sm:$0xff]
    %v3213 = vld [vmem:[#allocation4 + $0xa0] sm:$0xff]
    %v3214 = vld [vmem:[#allocation4 + $0xa8] sm:$0xff]
    %v3215 = vld [vmem:[#allocation4 + $0xb0] sm:$0xff]
    %v3216 = vld [vmem:[#allocation4 + $0xb8] sm:$0xff]
    %v3217 = vld [vmem:[#allocation4 + $0xc0] sm:$0xff]
    %v3218 = vld [vmem:[#allocation4 + $0xc8] sm:$0xff]
    %v3219 = vld [vmem:[#allocation4 + $0xd0] sm:$0xff]
    %v3220 = vld [vmem:[#allocation4 + $0xd8] sm:$0xff]
    %v3221 = vld [vmem:[#allocation4 + $0xe0] sm:$0xff]
    %v3222 = vld [vmem:[#allocation4 + $0xe8] sm:$0xff]
    %v3223 = vld [vmem:[#allocation4 + $0xf0] sm:$0xff]
    %v3224 = vld [vmem:[#allocation4 + $0xf8] sm:$0xff]
    %v3225 = vpack.c.bf16 %v3189, %v3188
    %v3226 = vld [vmem:[#allocation22] sm:$0xf]
    %v3228 = vlaneseq
    %v3229 = vshrl.u32 %v3228, 7
    %v3230 = vsub.s32 0, %v3229
    %v3231 = vrot.slane %v3226, %v3230
    %v3232 = vlaneseq
    %v3233 = vshrl.u32 %v3232, 7
    %v3234 = vsub.s32 1, %v3233
    %v3235 = vrot.slane %v3226, %v3234
    %v3236 = vlaneseq
    %v3237 = vshrl.u32 %v3236, 7
    %v3238 = vsub.s32 2, %v3237
    %v3239 = vrot.slane %v3226, %v3238
    %v3240 = vlaneseq
    %v3241 = vshrl.u32 %v3240, 7
    %v3242 = vsub.s32 3, %v3241
    %v3243 = vrot.slane %v3226, %v3242
    %v3280 = vunpack.c.l.b16 %v3193
    %v3281 = vunpack.c.h.b16 %v3193
    %v3282 = vunpack.c.l.b16 %v3194
    %v3283 = vunpack.c.h.b16 %v3194
    %v3284 = vunpack.c.l.b16 %v3195
    %v3285 = vunpack.c.h.b16 %v3195
    %v3286 = vunpack.c.l.b16 %v3196
    %v3287 = vunpack.c.h.b16 %v3196
    %v3288 = vunpack.c.l.b16 %v3197
    %v3289 = vunpack.c.h.b16 %v3197
    %v3290 = vunpack.c.l.b16 %v3198
    %v3291 = vunpack.c.h.b16 %v3198
    %v3292 = vunpack.c.l.b16 %v3199
    %v3293 = vunpack.c.h.b16 %v3199
    %v3294 = vunpack.c.l.b16 %v3200
    %v3295 = vunpack.c.h.b16 %v3200
    %v3296 = vunpack.c.l.b16 %v3201
    %v3297 = vunpack.c.h.b16 %v3201
    %v3298 = vunpack.c.l.b16 %v3202
    %v3299 = vunpack.c.h.b16 %v3202
    %v3300 = vunpack.c.l.b16 %v3203
    %v3301 = vunpack.c.h.b16 %v3203
    %v3302 = vunpack.c.l.b16 %v3204
    %v3303 = vunpack.c.h.b16 %v3204
    %v3304 = vunpack.c.l.b16 %v3205
    %v3305 = vunpack.c.h.b16 %v3205
    %v3306 = vunpack.c.l.b16 %v3206
    %v3307 = vunpack.c.h.b16 %v3206
    %v3308 = vunpack.c.l.b16 %v3207
    %v3309 = vunpack.c.h.b16 %v3207
    %v3310 = vunpack.c.l.b16 %v3208
    %v3311 = vunpack.c.h.b16 %v3208
    %v3312 = vunpack.c.l.b16 %v3209
    %v3313 = vunpack.c.h.b16 %v3209
    %v3314 = vunpack.c.l.b16 %v3210
    %v3315 = vunpack.c.h.b16 %v3210
    %v3316 = vunpack.c.l.b16 %v3211
    %v3317 = vunpack.c.h.b16 %v3211
    %v3318 = vunpack.c.l.b16 %v3212
    %v3319 = vunpack.c.h.b16 %v3212
    %v3320 = vunpack.c.l.b16 %v3213
    %v3321 = vunpack.c.h.b16 %v3213
    %v3322 = vunpack.c.l.b16 %v3214
    %v3323 = vunpack.c.h.b16 %v3214
    %v3324 = vunpack.c.l.b16 %v3215
    %v3325 = vunpack.c.h.b16 %v3215
    %v3326 = vunpack.c.l.b16 %v3216
    %v3327 = vunpack.c.h.b16 %v3216
    %v3328 = vunpack.c.l.b16 %v3217
    %v3329 = vunpack.c.h.b16 %v3217
    %v3330 = vunpack.c.l.b16 %v3218
    %v3331 = vunpack.c.h.b16 %v3218
    %v3332 = vunpack.c.l.b16 %v3219
    %v3333 = vunpack.c.h.b16 %v3219
    %v3334 = vunpack.c.l.b16 %v3220
    %v3335 = vunpack.c.h.b16 %v3220
    %v3336 = vunpack.c.l.b16 %v3221
    %v3337 = vunpack.c.h.b16 %v3221
    %v3338 = vunpack.c.l.b16 %v3222
    %v3339 = vunpack.c.h.b16 %v3222
    %v3340 = vunpack.c.l.b16 %v3223
    %v3341 = vunpack.c.h.b16 %v3223
    %v3342 = vunpack.c.l.b16 %v3224
    %v3343 = vunpack.c.h.b16 %v3224
    %v3344 = vpack.c.b16 %v3284, %v3280
    %v3345 = vpack.c.b16 %v3285, %v3281
    %v3346 = vpack.c.b16 %v3286, %v3282
    %v3347 = vpack.c.b16 %v3287, %v3283
    %v3348 = vpack.c.b16 %v3292, %v3288
    %v3349 = vpack.c.b16 %v3293, %v3289
    %v3350 = vpack.c.b16 %v3294, %v3290
    %v3351 = vpack.c.b16 %v3295, %v3291
    %v3352 = vpack.c.b16 %v3300, %v3296
    %v3353 = vpack.c.b16 %v3301, %v3297
    %v3354 = vpack.c.b16 %v3302, %v3298
    %v3355 = vpack.c.b16 %v3303, %v3299
    %v3356 = vpack.c.b16 %v3308, %v3304
    %v3357 = vpack.c.b16 %v3309, %v3305
    %v3358 = vpack.c.b16 %v3310, %v3306
    %v3359 = vpack.c.b16 %v3311, %v3307
    %v3360 = vpack.c.b16 %v3316, %v3312
    %v3361 = vpack.c.b16 %v3317, %v3313
    %v3362 = vpack.c.b16 %v3318, %v3314
    %v3363 = vpack.c.b16 %v3319, %v3315
    %v3364 = vpack.c.b16 %v3324, %v3320
    %v3365 = vpack.c.b16 %v3325, %v3321
    %v3366 = vpack.c.b16 %v3326, %v3322
    %v3367 = vpack.c.b16 %v3327, %v3323
    %v3368 = vpack.c.b16 %v3332, %v3328
    %v3369 = vpack.c.b16 %v3333, %v3329
    %v3370 = vpack.c.b16 %v3334, %v3330
    %v3371 = vpack.c.b16 %v3335, %v3331
    %v3372 = vpack.c.b16 %v3340, %v3336
    %v3373 = vpack.c.b16 %v3341, %v3337
    %v3374 = vpack.c.b16 %v3342, %v3338
    %v3375 = vpack.c.b16 %v3343, %v3339
    %3408 = vmatprep.subr.bf16.mxu0 %v3373
    %3409 = vmatpush1.bf16.msra.mxu0 %v3372
    %3410 = vmatprep.subr.bf16.mxu0 %v3369
    %3411 = vmatpush1.bf16.msra.mxu0 %v3368
    %3412 = vmatprep.subr.bf16.mxu0 %v3365
    %3413 = vmatpush1.bf16.msra.mxu0 %v3364
    %3414 = vmatprep.subr.bf16.mxu0 %v3361
    %3415 = vmatpush1.bf16.msra.mxu0 %v3360
    %3416 = vmatprep.subr.bf16.mxu0 %v3357
    %3417 = vmatpush1.bf16.msra.mxu0 %v3356
    %3418 = vmatprep.subr.bf16.mxu0 %v3353
    %3419 = vmatpush1.bf16.msra.mxu0 %v3352
    %3420 = vmatprep.subr.bf16.mxu0 %v3349
    %3421 = vmatpush1.bf16.msra.mxu0 %v3348
    %3422 = vmatprep.subr.bf16.mxu0 %v3345
    %3423 = vmatpush1.bf16.msra.mxu0 %v3344
    %3424 = vmatprep.subr.bf16.mxu0 0
    %3425 = vmatpush2.bf16.msra.mxu0 0
    %3426 = vmatprep.subr.bf16.mxu0 0
    %3427 = vmatpush2.bf16.msra.mxu0 0
    %3428 = vmatprep.subr.bf16.mxu0 0
    %3429 = vmatpush2.bf16.msra.mxu0 0
    %3430 = vmatprep.subr.bf16.mxu0 0
    %3431 = vmatpush2.bf16.msra.mxu0 0
    %3432 = vmatprep.subr.bf16.mxu0 0
    %3433 = vmatpush2.bf16.msra.mxu0 0
    %3434 = vmatprep.subr.bf16.mxu0 0
    %3435 = vmatpush2.bf16.msra.mxu0 0
    %3436 = vmatprep.subr.bf16.mxu0 0
    %3437 = vmatpush2.bf16.msra.mxu0 0
    %3438 = vmatprep.subr.bf16.mxu0 0
    %3439 = vmatpush2.bf16.msra.mxu0 0
    %3440 = vmatprep.mubr.bf16.mxu0 0
    %3441 = vmatmul.mubr.bf16.gmra.mxu0 %v3225
    %v3442 = vpop.f32.mrf.mxu0
    %v3443 = vadd.f32 %v3231, %v3442
    %v3444 = vpop.f32.mrf.mxu0
    %v3445 = vadd.f32 %v3235, %v3444
    %v3446 = vpop.f32.mrf.mxu0
    %v3447 = vadd.f32 %v3231, %v3446
    %v3448 = vpop.f32.mrf.mxu0
    %v3449 = vadd.f32 %v3235, %v3448
    %3450 = vdwg.mxu0
    %3451 = vmatprep.subr.bf16.mxu0 %v3375
    %3452 = vmatpush1.bf16.msra.mxu0 %v3374
    %3453 = vmatprep.subr.bf16.mxu0 %v3371
    %3454 = vmatpush1.bf16.msra.mxu0 %v3370
    %3455 = vmatprep.subr.bf16.mxu0 %v3367
    %3456 = vmatpush1.bf16.msra.mxu0 %v3366
    %3457 = vmatprep.subr.bf16.mxu0 %v3363
    %3458 = vmatpush1.bf16.msra.mxu0 %v3362
    %3459 = vmatprep.subr.bf16.mxu0 %v3359
    %3460 = vmatpush1.bf16.msra.mxu0 %v3358
    %3461 = vmatprep.subr.bf16.mxu0 %v3355
    %3462 = vmatpush1.bf16.msra.mxu0 %v3354
    %3463 = vmatprep.subr.bf16.mxu0 %v3351
    %3464 = vmatpush1.bf16.msra.mxu0 %v3350
    %3465 = vmatprep.subr.bf16.mxu0 %v3347
    %3466 = vmatpush1.bf16.msra.mxu0 %v3346
    %3467 = vmatprep.subr.bf16.mxu0 0
    %3468 = vmatpush2.bf16.msra.mxu0 0
    %3469 = vmatprep.subr.bf16.mxu0 0
    %3470 = vmatpush2.bf16.msra.mxu0 0
    %3471 = vmatprep.subr.bf16.mxu0 0
    %3472 = vmatpush2.bf16.msra.mxu0 0
    %3473 = vmatprep.subr.bf16.mxu0 0
    %3474 = vmatpush2.bf16.msra.mxu0 0
    %3475 = vmatprep.subr.bf16.mxu0 0
    %3476 = vmatpush2.bf16.msra.mxu0 0
    %3477 = vmatprep.subr.bf16.mxu0 0
    %3478 = vmatpush2.bf16.msra.mxu0 0
    %3479 = vmatprep.subr.bf16.mxu0 0
    %3480 = vmatpush2.bf16.msra.mxu0 0
    %3481 = vmatprep.subr.bf16.mxu0 0
    %3482 = vmatpush2.bf16.msra.mxu0 0
    %3483 = vmatprep.mubr.bf16.mxu0 0
    %3484 = vmatmul.mubr.bf16.gmra.mxu0 %v3225
    %v3485 = vpop.f32.mrf.mxu0
    %v3486 = vadd.f32 %v3239, %v3485
    %v3487 = vpop.f32.mrf.mxu0
    %v3488 = vadd.f32 %v3243, %v3487
    %v3489 = vpop.f32.mrf.mxu0
    %v3490 = vadd.f32 %v3239, %v3489
    %v3491 = vpop.f32.mrf.mxu0
    %v3492 = vadd.f32 %v3243, %v3491
    %3493 = vdwg.mxu0
    %v3494 = vmax.f32 %v3443, 0.0
    %v3495 = vmax.f32 %v3445, 0.0
    %v3496 = vmax.f32 %v3486, 0.0
    %v3497 = vmax.f32 %v3488, 0.0
    %v3498 = vmax.f32 %v3447, 0.0
    %v3499 = vmax.f32 %v3449, 0.0
    %v3500 = vmax.f32 %v3490, 0.0
    %v3501 = vmax.f32 %v3492, 0.0
    %s3502 = smul.u32 4, 64
    %s3503 = smul.u32 %s3502, 1
    %s3504 = sshll.u32 %s3503, 4
    %3505 = dma.done %s334, %s3504
    %v3506 = vld [vmem:[#allocation5] sm:$0xf]
    %v3507 = vld [vmem:[#allocation5 + $0x4] sm:$0xf]
    %v3508 = vld [vmem:[#allocation5 + $0x8] sm:$0xf]
    %v3509 = vld [vmem:[#allocation5 + $0xc] sm:$0xf]
    %v3510 = vld [vmem:[#allocation5 + $0x10] sm:$0xf]
    %v3511 = vld [vmem:[#allocation5 + $0x14] sm:$0xf]
    %v3512 = vld [vmem:[#allocation5 + $0x18] sm:$0xf]
    %v3513 = vld [vmem:[#allocation5 + $0x1c] sm:$0xf]
    %v3514 = vld [vmem:[#allocation5 + $0x20] sm:$0xf]
    %v3515 = vld [vmem:[#allocation5 + $0x24] sm:$0xf]
    %v3516 = vld [vmem:[#allocation5 + $0x28] sm:$0xf]
    %v3517 = vld [vmem:[#allocation5 + $0x2c] sm:$0xf]
    %v3518 = vld [vmem:[#allocation5 + $0x30] sm:$0xf]
    %v3519 = vld [vmem:[#allocation5 + $0x34] sm:$0xf]
    %v3520 = vld [vmem:[#allocation5 + $0x38] sm:$0xf]
    %v3521 = vld [vmem:[#allocation5 + $0x3c] sm:$0xf]
    %v3522 = vld [vmem:[#allocation5 + $0x40] sm:$0xf]
    %v3523 = vld [vmem:[#allocation5 + $0x44] sm:$0xf]
    %v3524 = vld [vmem:[#allocation5 + $0x48] sm:$0xf]
    %v3525 = vld [vmem:[#allocation5 + $0x4c] sm:$0xf]
    %v3526 = vld [vmem:[#allocation5 + $0x50] sm:$0xf]
    %v3527 = vld [vmem:[#allocation5 + $0x54] sm:$0xf]
    %v3528 = vld [vmem:[#allocation5 + $0x58] sm:$0xf]
    %v3529 = vld [vmem:[#allocation5 + $0x5c] sm:$0xf]
    %v3530 = vld [vmem:[#allocation5 + $0x60] sm:$0xf]
    %v3531 = vld [vmem:[#allocation5 + $0x64] sm:$0xf]
    %v3532 = vld [vmem:[#allocation5 + $0x68] sm:$0xf]
    %v3533 = vld [vmem:[#allocation5 + $0x6c] sm:$0xf]
    %v3534 = vld [vmem:[#allocation5 + $0x70] sm:$0xf]
    %v3535 = vld [vmem:[#allocation5 + $0x74] sm:$0xf]
    %v3536 = vld [vmem:[#allocation5 + $0x78] sm:$0xf]
    %v3537 = vld [vmem:[#allocation5 + $0x7c] sm:$0xf]
    %v3538 = vld [vmem:[#allocation5 + $0x80] sm:$0xf]
    %v3539 = vld [vmem:[#allocation5 + $0x84] sm:$0xf]
    %v3540 = vld [vmem:[#allocation5 + $0x88] sm:$0xf]
    %v3541 = vld [vmem:[#allocation5 + $0x8c] sm:$0xf]
    %v3542 = vld [vmem:[#allocation5 + $0x90] sm:$0xf]
    %v3543 = vld [vmem:[#allocation5 + $0x94] sm:$0xf]
    %v3544 = vld [vmem:[#allocation5 + $0x98] sm:$0xf]
    %v3545 = vld [vmem:[#allocation5 + $0x9c] sm:$0xf]
    %v3546 = vld [vmem:[#allocation5 + $0xa0] sm:$0xf]
    %v3547 = vld [vmem:[#allocation5 + $0xa4] sm:$0xf]
    %v3548 = vld [vmem:[#allocation5 + $0xa8] sm:$0xf]
    %v3549 = vld [vmem:[#allocation5 + $0xac] sm:$0xf]
    %v3550 = vld [vmem:[#allocation5 + $0xb0] sm:$0xf]
    %v3551 = vld [vmem:[#allocation5 + $0xb4] sm:$0xf]
    %v3552 = vld [vmem:[#allocation5 + $0xb8] sm:$0xf]
    %v3553 = vld [vmem:[#allocation5 + $0xbc] sm:$0xf]
    %v3554 = vld [vmem:[#allocation5 + $0xc0] sm:$0xf]
    %v3555 = vld [vmem:[#allocation5 + $0xc4] sm:$0xf]
    %v3556 = vld [vmem:[#allocation5 + $0xc8] sm:$0xf]
    %v3557 = vld [vmem:[#allocation5 + $0xcc] sm:$0xf]
    %v3558 = vld [vmem:[#allocation5 + $0xd0] sm:$0xf]
    %v3559 = vld [vmem:[#allocation5 + $0xd4] sm:$0xf]
    %v3560 = vld [vmem:[#allocation5 + $0xd8] sm:$0xf]
    %v3561 = vld [vmem:[#allocation5 + $0xdc] sm:$0xf]
    %v3562 = vld [vmem:[#allocation5 + $0xe0] sm:$0xf]
    %v3563 = vld [vmem:[#allocation5 + $0xe4] sm:$0xf]
    %v3564 = vld [vmem:[#allocation5 + $0xe8] sm:$0xf]
    %v3565 = vld [vmem:[#allocation5 + $0xec] sm:$0xf]
    %v3566 = vld [vmem:[#allocation5 + $0xf0] sm:$0xf]
    %v3567 = vld [vmem:[#allocation5 + $0xf4] sm:$0xf]
    %v3568 = vld [vmem:[#allocation5 + $0xf8] sm:$0xf]
    %v3569 = vld [vmem:[#allocation5 + $0xfc] sm:$0xf]
    %v3570 = vpack.c.bf16 %v3498, %v3494
    %v3571 = vpack.c.bf16 %v3499, %v3495
    %v3572 = vpack.c.bf16 %v3500, %v3496
    %v3573 = vpack.c.bf16 %v3501, %v3497
    %v3574 = vld [vmem:[#allocation23] sm:$0x1]
    %v3576 = vlaneseq
    %v3577 = vshrl.u32 %v3576, 7
    %v3578 = vsub.s32 0, %v3577
    %v3579 = vrot.slane %v3574, %v3578
    %v3645 = vunpack.c.l.b16 %v3506
    %v3646 = vunpack.c.l.b16 %v3507
    %v3647 = vunpack.c.l.b16 %v3508
    %v3648 = vunpack.c.l.b16 %v3509
    %v3649 = vunpack.c.l.b16 %v3510
    %v3650 = vunpack.c.l.b16 %v3511
    %v3651 = vunpack.c.l.b16 %v3512
    %v3652 = vunpack.c.l.b16 %v3513
    %v3653 = vunpack.c.l.b16 %v3514
    %v3654 = vunpack.c.l.b16 %v3515
    %v3655 = vunpack.c.l.b16 %v3516
    %v3656 = vunpack.c.l.b16 %v3517
    %v3657 = vunpack.c.l.b16 %v3518
    %v3658 = vunpack.c.l.b16 %v3519
    %v3659 = vunpack.c.l.b16 %v3520
    %v3660 = vunpack.c.l.b16 %v3521
    %v3661 = vunpack.c.l.b16 %v3522
    %v3662 = vunpack.c.l.b16 %v3523
    %v3663 = vunpack.c.l.b16 %v3524
    %v3664 = vunpack.c.l.b16 %v3525
    %v3665 = vunpack.c.l.b16 %v3526
    %v3666 = vunpack.c.l.b16 %v3527
    %v3667 = vunpack.c.l.b16 %v3528
    %v3668 = vunpack.c.l.b16 %v3529
    %v3669 = vunpack.c.l.b16 %v3530
    %v3670 = vunpack.c.l.b16 %v3531
    %v3671 = vunpack.c.l.b16 %v3532
    %v3672 = vunpack.c.l.b16 %v3533
    %v3673 = vunpack.c.l.b16 %v3534
    %v3674 = vunpack.c.l.b16 %v3535
    %v3675 = vunpack.c.l.b16 %v3536
    %v3676 = vunpack.c.l.b16 %v3537
    %v3677 = vunpack.c.l.b16 %v3538
    %v3678 = vunpack.c.l.b16 %v3539
    %v3679 = vunpack.c.l.b16 %v3540
    %v3680 = vunpack.c.l.b16 %v3541
    %v3681 = vunpack.c.l.b16 %v3542
    %v3682 = vunpack.c.l.b16 %v3543
    %v3683 = vunpack.c.l.b16 %v3544
    %v3684 = vunpack.c.l.b16 %v3545
    %v3685 = vunpack.c.l.b16 %v3546
    %v3686 = vunpack.c.l.b16 %v3547
    %v3687 = vunpack.c.l.b16 %v3548
    %v3688 = vunpack.c.l.b16 %v3549
    %v3689 = vunpack.c.l.b16 %v3550
    %v3690 = vunpack.c.l.b16 %v3551
    %v3691 = vunpack.c.l.b16 %v3552
    %v3692 = vunpack.c.l.b16 %v3553
    %v3693 = vunpack.c.l.b16 %v3554
    %v3694 = vunpack.c.l.b16 %v3555
    %v3695 = vunpack.c.l.b16 %v3556
    %v3696 = vunpack.c.l.b16 %v3557
    %v3697 = vunpack.c.l.b16 %v3558
    %v3698 = vunpack.c.l.b16 %v3559
    %v3699 = vunpack.c.l.b16 %v3560
    %v3700 = vunpack.c.l.b16 %v3561
    %v3701 = vunpack.c.l.b16 %v3562
    %v3702 = vunpack.c.l.b16 %v3563
    %v3703 = vunpack.c.l.b16 %v3564
    %v3704 = vunpack.c.l.b16 %v3565
    %v3705 = vunpack.c.l.b16 %v3566
    %v3706 = vunpack.c.l.b16 %v3567
    %v3707 = vunpack.c.l.b16 %v3568
    %v3708 = vunpack.c.l.b16 %v3569
    %v3709 = vpack.c.b16 %v3646, %v3645
    %v3710 = vpack.c.b16 %v3648, %v3647
    %v3711 = vpack.c.b16 %v3650, %v3649
    %v3712 = vpack.c.b16 %v3652, %v3651
    %v3713 = vpack.c.b16 %v3654, %v3653
    %v3714 = vpack.c.b16 %v3656, %v3655
    %v3715 = vpack.c.b16 %v3658, %v3657
    %v3716 = vpack.c.b16 %v3660, %v3659
    %v3717 = vpack.c.b16 %v3662, %v3661
    %v3718 = vpack.c.b16 %v3664, %v3663
    %v3719 = vpack.c.b16 %v3666, %v3665
    %v3720 = vpack.c.b16 %v3668, %v3667
    %v3721 = vpack.c.b16 %v3670, %v3669
    %v3722 = vpack.c.b16 %v3672, %v3671
    %v3723 = vpack.c.b16 %v3674, %v3673
    %v3724 = vpack.c.b16 %v3676, %v3675
    %v3725 = vpack.c.b16 %v3678, %v3677
    %v3726 = vpack.c.b16 %v3680, %v3679
    %v3727 = vpack.c.b16 %v3682, %v3681
    %v3728 = vpack.c.b16 %v3684, %v3683
    %v3729 = vpack.c.b16 %v3686, %v3685
    %v3730 = vpack.c.b16 %v3688, %v3687
    %v3731 = vpack.c.b16 %v3690, %v3689
    %v3732 = vpack.c.b16 %v3692, %v3691
    %v3733 = vpack.c.b16 %v3694, %v3693
    %v3734 = vpack.c.b16 %v3696, %v3695
    %v3735 = vpack.c.b16 %v3698, %v3697
    %v3736 = vpack.c.b16 %v3700, %v3699
    %v3737 = vpack.c.b16 %v3702, %v3701
    %v3738 = vpack.c.b16 %v3704, %v3703
    %v3739 = vpack.c.b16 %v3706, %v3705
    %v3740 = vpack.c.b16 %v3708, %v3707
    %3773 = vmatprep.subr.bf16.mxu0 0
    %3774 = vmatpush1.bf16.msra.mxu0 %v3716
    %3775 = vmatprep.subr.bf16.mxu0 0
    %3776 = vmatpush1.bf16.msra.mxu0 %v3715
    %3777 = vmatprep.subr.bf16.mxu0 0
    %3778 = vmatpush1.bf16.msra.mxu0 %v3714
    %3779 = vmatprep.subr.bf16.mxu0 0
    %3780 = vmatpush1.bf16.msra.mxu0 %v3713
    %3781 = vmatprep.subr.bf16.mxu0 0
    %3782 = vmatpush1.bf16.msra.mxu0 %v3712
    %3783 = vmatprep.subr.bf16.mxu0 0
    %3784 = vmatpush1.bf16.msra.mxu0 %v3711
    %3785 = vmatprep.subr.bf16.mxu0 0
    %3786 = vmatpush1.bf16.msra.mxu0 %v3710
    %3787 = vmatprep.subr.bf16.mxu0 0
    %3788 = vmatpush1.bf16.msra.mxu0 %v3709
    %3789 = vmatprep.subr.bf16.mxu0 0
    %3790 = vmatpush2.bf16.msra.mxu0 %v3724
    %3791 = vmatprep.subr.bf16.mxu0 0
    %3792 = vmatpush2.bf16.msra.mxu0 %v3723
    %3793 = vmatprep.subr.bf16.mxu0 0
    %3794 = vmatpush2.bf16.msra.mxu0 %v3722
    %3795 = vmatprep.subr.bf16.mxu0 0
    %3796 = vmatpush2.bf16.msra.mxu0 %v3721
    %3797 = vmatprep.subr.bf16.mxu0 0
    %3798 = vmatpush2.bf16.msra.mxu0 %v3720
    %3799 = vmatprep.subr.bf16.mxu0 0
    %3800 = vmatpush2.bf16.msra.mxu0 %v3719
    %3801 = vmatprep.subr.bf16.mxu0 0
    %3802 = vmatpush2.bf16.msra.mxu0 %v3718
    %3803 = vmatprep.subr.bf16.mxu0 0
    %3804 = vmatpush2.bf16.msra.mxu0 %v3717
    %3805 = vmatprep.mubr.bf16.mxu0 %v3571
    %3806 = vmatmul.mubr.bf16.gmra.mxu0 %v3570
    %v3807 = vpop.f32.mrf.mxu0
    %v3808 = vadd.f32 %v3579, %v3807
    %v3809 = vpop.f32.mrf.mxu0
    %v3810 = vpop.f32.mrf.mxu0
    %v3811 = vadd.f32 %v3579, %v3810
    %v3812 = vpop.f32.mrf.mxu0
    %3813 = vdwg.mxu0
    %3814 = vmatprep.subr.bf16.mxu0 0
    %3815 = vmatpush1.bf16.msra.mxu0 %v3732
    %3816 = vmatprep.subr.bf16.mxu0 0
    %3817 = vmatpush1.bf16.msra.mxu0 %v3731
    %3818 = vmatprep.subr.bf16.mxu0 0
    %3819 = vmatpush1.bf16.msra.mxu0 %v3730
    %3820 = vmatprep.subr.bf16.mxu0 0
    %3821 = vmatpush1.bf16.msra.mxu0 %v3729
    %3822 = vmatprep.subr.bf16.mxu0 0
    %3823 = vmatpush1.bf16.msra.mxu0 %v3728
    %3824 = vmatprep.subr.bf16.mxu0 0
    %3825 = vmatpush1.bf16.msra.mxu0 %v3727
    %3826 = vmatprep.subr.bf16.mxu0 0
    %3827 = vmatpush1.bf16.msra.mxu0 %v3726
    %3828 = vmatprep.subr.bf16.mxu0 0
    %3829 = vmatpush1.bf16.msra.mxu0 %v3725
    %3830 = vmatprep.subr.bf16.mxu0 0
    %3831 = vmatpush2.bf16.msra.mxu0 %v3740
    %3832 = vmatprep.subr.bf16.mxu0 0
    %3833 = vmatpush2.bf16.msra.mxu0 %v3739
    %3834 = vmatprep.subr.bf16.mxu0 0
    %3835 = vmatpush2.bf16.msra.mxu0 %v3738
    %3836 = vmatprep.subr.bf16.mxu0 0
    %3837 = vmatpush2.bf16.msra.mxu0 %v3737
    %3838 = vmatprep.subr.bf16.mxu0 0
    %3839 = vmatpush2.bf16.msra.mxu0 %v3736
    %3840 = vmatprep.subr.bf16.mxu0 0
    %3841 = vmatpush2.bf16.msra.mxu0 %v3735
    %3842 = vmatprep.subr.bf16.mxu0 0
    %3843 = vmatpush2.bf16.msra.mxu0 %v3734
    %3844 = vmatprep.subr.bf16.mxu0 0
    %3845 = vmatpush2.bf16.msra.mxu0 %v3733
    %3846 = vmatprep.mubr.bf16.mxu0 %v3573
    %3847 = vmatmul.mubr.bf16.gmra.mxu0 %v3572
    %v3848 = vpop.f32.mrf.mxu0
    %v3849 = vadd.f32 %v3808, %v3848
    %v3850 = vpop.f32.mrf.mxu0
    %v3851 = vpop.f32.mrf.mxu0
    %v3852 = vadd.f32 %v3811, %v3851
    %v3853 = vpop.f32.mrf.mxu0
    %3854 = vdwg.mxu0
    %v3855 = vadd.f32 %v3188, %v3849
    %v3856 = vadd.f32 %v3189, %v3852
    %v3857 = vld [vmem:[#allocation25] sm:$0x1]
    %v3858 = vld [vmem:[#allocation26] sm:$0x1]
    %3859 = vadd.xlane.f32.xlu0 %v3855
    %v3860 = vpop.xlane.xlu0 %3859
    %3861 = vadd.xlane.f32.xlu0 %v3856
    %v3862 = vpop.xlane.xlu0 %3861
    %v3863 = vmul.f32 %v3860, %v3155
    %v3864 = vmul.f32 %v3862, %v3155
    %v3865 = vsub.f32 %v3855, %v3863
    %v3866 = vsub.f32 %v3856, %v3864
    %v3867 = vmul.f32 %v3865, %v3865
    %v3868 = vmul.f32 %v3866, %v3866
    %3869 = vadd.xlane.f32.xlu0 %v3867
    %v3870 = vpop.xlane.xlu0 %3869
    %3871 = vadd.xlane.f32.xlu0 %v3868
    %v3872 = vpop.xlane.xlu0 %3871
    %v3873 = vmul.f32 %v3870, %v3155
    %v3874 = vmul.f32 %v3872, %v3155
    %v3875 = vadd.f32 %v3873, 1e-05
    %v3876 = vadd.f32 %v3874, 1e-05
    %v3877 = vrsqrt.pop %v3875
    %v3878 = vrsqrt.pop %v3876
    %v3879 = vmul.f32 %v3865, %v3877
    %v3880 = vmul.f32 %v3866, %v3878
    %v3882 = vlaneseq
    %v3883 = vshrl.u32 %v3882, 7
    %v3884 = vsub.s32 0, %v3883
    %v3885 = vrot.slane %v3857, %v3884
    %v3887 = vmul.f32 %v3879, %v3885
    %v3888 = vmul.f32 %v3880, %v3885
    %v3890 = vlaneseq
    %v3891 = vshrl.u32 %v3890, 7
    %v3892 = vsub.s32 0, %v3891
    %v3893 = vrot.slane %v3858, %v3892
    %v3895 = vadd.f32 %v3887, %v3893
    %v3896 = vadd.f32 %v3888, %v3893
    %v3897 = vld [vmem:[#allocation28] sm:$0x1]
    %v3898 = vld [vmem:[#allocation29] sm:$0x1]
    %3899 = vadd.xlane.f32.xlu0 %v3895
    %v3900 = vpop.xlane.xlu0 %3899
    %3901 = vadd.xlane.f32.xlu0 %v3896
    %v3902 = vpop.xlane.xlu0 %3901
    %v3903 = vmul.f32 %v3900, %v3155
    %v3904 = vmul.f32 %v3902, %v3155
    %v3905 = vsub.f32 %v3895, %v3903
    %v3906 = vsub.f32 %v3896, %v3904
    %v3907 = vmul.f32 %v3905, %v3905
    %v3908 = vmul.f32 %v3906, %v3906
    %3909 = vadd.xlane.f32.xlu0 %v3907
    %v3910 = vpop.xlane.xlu0 %3909
    %3911 = vadd.xlane.f32.xlu0 %v3908
    %v3912 = vpop.xlane.xlu0 %3911
    %v3913 = vmul.f32 %v3910, %v3155
    %v3914 = vmul.f32 %v3912, %v3155
    %v3915 = vadd.f32 %v3913, 1e-05
    %v3916 = vadd.f32 %v3914, 1e-05
    %v3917 = vrsqrt.pop %v3915
    %v3918 = vrsqrt.pop %v3916
    %v3919 = vmul.f32 %v3905, %v3917
    %v3920 = vmul.f32 %v3906, %v3918
    %v3922 = vlaneseq
    %v3923 = vshrl.u32 %v3922, 7
    %v3924 = vsub.s32 0, %v3923
    %v3925 = vrot.slane %v3897, %v3924
    %v3927 = vmul.f32 %v3919, %v3925
    %v3928 = vmul.f32 %v3920, %v3925
    %v3930 = vlaneseq
    %v3931 = vshrl.u32 %v3930, 7
    %v3932 = vsub.s32 0, %v3931
    %v3933 = vrot.slane %v3898, %v3932
    %v3935 = vadd.f32 %v3927, %v3933
    %v3936 = vadd.f32 %v3928, %v3933
    %v3937 = vrot.slane %v3935, 4
    %v3938 = vadd.f32 %v3935, %v3937
    %v3939 = vrot.slane %v3938, 2
    %v3940 = vadd.f32 %v3938, %v3939
    %v3941 = vrot.slane %v3940, 1
    %v3942 = vadd.f32 %v3940, %v3941
    %v3943 = vrcp.pop 8.0
    %v3944 = vmul.f32 %v3942, %v3943
    %v3945 = vrot.slane %v3936, 4
    %v3946 = vadd.f32 %v3936, %v3945
    %v3947 = vrot.slane %v3946, 2
    %v3948 = vadd.f32 %v3946, %v3947
    %v3949 = vrot.slane %v3948, 1
    %v3950 = vadd.f32 %v3948, %v3949
    %v3951 = vmul.f32 %v3950, %v3943
    %vm3952 = vcmask 1040384
    %v3953 = vsel %vm3952, %v3944, %v3951
    %s3954 = smul.u32 %s842, 2
    %s3955 = sshll.u32 %s3954, 4
    %3956 = dma.done %s346, %s3955
    %v3957 = vld [vmem:[#allocation6] sm:$0xff]
    %v3958 = vld [vmem:[#allocation6 + $0x8] sm:$0xff]
    %v3959 = vld [vmem:[#allocation6 + $0x10] sm:$0xff]
    %v3960 = vld [vmem:[#allocation6 + $0x18] sm:$0xff]
    %v3961 = vld [vmem:[#allocation6 + $0x20] sm:$0xff]
    %v3962 = vld [vmem:[#allocation6 + $0x28] sm:$0xff]
    %v3963 = vld [vmem:[#allocation6 + $0x30] sm:$0xff]
    %v3964 = vld [vmem:[#allocation6 + $0x38] sm:$0xff]
    %v3965 = vld [vmem:[#allocation6 + $0x40] sm:$0xff]
    %v3966 = vld [vmem:[#allocation6 + $0x48] sm:$0xff]
    %v3967 = vld [vmem:[#allocation6 + $0x50] sm:$0xff]
    %v3968 = vld [vmem:[#allocation6 + $0x58] sm:$0xff]
    %v3969 = vld [vmem:[#allocation6 + $0x60] sm:$0xff]
    %v3970 = vld [vmem:[#allocation6 + $0x68] sm:$0xff]
    %v3971 = vld [vmem:[#allocation6 + $0x70] sm:$0xff]
    %v3972 = vld [vmem:[#allocation6 + $0x78] sm:$0xff]
    %v3973 = vpack.c.bf16 %v3953, %v3953
    %v3974 = vld [vmem:[#allocation31] sm:$0x3]
    %v3976 = vlaneseq
    %v3977 = vshrl.u32 %v3976, 7
    %v3978 = vsub.s32 0, %v3977
    %v3979 = vrot.slane %v3974, %v3978
    %v3980 = vlaneseq
    %v3981 = vshrl.u32 %v3980, 7
    %v3982 = vsub.s32 1, %v3981
    %v3983 = vrot.slane %v3974, %v3982
    %v4002 = vunpack.c.l.b16 %v3957
    %v4003 = vunpack.c.h.b16 %v3957
    %v4004 = vunpack.c.l.b16 %v3958
    %v4005 = vunpack.c.h.b16 %v3958
    %v4006 = vunpack.c.l.b16 %v3959
    %v4007 = vunpack.c.h.b16 %v3959
    %v4008 = vunpack.c.l.b16 %v3960
    %v4009 = vunpack.c.h.b16 %v3960
    %v4010 = vunpack.c.l.b16 %v3961
    %v4011 = vunpack.c.h.b16 %v3961
    %v4012 = vunpack.c.l.b16 %v3962
    %v4013 = vunpack.c.h.b16 %v3962
    %v4014 = vunpack.c.l.b16 %v3963
    %v4015 = vunpack.c.h.b16 %v3963
    %v4016 = vunpack.c.l.b16 %v3964
    %v4017 = vunpack.c.h.b16 %v3964
    %v4018 = vunpack.c.l.b16 %v3965
    %v4019 = vunpack.c.h.b16 %v3965
    %v4020 = vunpack.c.l.b16 %v3966
    %v4021 = vunpack.c.h.b16 %v3966
    %v4022 = vunpack.c.l.b16 %v3967
    %v4023 = vunpack.c.h.b16 %v3967
    %v4024 = vunpack.c.l.b16 %v3968
    %v4025 = vunpack.c.h.b16 %v3968
    %v4026 = vunpack.c.l.b16 %v3969
    %v4027 = vunpack.c.h.b16 %v3969
    %v4028 = vunpack.c.l.b16 %v3970
    %v4029 = vunpack.c.h.b16 %v3970
    %v4030 = vunpack.c.l.b16 %v3971
    %v4031 = vunpack.c.h.b16 %v3971
    %v4032 = vunpack.c.l.b16 %v3972
    %v4033 = vunpack.c.h.b16 %v3972
    %v4034 = vpack.c.b16 %v4004, %v4002
    %v4035 = vpack.c.b16 %v4005, %v4003
    %v4036 = vpack.c.b16 %v4008, %v4006
    %v4037 = vpack.c.b16 %v4009, %v4007
    %v4038 = vpack.c.b16 %v4012, %v4010
    %v4039 = vpack.c.b16 %v4013, %v4011
    %v4040 = vpack.c.b16 %v4016, %v4014
    %v4041 = vpack.c.b16 %v4017, %v4015
    %v4042 = vpack.c.b16 %v4020, %v4018
    %v4043 = vpack.c.b16 %v4021, %v4019
    %v4044 = vpack.c.b16 %v4024, %v4022
    %v4045 = vpack.c.b16 %v4025, %v4023
    %v4046 = vpack.c.b16 %v4028, %v4026
    %v4047 = vpack.c.b16 %v4029, %v4027
    %v4048 = vpack.c.b16 %v4032, %v4030
    %v4049 = vpack.c.b16 %v4033, %v4031
    %4066 = vmatprep.subr.bf16.mxu0 %v4049
    %4067 = vmatpush1.bf16.msra.mxu0 %v4048
    %4068 = vmatprep.subr.bf16.mxu0 %v4047
    %4069 = vmatpush1.bf16.msra.mxu0 %v4046
    %4070 = vmatprep.subr.bf16.mxu0 %v4045
    %4071 = vmatpush1.bf16.msra.mxu0 %v4044
    %4072 = vmatprep.subr.bf16.mxu0 %v4043
    %4073 = vmatpush1.bf16.msra.mxu0 %v4042
    %4074 = vmatprep.subr.bf16.mxu0 %v4041
    %4075 = vmatpush1.bf16.msra.mxu0 %v4040
    %4076 = vmatprep.subr.bf16.mxu0 %v4039
    %4077 = vmatpush1.bf16.msra.mxu0 %v4038
    %4078 = vmatprep.subr.bf16.mxu0 %v4037
    %4079 = vmatpush1.bf16.msra.mxu0 %v4036
    %4080 = vmatprep.subr.bf16.mxu0 %v4035
    %4081 = vmatpush1.bf16.msra.mxu0 %v4034
    %4082 = vmatprep.subr.bf16.mxu0 0
    %4083 = vmatpush2.bf16.msra.mxu0 0
    %4084 = vmatprep.subr.bf16.mxu0 0
    %4085 = vmatpush2.bf16.msra.mxu0 0
    %4086 = vmatprep.subr.bf16.mxu0 0
    %4087 = vmatpush2.bf16.msra.mxu0 0
    %4088 = vmatprep.subr.bf16.mxu0 0
    %4089 = vmatpush2.bf16.msra.mxu0 0
    %4090 = vmatprep.subr.bf16.mxu0 0
    %4091 = vmatpush2.bf16.msra.mxu0 0
    %4092 = vmatprep.subr.bf16.mxu0 0
    %4093 = vmatpush2.bf16.msra.mxu0 0
    %4094 = vmatprep.subr.bf16.mxu0 0
    %4095 = vmatpush2.bf16.msra.mxu0 0
    %4096 = vmatprep.subr.bf16.mxu0 0
    %4097 = vmatpush2.bf16.msra.mxu0 0
    %4098 = vmatprep.mubr.bf16.mxu0 0
    %4099 = vmatmul.mubr.bf16.gmra.mxu0 %v3973
    %v4100 = vpop.f32.mrf.mxu0
    %v4101 = vadd.f32 %v3979, %v4100
    %v4102 = vpop.f32.mrf.mxu0
    %v4103 = vadd.f32 %v3983, %v4102
    %v4104 = vpop.f32.mrf.mxu0
    %v4105 = vpop.f32.mrf.mxu0
    %4106 = vdwg.mxu0
    %v4107 = vmax.f32 %v4101, 0.0
    %v4108 = vmax.f32 %v4103, 0.0
    %s4109 = smul.u32 4, 1
    %s4110 = smul.u32 %s4109, 2
    %s4111 = sshll.u32 %s4110, 4
    %4112 = dma.done %s358, %s4111
    %v4113 = vpack.c.bf16 %v4107, %v4107
    %v4114 = vpack.c.bf16 %v4108, %v4108
    %v4115 = vld [vmem:[#allocation7] sm:$0xff]
    %v4116 = vld [vmem:[#allocation32] sm:$0x1]
    %v4118 = vlaneseq
    %v4119 = vshrl.u32 %v4118, 7
    %v4120 = vsub.s32 0, %v4119
    %v4121 = vrot.slane %v4116, %v4120
    %v4124 = vunpack.c.l.b16 %v4115
    %v4125 = vunpack.c.h.b16 %v4115
    %v4126 = vpack.c.b16 %v4124, %v4124
    %v4127 = vpack.c.b16 %v4125, %v4125
    %4130 = vmatprep.subr.bf16.mxu0 0
    %4131 = vmatpush1.bf16.xpose.msra.mxu0 0
    %4132 = vmatprep.subr.bf16.mxu0 0
    %4133 = vmatpush1.bf16.xpose.msra.mxu0 0
    %4134 = vmatprep.subr.bf16.mxu0 0
    %4135 = vmatpush1.bf16.xpose.msra.mxu0 0
    %4136 = vmatprep.subr.bf16.mxu0 0
    %4137 = vmatpush1.bf16.xpose.msra.mxu0 0
    %4138 = vmatprep.subr.bf16.mxu0 0
    %4139 = vmatpush1.bf16.xpose.msra.mxu0 0
    %4140 = vmatprep.subr.bf16.mxu0 0
    %4141 = vmatpush1.bf16.xpose.msra.mxu0 0
    %4142 = vmatprep.subr.bf16.mxu0 0
    %4143 = vmatpush1.bf16.xpose.msra.mxu0 0
    %4144 = vmatprep.subr.bf16.mxu0 %v4127
    %4145 = vmatpush1.bf16.xpose.msra.mxu0 %v4126
    %4146 = vmatprep.subr.bf16.mxu0 0
    %4147 = vmatpush2.bf16.xpose.msra.mxu0 0
    %4148 = vmatprep.subr.bf16.mxu0 0
    %4149 = vmatpush2.bf16.xpose.msra.mxu0 0
    %4150 = vmatprep.subr.bf16.mxu0 0
    %4151 = vmatpush2.bf16.xpose.msra.mxu0 0
    %4152 = vmatprep.subr.bf16.mxu0 0
    %4153 = vmatpush2.bf16.xpose.msra.mxu0 0
    %4154 = vmatprep.subr.bf16.mxu0 0
    %4155 = vmatpush2.bf16.xpose.msra.mxu0 0
    %4156 = vmatprep.subr.bf16.mxu0 0
    %4157 = vmatpush2.bf16.xpose.msra.mxu0 0
    %4158 = vmatprep.subr.bf16.mxu0 0
    %4159 = vmatpush2.bf16.xpose.msra.mxu0 0
    %4160 = vmatprep.subr.bf16.mxu0 0
    %4161 = vmatpush2.bf16.xpose.msra.mxu0 0
    %4162 = vmatprep.mubr.bf16.mxu0 %v4114
    %4163 = vmatmul.mubr.bf16.gmra.mxu0 %v4113
    %v4164 = vpop.f32.mrf.mxu0
    %v4165 = vadd.f32 %v4121, %v4164
    %v4166 = vpop.f32.mrf.mxu0
    %v4167 = vpop.f32.mrf.mxu0
    %v4168 = vpop.f32.mrf.mxu0
    %4169 = vdwg.mxu0
    %vm4170 = vcmask 58368
    %4171 = vst.msk [vmem:[%s24] sm:$0x3] %vm4170, %v4165
    // Predicated region
    $region222: #{model_forward.1} parent=1 // pred_check
      _
    $region223: #{model_forward.1} parent=1 // pred_check_branch
      %4173 = sbr.rel (0) target = $region225
    $region224: #{model_forward.1} parent=1 // pred_region
      _
    $region225: #{model_forward.1} parent=1 // pred_fallthru
      _
    // Predicated region
    $region226: #{model_forward.1} parent=1 // pred_check
      _
    $region227: #{model_forward.1} parent=1 // pred_check_branch
      %4175 = sbr.rel (0) target = $region229
    $region228: #{model_forward.1} parent=1 // pred_region
      _
    $region229: #{model_forward.1} parent=1 // pred_fallthru
      _
    %4176 = vsyncpa [#allocation10], 1
    %4177 = vsyncpa [#allocation12], 1
    %4178 = vsyncpa [#allocation15], 1
    %4179 = vsyncpa [#allocation18], 1
    %4180 = vsyncpa [#allocation21], 1
    %4181 = vsyncpa [#allocation24], 1
    %4182 = vsyncpa [#allocation27], 1
    %4183 = vsyncpa [#allocation30], 1
    %4184 = vsyncpa [#allocation33], 1
  %4185 = vsyncmov [#allocation8]
  %s4186 = vpop.sfrf %4185
  %p4187 = scmp.eq.s32.totalorder %s4186, 0
  %p4188 = pneg %p4187
  %4190 = shalt.err (%p4188)
  %s4191 = scalar_lea.sflag [#allocation8], 1
  %4192 = vsyncmov %s4191
  %s4193 = vpop.sfrf %4192
  %p4194 = scmp.eq.s32.totalorder %s4193, 0
  %p4195 = pneg %p4194
  %4197 = shalt.err (%p4195)
  %s4198 = scalar_lea.sflag [#allocation8], 2
  %4199 = vsyncmov %s4198
  %s4200 = vpop.sfrf %4199
  %p4201 = scmp.eq.s32.totalorder %s4200, 0
  %p4202 = pneg %p4201
  %4204 = shalt.err (%p4202)
  %s4205 = scalar_lea.sflag [#allocation8], 3
  %4206 = vsyncmov %s4205
  %s4207 = vpop.sfrf %4206
  %p4208 = scmp.eq.s32.totalorder %s4207, 0
  %p4209 = pneg %p4208
  %4211 = shalt.err (%p4209)
  %s4212 = scalar_lea.sflag [#allocation8], 4
  %4213 = vsyncmov %s4212
  %s4214 = vpop.sfrf %4213
  %p4215 = scmp.eq.s32.totalorder %s4214, 0
  %p4216 = pneg %p4215
  %4218 = shalt.err (%p4216)
  %s4219 = scalar_lea.sflag [#allocation8], 5
  %4220 = vsyncmov %s4219
  %s4221 = vpop.sfrf %4220
  %p4222 = scmp.eq.s32.totalorder %s4221, 0
  %p4223 = pneg %p4222
  %4225 = shalt.err (%p4223)

</llo_original>
